<compile_context>
chip_gen: v5e
topology: v5e:2x2
jax: 0.10.0
libtpu: 0.0.40
codegen_flags: <defaults>
</compile_context>

<pallas_src>
import functools

import jax
import jax.numpy as jnp
import numpy as np
from jax.experimental import pallas as pl
from jax.experimental.pallas import tpu as pltpu

_EPS = 1e-5
_LANE = 128
_ACC_ROW_BUDGET = 256          # keep h_t * w_out below this (f32 acc <= 128 KB)


def _round_up(x, m):
    return (x + m - 1) // m * m


def _pick_row_tile(h_out, w_out, cap=8):
    """Largest even divisor of h_out that keeps h_t*w_out within the row budget."""
    budget = max(1, _ACC_ROW_BUDGET // max(w_out, 1))
    cap = max(1, min(cap, budget))
    if h_out <= cap:
        return h_out
    for t in range(cap, 1, -1):
        if t % 2 == 0 and h_out % t == 0:
            return t
    # TODO(synk): cdiv-based tiling + masked last tile for awkward H.
    return h_out


# ----------------------------------------------------------------------------
# Pallas kernel: 3x3 conv (+ folded-BN bias) [+ fused 1x1 downsample output]
#                [+ residual add] [+ ReLU], stride via phase-split planes.
# ----------------------------------------------------------------------------
def _make_conv3x3_kernel(stride, h_t, w_out, *, relu, has_halo, has_residual,
                         has_downsample):
    s = stride

    def kernel(*refs):
        it = iter(refs)
        x_ref = next(it)                                  # (1,s,s,rows,Wq,Cin)
        halo_ref = next(it) if has_halo else None         # (1,s,s,halo,Wq,Cin)
        w_ref = next(it)                                  # (3|2, 3*Cin, Cout)
        w1e_ref = next(it) if has_downsample else None    # (3*Cin, 2*Cout)
        b_ref = next(it)                                  # (1, Cout) f32
        bd_ref = next(it) if has_downsample else None     # (1, Cout) f32
        r_ref = next(it) if has_residual else None        # (1, h_t, w_out, Cout)
        y_ref = next(it)
        id_ref = next(it) if has_downsample else None

        cin = x_ref.shape[-1]
        cout = b_ref.shape[-1]
        rows_main = x_ref.shape[3]
        rows = h_t * w_out

        def tap(ki, kj):
            # phase / offset decomposition of the (ki,kj) tap under stride s.
            pr, ri = ki % s, ki // s
            pc, ci = kj % s, kj // s
            n_halo = max(0, ri + h_t - rows_main)         # static Python int
            n_main = h_t - n_halo
            t = x_ref[0, pr, pc, ri:ri + n_main, ci:ci + w_out, :]
            if n_halo:
                th = halo_ref[0, pr, pc, 0:n_halo, ci:ci + w_out, :]
                t = jnp.concatenate([t, th], axis=0)
            return t.reshape(rows, cin)

        acc = jnp.zeros((rows, cout), jnp.float32)
        idv = None
        for ki in range(3):
            # K = 3*Cin contraction: the three kj taps concatenated on lanes.
            patch = jnp.concatenate([tap(ki, kj) for kj in range(3)], axis=-1)
            if has_downsample and ki == 1:
                # ki=1 matmul carries the 1x1 downsample as extra N columns.
                ext = jnp.dot(patch, w1e_ref[...],
                              preferred_element_type=jnp.float32)
                acc = acc + ext[:, :cout]
                idv = ext[:, cout:] + bd_ref[...]
            else:
                widx = ki if not has_downsample else (0 if ki == 0 else 1)
                acc = acc + jnp.dot(patch, w_ref[widx],
                                    preferred_element_type=jnp.float32)

        out = acc + b_ref[...]                            # folded-BN bias (f32)
        if has_residual:
            out = out + r_ref[0].reshape(rows, cout).astype(jnp.float32)
        if relu:
            out = jnp.maximum(out, 0.0)
        y_ref[0] = out.reshape(h_t, w_out, cout).astype(y_ref.dtype)

        if has_downsample:
            id_ref[0] = idv.reshape(h_t, w_out, cout).astype(id_ref.dtype)

    return kernel


# ----------------------------------------------------------------------------
# pallas_call wrapper
# ----------------------------------------------------------------------------
def conv3x3_block(x_pp, w_main, bias, *, stride, h_out, w_out, w1ext=None,
                  bias_d=None, residual=None, relu=True,
                  out_dtype=jnp.bfloat16, row_cap=8):
    """x_pp:   (N, s, s, Hq, Wq, Cin_p) bf16 (padded, row/col phase split).
       w_main: (3, 3*Cin_p, Cout_p) bf16, or (2, 3*Cin_p, Cout_p) when the
               downsample is fused (ki=0,2 blocks only; BN scale folded in).
       w1ext:  (3*Cin_p, 2*Cout_p) bf16 ki=1 weights + 1x1-downsample columns.
       bias:   (1, Cout_p) f32."""
    n, s, s2, hq, wq, cin = x_pp.shape
    assert s == stride and s2 == stride
    cout = bias.shape[-1]
    has_ds = w1ext is not None
    has_res = residual is not None

    h_t = _pick_row_tile(h_out, w_out, row_cap)
    h_tiles = h_out // h_t
    has_halo = h_tiles > 1
    halo = 2 if stride == 1 else 1
    if has_halo:
        assert h_t % halo == 0, "row tile must be a multiple of the halo rows"
    halo_step = (h_t // halo) if has_halo else 0
    rows_main = h_t if has_halo else hq

    in_specs, args = [], []
    if has_halo:
        in_specs.append(pl.BlockSpec((1, s, s, rows_main, wq, cin),
                                     lambda nn, ii: (nn, 0, 0, ii, 0, 0)))
        in_specs.append(pl.BlockSpec((1, s, s, halo, wq, cin),
                                     lambda nn, ii: (nn, 0, 0,
                                                     (ii + 1) * halo_step, 0, 0)))
        args += [x_pp, x_pp]
    else:
        in_specs.append(pl.BlockSpec((1, s, s, rows_main, wq, cin),
                                     lambda nn, ii: (nn, 0, 0, 0, 0, 0)))
        args.append(x_pp)

    in_specs.append(pl.BlockSpec(w_main.shape, lambda nn, ii: (0, 0, 0)))
    args.append(w_main)
    if has_ds:
        in_specs.append(pl.BlockSpec(w1ext.shape, lambda nn, ii: (0, 0)))
        args.append(w1ext)
    in_specs.append(pl.BlockSpec((1, cout), lambda nn, ii: (0, 0)))
    args.append(bias)
    if has_ds:
        in_specs.append(pl.BlockSpec((1, cout), lambda nn, ii: (0, 0)))
        args.append(bias_d)
    if has_res:
        in_specs.append(pl.BlockSpec((1, h_t, w_out, cout),
                                     lambda nn, ii: (nn, ii, 0, 0)))
        args.append(residual)

    out_spec = pl.BlockSpec((1, h_t, w_out, cout), lambda nn, ii: (nn, ii, 0, 0))
    if has_ds:
        out_shape = (jax.ShapeDtypeStruct((n, h_out, w_out, cout), out_dtype),
                     jax.ShapeDtypeStruct((n, h_out, w_out, cout), jnp.bfloat16))
        out_specs = (out_spec, out_spec)
    else:
        out_shape = jax.ShapeDtypeStruct((n, h_out, w_out, cout), out_dtype)
        out_specs = out_spec

    # Advisory cost estimate so XLA schedules surrounding ops sensibly.
    out_bytes_px = jnp.dtype(out_dtype).itemsize + (2 if has_ds else 0)
    flops = 2 * n * h_out * w_out * 3 * cin * cout * (4 if has_ds else 3)
    bytes_accessed = (x_pp.size * 2 + w_main.size * 2 + bias.size * 4
                      + ((w1ext.size * 2 + bias_d.size * 4) if has_ds else 0)
                      + (residual.size * 2 if has_res else 0)
                      + n * h_out * w_out * cout * out_bytes_px)
    cost = pl.CostEstimate(flops=int(flops), transcendentals=0,
                           bytes_accessed=int(bytes_accessed))

    # Raise scoped VMEM only when the (double-buffered) working set needs it.
    blk = (s * s * rows_main * wq * cin * 2
           + (s * s * halo * wq * cin * 2 if has_halo else 0)
           + (h_t * w_out * cout * 2 if has_res else 0)
           + h_t * w_out * cout * out_bytes_px)
    w_bytes = (w_main.size * 2 + (w1ext.size * 2 if has_ds else 0)
               + (bias.size + (bias_d.size if has_ds else 0)) * 4)
    need = 2 * blk + 2 * w_bytes + (4 << 20)
    vmem_limit = None if need <= (24 << 20) else min(int(need), 64 << 20)

    kernel = _make_conv3x3_kernel(stride, h_t, w_out, relu=relu,
                                  has_halo=has_halo, has_residual=has_res,
                                  has_downsample=has_ds)
    return pl.pallas_call(
        kernel,
        out_shape=out_shape,
        grid=(n, h_tiles),
        in_specs=in_specs,
        out_specs=out_specs,
        compiler_params=pltpu.CompilerParams(
            dimension_semantics=("parallel", "parallel"),
            vmem_limit_bytes=vmem_limit),
        cost_estimate=cost,
    )(*args)


# ----------------------------------------------------------------------------
# Host-side parameter prep + BasicBlock forward
# ----------------------------------------------------------------------------
def _bn_fold(gamma, beta, mean, var):
    scale = gamma / jnp.sqrt(var + _EPS)
    return scale, beta - mean * scale


def _pad_axis(a, axis, target):
    pad = [(0, 0)] * a.ndim
    pad[axis] = (0, target - a.shape[axis])
    return jnp.pad(a, pad)


def _fold_pad_w3x3(w, scale, cin_p, cout_p):
    w = w * scale                                        # fold BN scale (f32)
    w = _pad_axis(_pad_axis(w, 2, cin_p), 3, cout_p)     # (3,3,cin_p,cout_p)
    return w.reshape(3, 3 * cin_p, cout_p)               # f32; cast later


def _fold_pad_w1x1(w, scale, cin_p, cout_p):
    w = w * scale
    return _pad_axis(_pad_axis(w, 0, cin_p), 1, cout_p)  # f32 (cin_p, cout_p)


def _prep_bias(b, cout_p):
    return _pad_axis(b, 0, cout_p).reshape(1, cout_p).astype(jnp.float32)


def _phase_split(xp, s):
    """(N,Hp,Wp,C) -> (N,s,s,ceil(Hp/s),ceil(Wp/s),C) row/col phase planes."""
    if s == 1:
        return xp[:, None, None]
    n, hp, wp, c = xp.shape
    ph, pw = (-hp) % s, (-wp) % s
    if ph or pw:
        xp = jnp.pad(xp, ((0, 0), (0, ph), (0, pw), (0, 0)))
    hq, wq = (hp + ph) // s, (wp + pw) // s
    x6 = xp.reshape(n, hq, s, wq, s, c)
    return jnp.transpose(x6, (0, 2, 4, 1, 3, 5))


@functools.partial(jax.jit, static_argnames=("stride",))
def basic_block_forward(x_nchw, params, stride):
    x = jnp.transpose(x_nchw, (0, 2, 3, 1))              # NCHW -> NHWC
    n, h, w, cin = x.shape
    cout = params["w1"].shape[-1]
    assert h % stride == 0 and w % stride == 0
    cin_p, cout_p = _round_up(cin, _LANE), _round_up(cout, _LANE)
    h_out, w_out = h // stride, w // stride

    s1, b1 = _bn_fold(*params["bn1"])
    s2, b2 = _bn_fold(*params["bn2"])
    w1 = _fold_pad_w3x3(params["w1"], s1, cin_p, cout_p)
    w2 = _fold_pad_w3x3(params["w2"], s2, cout_p, cout_p)
    b1p, b2p = _prep_bias(b1, cout_p), _prep_bias(b2, cout_p)

    # bf16, channel-padded (lane-dense) activations; pad + phase split.
    # TODO(synk): fold these host-side passes into the kernel (edge masking).
    x_cp = _pad_axis(x.astype(jnp.bfloat16), 3, cin_p)
    xp = jnp.pad(x_cp, ((0, 0), (1, 1), (1, 1), (0, 0)))
    x_pp = _phase_split(xp, stride)

    if "wd" in params:
        # conv1 with the 1x1 downsample fused into the ki=1 matmul columns.
        sd, bd = _bn_fold(*params["bnd"])
        wd = _fold_pad_w1x1(params["wd"], sd, cin_p, cout_p)
        wd_block = jnp.zeros((3 * cin_p, cout_p), jnp.float32)
        wd_block = wd_block.at[cin_p:2 * cin_p].set(wd)   # center-tap rows only
        w1ext = jnp.concatenate([w1[1], wd_block], axis=-1).astype(jnp.bfloat16)
        w1_02 = jnp.stack([w1[0], w1[2]]).astype(jnp.bfloat16)
        bdp = _prep_bias(bd, cout_p)
        y1, identity = conv3x3_block(x_pp, w1_02, b1p, stride=stride,
                                     h_out=h_out, w_out=w_out, w1ext=w1ext,
                                     bias_d=bdp, relu=True)
    else:
        assert stride == 1 and cin_p == cout_p, \
            "identity shortcut requires stride==1 and matching channels"
        y1 = conv3x3_block(x_pp, w1.astype(jnp.bfloat16), b1p, stride=stride,
                           h_out=h_out, w_out=w_out, relu=True)
        identity = x_cp                                   # bf16, cin_p==cout_p

    # conv2 + bn2 + residual add + relu, fused; bf16 output (halved writeback).
    y1p = jnp.pad(y1, ((0, 0), (1, 1), (1, 1), (0, 0)))
    out = conv3x3_block(y1p[:, None, None], w2.astype(jnp.bfloat16), b2p,
                        stride=1, h_out=h_out, w_out=w_out, residual=identity,
                        relu=True, out_dtype=jnp.bfloat16)

    # Boundary ops (in a full network these happen once, not per block).
    out = out[..., :cout].astype(jnp.float32)
    return jnp.transpose(out, (0, 3, 1, 2))               # NHWC -> NCHW


# ----------------------------------------------------------------------------
# Pure-JAX reference (lax.conv) mirroring the kernel's bf16/f32 precision
# ----------------------------------------------------------------------------
def _conv_ref(x, w, stride, pad):
    return jax.lax.conv_general_dilated(
        x, w, (stride, stride), ((pad, pad), (pad, pad)),
        dimension_numbers=("NHWC", "HWIO", "NHWC"),
        preferred_element_type=jnp.float32)


def basic_block_ref(x_nchw, params, stride):
    x = jnp.transpose(x_nchw, (0, 2, 3, 1)).astype(jnp.bfloat16)
    s1, b1 = _bn_fold(*params["bn1"])
    s2, b2 = _bn_fold(*params["bn2"])
    w1 = (params["w1"] * s1).astype(jnp.bfloat16)
    w2 = (params["w2"] * s2).astype(jnp.bfloat16)
    y = jnp.maximum(_conv_ref(x, w1, stride, 1) + b1, 0.0).astype(jnp.bfloat16)
    if "wd" in params:
        sd, bd = _bn_fold(*params["bnd"])
        ci, co = params["wd"].shape
        wd = (params["wd"] * sd).astype(jnp.bfloat16).reshape(1, 1, ci, co)
        identity = (_conv_ref(x, wd, stride, 0) + bd).astype(jnp.bfloat16)
    else:
        identity = x
    out = jnp.maximum(_conv_ref(y, w2, 1, 1) + b2 + identity.astype(jnp.float32),
                      0.0)
    return jnp.transpose(out, (0, 3, 1, 2))


# ----------------------------------------------------------------------------
# Deterministic parameter construction + test
# ----------------------------------------------------------------------------
def make_params(key, cin, cout, stride):
    ks = jax.random.split(key, 16)

    def bn(k0, k1, k2, k3):
        return (1.0 + 0.1 * jax.random.normal(k0, (cout,), jnp.float32),
                0.05 * jax.random.normal(k1, (cout,), jnp.float32),
                0.1 * jax.random.normal(k2, (cout,), jnp.float32),
                0.9 + 0.2 * jax.random.uniform(k3, (cout,), jnp.float32))

    p = {
        "w1": 0.1 * jax.random.normal(ks[0], (3, 3, cin, cout), jnp.float32),
        "w2": 0.1 * jax.random.normal(ks[1], (3, 3, cout, cout), jnp.float32),
        "bn1": bn(ks[2], ks[3], ks[4], ks[5]),
        "bn2": bn(ks[6], ks[7], ks[8], ks[9]),
    }
    if stride != 1 or cin != cout:
        p["wd"] = 0.1 * jax.random.normal(ks[10], (cin, cout), jnp.float32)
        p["bnd"] = bn(ks[11], ks[12], ks[13], ks[14])
    return p


if __name__ == "__main__":
    key = jax.random.PRNGKey(0)
    kx, kp1, kp2 = jax.random.split(key, 3)

    # case 1: in=4 -> out=8, stride=2 (fused downsample, phase-split stride)
    x1 = jax.random.normal(kx, (2, 4, 16, 16), jnp.float32)
    params1 = make_params(kp1, cin=4, cout=8, stride=2)
    out1 = jax.block_until_ready(basic_block_forward(x1, params1, 2))
    ref1 = basic_block_ref(x1, params1, 2)
    assert out1.shape == (2, 8, 8, 8), out1.shape
    np.testing.assert_allclose(np.asarray(out1), np.asarray(ref1),
                               atol=2e-2, rtol=2e-2)

    # case 2: in=out=8, stride=1 (identity shortcut, multi-row-tile + halo)
    x2 = jax.random.normal(kx, (2, 8, 16, 16), jnp.float32)
    params2 = make_params(kp2, cin=8, cout=8, stride=1)
    out2 = jax.block_until_ready(basic_block_forward(x2, params2, 1))
    ref2 = basic_block_ref(x2, params2, 1)
    assert out2.shape == (2, 8, 16, 16), out2.shape
    np.testing.assert_allclose(np.asarray(out2), np.asarray(ref2),
                               atol=2e-2, rtol=2e-2)

    print("KERNEL_OK")
</pallas_src>

<mosaic_0001>
module attributes {stable_mosaic.version = 11 : i64} {
  func.func @kernel(%arg0: i32, %arg1: i32, %arg2: memref<1x2x2x9x9x128xbf16, #tpu.memory_space<vmem>>, %arg3: memref<2x384x128xbf16, #tpu.memory_space<vmem>>, %arg4: memref<384x256xbf16, #tpu.memory_space<vmem>>, %arg5: memref<1x128xf32, #tpu.memory_space<vmem>>, %arg6: memref<1x128xf32, #tpu.memory_space<vmem>>, %arg7: memref<1x8x8x128xbf16, #tpu.memory_space<vmem>>, %arg8: memref<1x8x8x128xbf16, #tpu.memory_space<vmem>>) attributes {dimension_semantics = [#tpu.dimension_semantics<parallel>, #tpu.dimension_semantics<parallel>], iteration_bounds = array<i64: 2, 1>, scalar_prefetch = 0 : i64, scratch_operands = 0 : i64, tpu.core_type = #tpu.core_type<tc>, window_params = [{transform_indices = @transform_0, window_bounds = array<i64: 1, 2, 2, 9, 9, 128>}, {pipeline_mode = #tpu.pipeline_mode<synchronous>, transform_indices = @transform_1, window_bounds = array<i64: 2, 384, 128>}, {pipeline_mode = #tpu.pipeline_mode<synchronous>, transform_indices = @transform_2, window_bounds = array<i64: 384, 256>}, {pipeline_mode = #tpu.pipeline_mode<synchronous>, transform_indices = @transform_3, window_bounds = array<i64: 1, 128>}, {pipeline_mode = #tpu.pipeline_mode<synchronous>, transform_indices = @transform_4, window_bounds = array<i64: 1, 128>}, {transform_indices = @transform_5, window_bounds = array<i64: 1, 8, 8, 128>}, {transform_indices = @transform_6, window_bounds = array<i64: 1, 8, 8, 128>}]} {
    %cst = arith.constant 0.000000e+00 : f32
    %0 = vector.broadcast %cst : f32 to vector<64x128xf32>
    %c0 = arith.constant 0 : index
    %c0_0 = arith.constant 0 : index
    %c0_1 = arith.constant 0 : index
    %c0_2 = arith.constant 0 : index
    %c0_3 = arith.constant 0 : index
    %c0_4 = arith.constant 0 : index
    %1 = vector.load %arg2[%c0, %c0_0, %c0_1, %c0_2, %c0_3, %c0_4] : memref<1x2x2x9x9x128xbf16, #tpu.memory_space<vmem>>, vector<1x1x1x8x8x128xbf16>
    %2 = vector.shape_cast %1 : vector<1x1x1x8x8x128xbf16> to vector<8x8x128xbf16>
    %3 = vector.shape_cast %2 : vector<8x8x128xbf16> to vector<64x128xbf16>
    %c0_5 = arith.constant 0 : index
    %c0_6 = arith.constant 0 : index
    %c1 = arith.constant 1 : index
    %c0_7 = arith.constant 0 : index
    %c0_8 = arith.constant 0 : index
    %c0_9 = arith.constant 0 : index
    %4 = vector.load %arg2[%c0_5, %c0_6, %c1, %c0_7, %c0_8, %c0_9] : memref<1x2x2x9x9x128xbf16, #tpu.memory_space<vmem>>, vector<1x1x1x8x8x128xbf16>
    %5 = vector.shape_cast %4 : vector<1x1x1x8x8x128xbf16> to vector<8x8x128xbf16>
    %6 = vector.shape_cast %5 : vector<8x8x128xbf16> to vector<64x128xbf16>
    %c0_10 = arith.constant 0 : index
    %c0_11 = arith.constant 0 : index
    %c0_12 = arith.constant 0 : index
    %c0_13 = arith.constant 0 : index
    %c1_14 = arith.constant 1 : index
    %c0_15 = arith.constant 0 : index
    %7 = vector.load %arg2[%c0_10, %c0_11, %c0_12, %c0_13, %c1_14, %c0_15] : memref<1x2x2x9x9x128xbf16, #tpu.memory_space<vmem>>, vector<1x1x1x8x8x128xbf16>
    %8 = vector.shape_cast %7 : vector<1x1x1x8x8x128xbf16> to vector<8x8x128xbf16>
    %9 = vector.shape_cast %8 : vector<8x8x128xbf16> to vector<64x128xbf16>
    %10 = tpu.concatenate %3, %6, %9 in 1 : vector<64x128xbf16>, vector<64x128xbf16>, vector<64x128xbf16> -> vector<64x384xbf16>
    %c0_16 = arith.constant 0 : index
    %c0_17 = arith.constant 0 : index
    %c0_18 = arith.constant 0 : index
    %11 = vector.load %arg3[%c0_16, %c0_17, %c0_18] : memref<2x384x128xbf16, #tpu.memory_space<vmem>>, vector<1x384x128xbf16>
    %12 = vector.shape_cast %11 : vector<1x384x128xbf16> to vector<384x128xbf16>
    %cst_19 = arith.constant dense<0.000000e+00> : vector<64x128xf32>
    %13 = tpu.matmul %10, %12, %cst_19 {dimension_numbers = #tpu.dot_dimension_numbers<[1], [0], [0], [1], [0, 0, 1, 1], [], []>} : vector<64x384xbf16>, vector<384x128xbf16>, vector<64x128xf32> -> vector<64x128xf32>
    %14 = arith.addf %0, %13 : vector<64x128xf32>
    %c0_20 = arith.constant 0 : index
    %c1_21 = arith.constant 1 : index
    %c0_22 = arith.constant 0 : index
    %c0_23 = arith.constant 0 : index
    %c0_24 = arith.constant 0 : index
    %c0_25 = arith.constant 0 : index
    %15 = vector.load %arg2[%c0_20, %c1_21, %c0_22, %c0_23, %c0_24, %c0_25] : memref<1x2x2x9x9x128xbf16, #tpu.memory_space<vmem>>, vector<1x1x1x8x8x128xbf16>
    %16 = vector.shape_cast %15 : vector<1x1x1x8x8x128xbf16> to vector<8x8x128xbf16>
    %17 = vector.shape_cast %16 : vector<8x8x128xbf16> to vector<64x128xbf16>
    %c0_26 = arith.constant 0 : index
    %c1_27 = arith.constant 1 : index
    %c1_28 = arith.constant 1 : index
    %c0_29 = arith.constant 0 : index
    %c0_30 = arith.constant 0 : index
    %c0_31 = arith.constant 0 : index
    %18 = vector.load %arg2[%c0_26, %c1_27, %c1_28, %c0_29, %c0_30, %c0_31] : memref<1x2x2x9x9x128xbf16, #tpu.memory_space<vmem>>, vector<1x1x1x8x8x128xbf16>
    %19 = vector.shape_cast %18 : vector<1x1x1x8x8x128xbf16> to vector<8x8x128xbf16>
    %20 = vector.shape_cast %19 : vector<8x8x128xbf16> to vector<64x128xbf16>
    %c0_32 = arith.constant 0 : index
    %c1_33 = arith.constant 1 : index
    %c0_34 = arith.constant 0 : index
    %c0_35 = arith.constant 0 : index
    %c1_36 = arith.constant 1 : index
    %c0_37 = arith.constant 0 : index
    %21 = vector.load %arg2[%c0_32, %c1_33, %c0_34, %c0_35, %c1_36, %c0_37] : memref<1x2x2x9x9x128xbf16, #tpu.memory_space<vmem>>, vector<1x1x1x8x8x128xbf16>
    %22 = vector.shape_cast %21 : vector<1x1x1x8x8x128xbf16> to vector<8x8x128xbf16>
    %23 = vector.shape_cast %22 : vector<8x8x128xbf16> to vector<64x128xbf16>
    %24 = tpu.concatenate %17, %20, %23 in 1 : vector<64x128xbf16>, vector<64x128xbf16>, vector<64x128xbf16> -> vector<64x384xbf16>
    %c0_38 = arith.constant 0 : index
    %c0_39 = arith.constant 0 : index
    %25 = vector.load %arg4[%c0_38, %c0_39] : memref<384x256xbf16, #tpu.memory_space<vmem>>, vector<384x256xbf16>
    %cst_40 = arith.constant dense<0.000000e+00> : vector<64x256xf32>
    %26 = tpu.matmul %24, %25, %cst_40 {dimension_numbers = #tpu.dot_dimension_numbers<[1], [0], [0], [1], [0, 0, 1, 1], [], []>} : vector<64x384xbf16>, vector<384x256xbf16>, vector<64x256xf32> -> vector<64x256xf32>
    %27 = vector.extract_strided_slice %26 {offsets = [0, 0], sizes = [64, 128], strides = [1, 1]} : vector<64x256xf32> to vector<64x128xf32>
    %28 = arith.addf %14, %27 : vector<64x128xf32>
    %29 = vector.extract_strided_slice %26 {offsets = [0, 128], sizes = [64, 128], strides = [1, 1]} : vector<64x256xf32> to vector<64x128xf32>
    %c0_41 = arith.constant 0 : index
    %c0_42 = arith.constant 0 : index
    %30 = vector.load %arg6[%c0_41, %c0_42] : memref<1x128xf32, #tpu.memory_space<vmem>>, vector<1x128xf32>
    %31 = vector.broadcast %30 : vector<1x128xf32> to vector<64x128xf32>
    %32 = arith.addf %29, %31 : vector<64x128xf32>
    %c0_43 = arith.constant 0 : index
    %c0_44 = arith.constant 0 : index
    %c0_45 = arith.constant 0 : index
    %c1_46 = arith.constant 1 : index
    %c0_47 = arith.constant 0 : index
    %c0_48 = arith.constant 0 : index
    %33 = vector.load %arg2[%c0_43, %c0_44, %c0_45, %c1_46, %c0_47, %c0_48] : memref<1x2x2x9x9x128xbf16, #tpu.memory_space<vmem>>, vector<1x1x1x8x8x128xbf16>
    %34 = vector.shape_cast %33 : vector<1x1x1x8x8x128xbf16> to vector<8x8x128xbf16>
    %35 = vector.shape_cast %34 : vector<8x8x128xbf16> to vector<64x128xbf16>
    %c0_49 = arith.constant 0 : index
    %c0_50 = arith.constant 0 : index
    %c1_51 = arith.constant 1 : index
    %c1_52 = arith.constant 1 : index
    %c0_53 = arith.constant 0 : index
    %c0_54 = arith.constant 0 : index
    %36 = vector.load %arg2[%c0_49, %c0_50, %c1_51, %c1_52, %c0_53, %c0_54] : memref<1x2x2x9x9x128xbf16, #tpu.memory_space<vmem>>, vector<1x1x1x8x8x128xbf16>
    %37 = vector.shape_cast %36 : vector<1x1x1x8x8x128xbf16> to vector<8x8x128xbf16>
    %38 = vector.shape_cast %37 : vector<8x8x128xbf16> to vector<64x128xbf16>
    %c0_55 = arith.constant 0 : index
    %c0_56 = arith.constant 0 : index
    %c0_57 = arith.constant 0 : index
    %c1_58 = arith.constant 1 : index
    %c1_59 = arith.constant 1 : index
    %c0_60 = arith.constant 0 : index
    %39 = vector.load %arg2[%c0_55, %c0_56, %c0_57, %c1_58, %c1_59, %c0_60] : memref<1x2x2x9x9x128xbf16, #tpu.memory_space<vmem>>, vector<1x1x1x8x8x128xbf16>
    %40 = vector.shape_cast %39 : vector<1x1x1x8x8x128xbf16> to vector<8x8x128xbf16>
    %41 = vector.shape_cast %40 : vector<8x8x128xbf16> to vector<64x128xbf16>
    %42 = tpu.concatenate %35, %38, %41 in 1 : vector<64x128xbf16>, vector<64x128xbf16>, vector<64x128xbf16> -> vector<64x384xbf16>
    %c1_61 = arith.constant 1 : index
    %c0_62 = arith.constant 0 : index
    %c0_63 = arith.constant 0 : index
    %43 = vector.load %arg3[%c1_61, %c0_62, %c0_63] : memref<2x384x128xbf16, #tpu.memory_space<vmem>>, vector<1x384x128xbf16>
    %44 = vector.shape_cast %43 : vector<1x384x128xbf16> to vector<384x128xbf16>
    %cst_64 = arith.constant dense<0.000000e+00> : vector<64x128xf32>
    %45 = tpu.matmul %42, %44, %cst_64 {dimension_numbers = #tpu.dot_dimension_numbers<[1], [0], [0], [1], [0, 0, 1, 1], [], []>} : vector<64x384xbf16>, vector<384x128xbf16>, vector<64x128xf32> -> vector<64x128xf32>
    %46 = arith.addf %28, %45 : vector<64x128xf32>
    %c0_65 = arith.constant 0 : index
    %c0_66 = arith.constant 0 : index
    %47 = vector.load %arg5[%c0_65, %c0_66] : memref<1x128xf32, #tpu.memory_space<vmem>>, vector<1x128xf32>
    %48 = vector.broadcast %47 : vector<1x128xf32> to vector<64x128xf32>
    %49 = arith.addf %46, %48 : vector<64x128xf32>
    %cst_67 = arith.constant 0.000000e+00 : f32
    %50 = vector.broadcast %cst_67 : f32 to vector<64x128xf32>
    %51 = arith.maximumf %49, %50 : vector<64x128xf32>
    %52 = vector.shape_cast %51 : vector<64x128xf32> to vector<8x8x128xf32>
    %53 = arith.truncf %52 : vector<8x8x128xf32> to vector<8x8x128xbf16>
    %c0_68 = arith.constant 0 : index
    %c0_69 = arith.constant 0 : index
    %c0_70 = arith.constant 0 : index
    %c0_71 = arith.constant 0 : index
    %54 = vector.load %arg7[%c0_68, %c0_69, %c0_70, %c0_71] : memref<1x8x8x128xbf16, #tpu.memory_space<vmem>>, vector<1x8x8x128xbf16>
    %55 = vector.shape_cast %54 : vector<1x8x8x128xbf16> to vector<8x8x128xbf16>
    %56 = vector.shape_cast %53 : vector<8x8x128xbf16> to vector<1x8x8x128xbf16>
    tpu.vector_store %arg7[%c0_68, %c0_69, %c0_70, %c0_71], %56 {strides = array<i32>} : memref<1x8x8x128xbf16, #tpu.memory_space<vmem>>, vector<1x8x8x128xbf16>,
    %57 = vector.shape_cast %32 : vector<64x128xf32> to vector<8x8x128xf32>
    %58 = arith.truncf %57 : vector<8x8x128xf32> to vector<8x8x128xbf16>
    %c0_72 = arith.constant 0 : index
    %c0_73 = arith.constant 0 : index
    %c0_74 = arith.constant 0 : index
    %c0_75 = arith.constant 0 : index
    %59 = vector.load %arg8[%c0_72, %c0_73, %c0_74, %c0_75] : memref<1x8x8x128xbf16, #tpu.memory_space<vmem>>, vector<1x8x8x128xbf16>
    %60 = vector.shape_cast %59 : vector<1x8x8x128xbf16> to vector<8x8x128xbf16>
    %61 = vector.shape_cast %58 : vector<8x8x128xbf16> to vector<1x8x8x128xbf16>
    tpu.vector_store %arg8[%c0_72, %c0_73, %c0_74, %c0_75], %61 {strides = array<i32>} : memref<1x8x8x128xbf16, #tpu.memory_space<vmem>>, vector<1x8x8x128xbf16>,
    return
  }
  func.func @transform_0(%arg0: i32, %arg1: i32) -> (i32, i32, i32, i32, i32, i32) {
    %c0_i32 = arith.constant 0 : i32
    %c0_i32_0 = arith.constant 0 : i32
    %c0_i32_1 = arith.constant 0 : i32
    %c0_i32_2 = arith.constant 0 : i32
    %c0_i32_3 = arith.constant 0 : i32
    %c0_i32_4 = arith.constant 0 : i32
    return %arg0, %c0_i32, %c0_i32_0, %c0_i32_1, %c0_i32_2, %c0_i32_3 : i32, i32, i32, i32, i32, i32
  }
  func.func @transform_1(%arg0: i32, %arg1: i32) -> (i32, i32, i32) {
    %c0_i32 = arith.constant 0 : i32
    %c0_i32_0 = arith.constant 0 : i32
    %c0_i32_1 = arith.constant 0 : i32
    %c0_i32_2 = arith.constant 0 : i32
    return %c0_i32, %c0_i32_0, %c0_i32_1 : i32, i32, i32
  }
  func.func @transform_2(%arg0: i32, %arg1: i32) -> (i32, i32) {
    %c0_i32 = arith.constant 0 : i32
    %c0_i32_0 = arith.constant 0 : i32
    %c0_i32_1 = arith.constant 0 : i32
    return %c0_i32, %c0_i32_0 : i32, i32
  }
  func.func @transform_3(%arg0: i32, %arg1: i32) -> (i32, i32) {
    %c0_i32 = arith.constant 0 : i32
    %c0_i32_0 = arith.constant 0 : i32
    %c0_i32_1 = arith.constant 0 : i32
    return %c0_i32, %c0_i32_0 : i32, i32
  }
  func.func @transform_4(%arg0: i32, %arg1: i32) -> (i32, i32) {
    %c0_i32 = arith.constant 0 : i32
    %c0_i32_0 = arith.constant 0 : i32
    %c0_i32_1 = arith.constant 0 : i32
    return %c0_i32, %c0_i32_0 : i32, i32
  }
  func.func @transform_5(%arg0: i32, %arg1: i32) -> (i32, i32, i32, i32) {
    %c0_i32 = arith.constant 0 : i32
    %c0_i32_0 = arith.constant 0 : i32
    %c0_i32_1 = arith.constant 0 : i32
    return %arg0, %arg1, %c0_i32, %c0_i32_0 : i32, i32, i32, i32
  }
  func.func @transform_6(%arg0: i32, %arg1: i32) -> (i32, i32, i32, i32) {
    %c0_i32 = arith.constant 0 : i32
    %c0_i32_0 = arith.constant 0 : i32
    %c0_i32_1 = arith.constant 0 : i32
    return %arg0, %arg1, %c0_i32, %c0_i32_0 : i32, i32, i32, i32
  }
}

module attributes {stable_mosaic.version = 11 : i64} {
  func.func @kernel(%arg0: i32, %arg1: i32, %arg2: memref<1x1x1x10x10x128xbf16, #tpu.memory_space<vmem>>, %arg3: memref<3x384x128xbf16, #tpu.memory_space<vmem>>, %arg4: memref<1x128xf32, #tpu.memory_space<vmem>>, %arg5: memref<1x8x8x128xbf16, #tpu.memory_space<vmem>>, %arg6: memref<1x8x8x128xbf16, #tpu.memory_space<vmem>>) attributes {dimension_semantics = [#tpu.dimension_semantics<parallel>, #tpu.dimension_semantics<parallel>], iteration_bounds = array<i64: 2, 1>, scalar_prefetch = 0 : i64, scratch_operands = 0 : i64, tpu.core_type = #tpu.core_type<tc>, window_params = [{transform_indices = @transform_0, window_bounds = array<i64: 1, 1, 1, 10, 10, 128>}, {pipeline_mode = #tpu.pipeline_mode<synchronous>, transform_indices = @transform_1, window_bounds = array<i64: 3, 384, 128>}, {pipeline_mode = #tpu.pipeline_mode<synchronous>, transform_indices = @transform_2, window_bounds = array<i64: 1, 128>}, {transform_indices = @transform_3, window_bounds = array<i64: 1, 8, 8, 128>}, {transform_indices = @transform_4, window_bounds = array<i64: 1, 8, 8, 128>}]} {
    %cst = arith.constant 0.000000e+00 : f32
    %0 = vector.broadcast %cst : f32 to vector<64x128xf32>
    %c0 = arith.constant 0 : index
    %c0_0 = arith.constant 0 : index
    %c0_1 = arith.constant 0 : index
    %c0_2 = arith.constant 0 : index
    %c0_3 = arith.constant 0 : index
    %c0_4 = arith.constant 0 : index
    %1 = vector.load %arg2[%c0, %c0_0, %c0_1, %c0_2, %c0_3, %c0_4] : memref<1x1x1x10x10x128xbf16, #tpu.memory_space<vmem>>, vector<1x1x1x8x8x128xbf16>
    %2 = vector.shape_cast %1 : vector<1x1x1x8x8x128xbf16> to vector<8x8x128xbf16>
    %3 = vector.shape_cast %2 : vector<8x8x128xbf16> to vector<64x128xbf16>
    %c0_5 = arith.constant 0 : index
    %c0_6 = arith.constant 0 : index
    %c0_7 = arith.constant 0 : index
    %c0_8 = arith.constant 0 : index
    %c1 = arith.constant 1 : index
    %c0_9 = arith.constant 0 : index
    %4 = vector.load %arg2[%c0_5, %c0_6, %c0_7, %c0_8, %c1, %c0_9] : memref<1x1x1x10x10x128xbf16, #tpu.memory_space<vmem>>, vector<1x1x1x8x8x128xbf16>
    %5 = vector.shape_cast %4 : vector<1x1x1x8x8x128xbf16> to vector<8x8x128xbf16>
    %6 = vector.shape_cast %5 : vector<8x8x128xbf16> to vector<64x128xbf16>
    %c0_10 = arith.constant 0 : index
    %c0_11 = arith.constant 0 : index
    %c0_12 = arith.constant 0 : index
    %c0_13 = arith.constant 0 : index
    %c2 = arith.constant 2 : index
    %c0_14 = arith.constant 0 : index
    %7 = vector.load %arg2[%c0_10, %c0_11, %c0_12, %c0_13, %c2, %c0_14] : memref<1x1x1x10x10x128xbf16, #tpu.memory_space<vmem>>, vector<1x1x1x8x8x128xbf16>
    %8 = vector.shape_cast %7 : vector<1x1x1x8x8x128xbf16> to vector<8x8x128xbf16>
    %9 = vector.shape_cast %8 : vector<8x8x128xbf16> to vector<64x128xbf16>
    %10 = tpu.concatenate %3, %6, %9 in 1 : vector<64x128xbf16>, vector<64x128xbf16>, vector<64x128xbf16> -> vector<64x384xbf16>
    %c0_15 = arith.constant 0 : index
    %c0_16 = arith.constant 0 : index
    %c0_17 = arith.constant 0 : index
    %11 = vector.load %arg3[%c0_15, %c0_16, %c0_17] : memref<3x384x128xbf16, #tpu.memory_space<vmem>>, vector<1x384x128xbf16>
    %12 = vector.shape_cast %11 : vector<1x384x128xbf16> to vector<384x128xbf16>
    %cst_18 = arith.constant dense<0.000000e+00> : vector<64x128xf32>
    %13 = tpu.matmul %10, %12, %cst_18 {dimension_numbers = #tpu.dot_dimension_numbers<[1], [0], [0], [1], [0, 0, 1, 1], [], []>} : vector<64x384xbf16>, vector<384x128xbf16>, vector<64x128xf32> -> vector<64x128xf32>
    %14 = arith.addf %0, %13 : vector<64x128xf32>
    %c0_19 = arith.constant 0 : index
    %c0_20 = arith.constant 0 : index
    %c0_21 = arith.constant 0 : index
    %c1_22 = arith.constant 1 : index
    %c0_23 = arith.constant 0 : index
    %c0_24 = arith.constant 0 : index
    %15 = vector.load %arg2[%c0_19, %c0_20, %c0_21, %c1_22, %c0_23, %c0_24] : memref<1x1x1x10x10x128xbf16, #tpu.memory_space<vmem>>, vector<1x1x1x8x8x128xbf16>
    %16 = vector.shape_cast %15 : vector<1x1x1x8x8x128xbf16> to vector<8x8x128xbf16>
    %17 = vector.shape_cast %16 : vector<8x8x128xbf16> to vector<64x128xbf16>
    %c0_25 = arith.constant 0 : index
    %c0_26 = arith.constant 0 : index
    %c0_27 = arith.constant 0 : index
    %c1_28 = arith.constant 1 : index
    %c1_29 = arith.constant 1 : index
    %c0_30 = arith.constant 0 : index
    %18 = vector.load %arg2[%c0_25, %c0_26, %c0_27, %c1_28, %c1_29, %c0_30] : memref<1x1x1x10x10x128xbf16, #tpu.memory_space<vmem>>, vector<1x1x1x8x8x128xbf16>
    %19 = vector.shape_cast %18 : vector<1x1x1x8x8x128xbf16> to vector<8x8x128xbf16>
    %20 = vector.shape_cast %19 : vector<8x8x128xbf16> to vector<64x128xbf16>
    %c0_31 = arith.constant 0 : index
    %c0_32 = arith.constant 0 : index
    %c0_33 = arith.constant 0 : index
    %c1_34 = arith.constant 1 : index
    %c2_35 = arith.constant 2 : index
    %c0_36 = arith.constant 0 : index
    %21 = vector.load %arg2[%c0_31, %c0_32, %c0_33, %c1_34, %c2_35, %c0_36] : memref<1x1x1x10x10x128xbf16, #tpu.memory_space<vmem>>, vector<1x1x1x8x8x128xbf16>
    %22 = vector.shape_cast %21 : vector<1x1x1x8x8x128xbf16> to vector<8x8x128xbf16>
    %23 = vector.shape_cast %22 : vector<8x8x128xbf16> to vector<64x128xbf16>
    %24 = tpu.concatenate %17, %20, %23 in 1 : vector<64x128xbf16>, vector<64x128xbf16>, vector<64x128xbf16> -> vector<64x384xbf16>
    %c1_37 = arith.constant 1 : index
    %c0_38 = arith.constant 0 : index
    %c0_39 = arith.constant 0 : index
    %25 = vector.load %arg3[%c1_37, %c0_38, %c0_39] : memref<3x384x128xbf16, #tpu.memory_space<vmem>>, vector<1x384x128xbf16>
    %26 = vector.shape_cast %25 : vector<1x384x128xbf16> to vector<384x128xbf16>
    %cst_40 = arith.constant dense<0.000000e+00> : vector<64x128xf32>
    %27 = tpu.matmul %24, %26, %cst_40 {dimension_numbers = #tpu.dot_dimension_numbers<[1], [0], [0], [1], [0, 0, 1, 1], [], []>} : vector<64x384xbf16>, vector<384x128xbf16>, vector<64x128xf32> -> vector<64x128xf32>
    %28 = arith.addf %14, %27 : vector<64x128xf32>
    %c0_41 = arith.constant 0 : index
    %c0_42 = arith.constant 0 : index
    %c0_43 = arith.constant 0 : index
    %c2_44 = arith.constant 2 : index
    %c0_45 = arith.constant 0 : index
    %c0_46 = arith.constant 0 : index
    %29 = vector.load %arg2[%c0_41, %c0_42, %c0_43, %c2_44, %c0_45, %c0_46] : memref<1x1x1x10x10x128xbf16, #tpu.memory_space<vmem>>, vector<1x1x1x8x8x128xbf16>
    %30 = vector.shape_cast %29 : vector<1x1x1x8x8x128xbf16> to vector<8x8x128xbf16>
    %31 = vector.shape_cast %30 : vector<8x8x128xbf16> to vector<64x128xbf16>
    %c0_47 = arith.constant 0 : index
    %c0_48 = arith.constant 0 : index
    %c0_49 = arith.constant 0 : index
    %c2_50 = arith.constant 2 : index
    %c1_51 = arith.constant 1 : index
    %c0_52 = arith.constant 0 : index
    %32 = vector.load %arg2[%c0_47, %c0_48, %c0_49, %c2_50, %c1_51, %c0_52] : memref<1x1x1x10x10x128xbf16, #tpu.memory_space<vmem>>, vector<1x1x1x8x8x128xbf16>
    %33 = vector.shape_cast %32 : vector<1x1x1x8x8x128xbf16> to vector<8x8x128xbf16>
    %34 = vector.shape_cast %33 : vector<8x8x128xbf16> to vector<64x128xbf16>
    %c0_53 = arith.constant 0 : index
    %c0_54 = arith.constant 0 : index
    %c0_55 = arith.constant 0 : index
    %c2_56 = arith.constant 2 : index
    %c2_57 = arith.constant 2 : index
    %c0_58 = arith.constant 0 : index
    %35 = vector.load %arg2[%c0_53, %c0_54, %c0_55, %c2_56, %c2_57, %c0_58] : memref<1x1x1x10x10x128xbf16, #tpu.memory_space<vmem>>, vector<1x1x1x8x8x128xbf16>
    %36 = vector.shape_cast %35 : vector<1x1x1x8x8x128xbf16> to vector<8x8x128xbf16>
    %37 = vector.shape_cast %36 : vector<8x8x128xbf16> to vector<64x128xbf16>
    %38 = tpu.concatenate %31, %34, %37 in 1 : vector<64x128xbf16>, vector<64x128xbf16>, vector<64x128xbf16> -> vector<64x384xbf16>
    %c2_59 = arith.constant 2 : index
    %c0_60 = arith.constant 0 : index
    %c0_61 = arith.constant 0 : index
    %39 = vector.load %arg3[%c2_59, %c0_60, %c0_61] : memref<3x384x128xbf16, #tpu.memory_space<vmem>>, vector<1x384x128xbf16>
    %40 = vector.shape_cast %39 : vector<1x384x128xbf16> to vector<384x128xbf16>
    %cst_62 = arith.constant dense<0.000000e+00> : vector<64x128xf32>
    %41 = tpu.matmul %38, %40, %cst_62 {dimension_numbers = #tpu.dot_dimension_numbers<[1], [0], [0], [1], [0, 0, 1, 1], [], []>} : vector<64x384xbf16>, vector<384x128xbf16>, vector<64x128xf32> -> vector<64x128xf32>
    %42 = arith.addf %28, %41 : vector<64x128xf32>
    %c0_63 = arith.constant 0 : index
    %c0_64 = arith.constant 0 : index
    %43 = vector.load %arg4[%c0_63, %c0_64] : memref<1x128xf32, #tpu.memory_space<vmem>>, vector<1x128xf32>
    %44 = vector.broadcast %43 : vector<1x128xf32> to vector<64x128xf32>
    %45 = arith.addf %42, %44 : vector<64x128xf32>
    %c0_65 = arith.constant 0 : index
    %c0_66 = arith.constant 0 : index
    %c0_67 = arith.constant 0 : index
    %c0_68 = arith.constant 0 : index
    %46 = vector.load %arg5[%c0_65, %c0_66, %c0_67, %c0_68] : memref<1x8x8x128xbf16, #tpu.memory_space<vmem>>, vector<1x8x8x128xbf16>
    %47 = vector.shape_cast %46 : vector<1x8x8x128xbf16> to vector<8x8x128xbf16>
    %48 = vector.shape_cast %47 : vector<8x8x128xbf16> to vector<64x128xbf16>
    %49 = arith.extf %48 : vector<64x128xbf16> to vector<64x128xf32>
    %50 = arith.addf %45, %49 : vector<64x128xf32>
    %cst_69 = arith.constant 0.000000e+00 : f32
    %51 = vector.broadcast %cst_69 : f32 to vector<64x128xf32>
    %52 = arith.maximumf %50, %51 : vector<64x128xf32>
    %53 = vector.shape_cast %52 : vector<64x128xf32> to vector<8x8x128xf32>
    %54 = arith.truncf %53 : vector<8x8x128xf32> to vector<8x8x128xbf16>
    %c0_70 = arith.constant 0 : index
    %c0_71 = arith.constant 0 : index
    %c0_72 = arith.constant 0 : index
    %c0_73 = arith.constant 0 : index
    %55 = vector.load %arg6[%c0_70, %c0_71, %c0_72, %c0_73] : memref<1x8x8x128xbf16, #tpu.memory_space<vmem>>, vector<1x8x8x128xbf16>
    %56 = vector.shape_cast %55 : vector<1x8x8x128xbf16> to vector<8x8x128xbf16>
    %57 = vector.shape_cast %54 : vector<8x8x128xbf16> to vector<1x8x8x128xbf16>
    tpu.vector_store %arg6[%c0_70, %c0_71, %c0_72, %c0_73], %57 {strides = array<i32>} : memref<1x8x8x128xbf16, #tpu.memory_space<vmem>>, vector<1x8x8x128xbf16>,
    return
  }
  func.func @transform_0(%arg0: i32, %arg1: i32) -> (i32, i32, i32, i32, i32, i32) {
    %c0_i32 = arith.constant 0 : i32
    %c0_i32_0 = arith.constant 0 : i32
    %c0_i32_1 = arith.constant 0 : i32
    %c0_i32_2 = arith.constant 0 : i32
    %c0_i32_3 = arith.constant 0 : i32
    %c0_i32_4 = arith.constant 0 : i32
    return %arg0, %c0_i32, %c0_i32_0, %c0_i32_1, %c0_i32_2, %c0_i32_3 : i32, i32, i32, i32, i32, i32
  }
  func.func @transform_1(%arg0: i32, %arg1: i32) -> (i32, i32, i32) {
    %c0_i32 = arith.constant 0 : i32
    %c0_i32_0 = arith.constant 0 : i32
    %c0_i32_1 = arith.constant 0 : i32
    %c0_i32_2 = arith.constant 0 : i32
    return %c0_i32, %c0_i32_0, %c0_i32_1 : i32, i32, i32
  }
  func.func @transform_2(%arg0: i32, %arg1: i32) -> (i32, i32) {
    %c0_i32 = arith.constant 0 : i32
    %c0_i32_0 = arith.constant 0 : i32
    %c0_i32_1 = arith.constant 0 : i32
    return %c0_i32, %c0_i32_0 : i32, i32
  }
  func.func @transform_3(%arg0: i32, %arg1: i32) -> (i32, i32, i32, i32) {
    %c0_i32 = arith.constant 0 : i32
    %c0_i32_0 = arith.constant 0 : i32
    %c0_i32_1 = arith.constant 0 : i32
    return %arg0, %arg1, %c0_i32, %c0_i32_0 : i32, i32, i32, i32
  }
  func.func @transform_4(%arg0: i32, %arg1: i32) -> (i32, i32, i32, i32) {
    %c0_i32 = arith.constant 0 : i32
    %c0_i32_0 = arith.constant 0 : i32
    %c0_i32_1 = arith.constant 0 : i32
    return %arg0, %arg1, %c0_i32, %c0_i32_0 : i32, i32, i32, i32
  }
}

</mosaic_0001>

<llo_original>
// kernel: basic_block_forward.3
$region0: #{basic_block_forward.3}
  #allocation0 [shape = 'u32[]', space=smem, size = 0x4, offset = 0x4, fixed_abs, tag = 'smem constant byte address 0x4 - core index']
  #allocation1 [shape = 'u32[72,128]{1,0:T(1,128)}', space=vmem, size = 0x9000, scoped, tag = 'internal scratch']
  %s0 = inlined_call_operand.vmem [shape: bf16[2,1,1,10,10,128], index: 0, kind: input, shape index: {}]
  %s1 = inlined_call_operand.vmem [shape: bf16[3,384,128], index: 1, kind: input, shape index: {}]
  %s2 = inlined_call_operand.vmem [shape: f32[1,128], index: 2, kind: input, shape index: {}]
  %s3 = inlined_call_operand.vmem [shape: bf16[2,8,8,128], index: 3, kind: input, shape index: {}]
  %s4 = inlined_call_operand.vmem [shape: bf16[2,8,8,128], index: 4, kind: output, shape index: {}]
  %s5 = sld [smem:[#allocation0]]
  $region49: #{basic_block_forward.3} parent=0
    _
  %s7 = ssub.s32 1, %s5
  %s8 = scalar_select 0, %s7, %s5
  loop: start=0, step=1, limit=4
  $region2: #{basic_block_forward.3} parent=0 // loop_pre_header
    _
  $region3: #{basic_block_forward.3} parent=0 // loop_header
    %s10 = sphi 0, %s14
    %p11 = scmp.ge.s32.totalorder %s10, 4
    %s17 = sphi 0, %s29
    %s18 = sphi 0, %s25
    %s19 = sphi 0, %s17
    %s20 = sphi 0, %s18
    %s21 = sphi 0, %s19
    %s22 = sphi 0, %s20
    %s32 = sphi 0, %s34
    %s35 = sphi 0, %s32
    %s36 = sphi 0, %s35
    %s52 = sphi 0, %s36
    %s56 = sphi 0, %s56
    %s58 = sphi 0, %s56
    %s59 = sphi 0, %s58
    %s73 = sphi 0, %s59
    %s77 = sphi 0, %s77
    %s79 = sphi 0, %s77
    %s80 = sphi 0, %s79
    %s94 = sphi 0, %s80
    %s102 = sphi 0, %s104
    %s105 = sphi 0, %s102
    %s106 = sphi 0, %s105
    %s122 = sphi 0, %s106
    %s130 = sphi 0, %s132
    %s133 = sphi 0, %s130
    %s134 = sphi 0, %s133
    %s150 = sphi 0, %s134
  $region4: #{basic_block_forward.3} parent=0 // loop_header_branch
    %13 = sbr.rel (%p11) target = $region8
  $region5: #{basic_block_forward.3} parent=0 // loop_body
    %s15 = ssub.s32 %s10, 1
    %s16 = ssub.s32 %s10, 2
    %s23 = sadd.s32 1, %s18
    %p24 = scmp.ge.s32.totalorder %s23, 1
    %s25 = scalar_select %p24, 0, %s23
    %s26 = sadd.s32 1, %s17
    %s27 = scalar_select %p24, %s26, %s17
    %p28 = scmp.ge.s32.totalorder %s27, 2
    %s29 = scalar_select %p28, 0, %s27
    %s30 = ssub.s32 %s17, %s29
    %p31 = scmp.eq.s32.totalorder %s30, 0
    %s33 = sadd.s32 %s32, 1
    %s34 = scalar_select %p31, %s32, %s33
    %p37 = pneg %p31
    %p38 = scmp.eq.s32.totalorder %s10, 1
    %p39 = por %p37, %p38
    %p40 = scmp.ne.s32.totalorder %s32, %s35
    %p41 = scmp.eq.s32.totalorder %s10, 0
    %p42 = por %p40, %p41
    %p43 = scmp.ne.s32.totalorder %s32, %s35
    %p44 = scmp.eq.s32.totalorder %s15, 1
    %p45 = por %p43, %p44
    %p46 = scmp.ne.s32.totalorder %s35, %s36
    %p47 = scmp.eq.s32.totalorder %s15, 0
    %p48 = por %p46, %p47
    %p49 = scmp.ne.s32.totalorder %s35, %s36
    %p50 = scmp.eq.s32.totalorder %s16, 1
    %p51 = por %p49, %p50
    %p53 = scmp.ne.s32.totalorder %s36, %s52
    %p54 = scmp.eq.s32.totalorder %s16, 0
    %p55 = por %p53, %p54
    %s57 = sadd.s32 %s56, 1
    %p60 = scmp.eq.s32.totalorder %s10, 1
    %p61 = scmp.ne.s32.totalorder %s56, %s58
    %p62 = scmp.eq.s32.totalorder %s10, 0
    %p63 = por %p61, %p62
    %p64 = scmp.ne.s32.totalorder %s56, %s58
    %p65 = scmp.eq.s32.totalorder %s15, 1
    %p66 = por %p64, %p65
    %p67 = scmp.ne.s32.totalorder %s58, %s59
    %p68 = scmp.eq.s32.totalorder %s15, 0
    %p69 = por %p67, %p68
    %p70 = scmp.ne.s32.totalorder %s58, %s59
    %p71 = scmp.eq.s32.totalorder %s16, 1
    %p72 = por %p70, %p71
    %p74 = scmp.ne.s32.totalorder %s59, %s73
    %p75 = scmp.eq.s32.totalorder %s16, 0
    %p76 = por %p74, %p75
    %s78 = sadd.s32 %s77, 1
    %p81 = scmp.eq.s32.totalorder %s10, 1
    %p82 = scmp.ne.s32.totalorder %s77, %s79
    %p83 = scmp.eq.s32.totalorder %s10, 0
    %p84 = por %p82, %p83
    %p85 = scmp.ne.s32.totalorder %s77, %s79
    %p86 = scmp.eq.s32.totalorder %s15, 1
    %p87 = por %p85, %p86
    %p88 = scmp.ne.s32.totalorder %s79, %s80
    %p89 = scmp.eq.s32.totalorder %s15, 0
    %p90 = por %p88, %p89
    %p91 = scmp.ne.s32.totalorder %s79, %s80
    %p92 = scmp.eq.s32.totalorder %s16, 1
    %p93 = por %p91, %p92
    %p95 = scmp.ne.s32.totalorder %s80, %s94
    %p96 = scmp.eq.s32.totalorder %s16, 0
    %p97 = por %p95, %p96
    %s98 = ssub.s32 %s17, %s29
    %s99 = ssub.s32 %s18, %s25
    %s100 = sor.u32 %s98, %s99
    %p101 = scmp.eq.s32.totalorder %s100, 0
    %s103 = sadd.s32 %s102, 1
    %s104 = scalar_select %p101, %s102, %s103
    %p107 = pneg %p101
    %p108 = scmp.eq.s32.totalorder %s10, 1
    %p109 = por %p107, %p108
    %p110 = scmp.ne.s32.totalorder %s102, %s105
    %p111 = scmp.eq.s32.totalorder %s10, 0
    %p112 = por %p110, %p111
    %p113 = scmp.ne.s32.totalorder %s102, %s105
    %p114 = scmp.eq.s32.totalorder %s15, 1
    %p115 = por %p113, %p114
    %p116 = scmp.ne.s32.totalorder %s105, %s106
    %p117 = scmp.eq.s32.totalorder %s15, 0
    %p118 = por %p116, %p117
    %p119 = scmp.ne.s32.totalorder %s105, %s106
    %p120 = scmp.eq.s32.totalorder %s16, 1
    %p121 = por %p119, %p120
    %p123 = scmp.ne.s32.totalorder %s106, %s122
    %p124 = scmp.eq.s32.totalorder %s16, 0
    %p125 = por %p123, %p124
    %s126 = ssub.s32 %s17, %s29
    %s127 = ssub.s32 %s18, %s25
    %s128 = sor.u32 %s126, %s127
    %p129 = scmp.eq.s32.totalorder %s128, 0
    %s131 = sadd.s32 %s130, 1
    %s132 = scalar_select %p129, %s130, %s131
    %p135 = pneg %p129
    %p136 = scmp.eq.s32.totalorder %s10, 1
    %p137 = por %p135, %p136
    %p138 = scmp.ne.s32.totalorder %s130, %s133
    %p139 = scmp.eq.s32.totalorder %s10, 0
    %p140 = por %p138, %p139
    %p141 = scmp.ne.s32.totalorder %s130, %s133
    %p142 = scmp.eq.s32.totalorder %s15, 1
    %p143 = por %p141, %p142
    %p144 = scmp.ne.s32.totalorder %s133, %s134
    %p145 = scmp.eq.s32.totalorder %s15, 0
    %p146 = por %p144, %p145
    %p147 = scmp.ne.s32.totalorder %s133, %s134
    %p148 = scmp.eq.s32.totalorder %s16, 1
    %p149 = por %p147, %p148
    %p151 = scmp.ne.s32.totalorder %s134, %s150
    %p152 = scmp.eq.s32.totalorder %s16, 0
    %p153 = por %p151, %p152
    %p154 = scmp.le.s32.totalorder 1, %s10
    %p155 = scmp.lt.s32.totalorder %s10, 3
    %p156 = pnand %p154, %p155
    %p157 = pneg %p156
    // Predicated region
    $region9: #{basic_block_forward.3} parent=5 // pred_check
      _
    $region10: #{basic_block_forward.3} parent=5 // pred_check_branch
      %159 = sbr.rel (%p156) target = $region12
    $region11: #{basic_block_forward.3} parent=5 // pred_region
      %s160 = ssub.s32 %s10, 1
      // Predicated region
      $region13: #{basic_block_forward.3} parent=11 // pred_check
        %p161 = pneg %p69
      $region14: #{basic_block_forward.3} parent=11 // pred_check_branch
        %163 = sbr.rel (%p161) target = $region16
      $region15: #{basic_block_forward.3} parent=11 // pred_region
        _
      $region16: #{basic_block_forward.3} parent=11 // pred_fallthru
        _
      // Predicated region
      $region17: #{basic_block_forward.3} parent=11 // pred_check
        %p164 = pneg %p90
      $region18: #{basic_block_forward.3} parent=11 // pred_check_branch
        %166 = sbr.rel (%p164) target = $region20
      $region19: #{basic_block_forward.3} parent=11 // pred_region
        _
      $region20: #{basic_block_forward.3} parent=11 // pred_fallthru
        _
    $region12: #{basic_block_forward.3} parent=5 // pred_fallthru
      _
    %p167 = scmp.lt.s32.totalorder %s10, 2
    // Predicated region
    $region21: #{basic_block_forward.3} parent=5 // pred_check
      %p168 = pneg %p167
    $region22: #{basic_block_forward.3} parent=5 // pred_check_branch
      %170 = sbr.rel (%p168) target = $region24
    $region23: #{basic_block_forward.3} parent=5 // pred_region
      // Predicated region
      $region25: #{basic_block_forward.3} parent=23 // pred_check
        %p171 = pneg %p42
      $region26: #{basic_block_forward.3} parent=23 // pred_check_branch
        %173 = sbr.rel (%p171) target = $region28
      $region27: #{basic_block_forward.3} parent=23 // pred_region
        %p174 = scmp.lt.s32.totalorder %s17, 1
        %s175 = scalar_select %p174, %s17, 1
        %s176 = smul.addr %s175, 20
        %s177 = smul.addr %s176, 4
        %s178 = scalar_lea.vmem %s0, %s177
      $region28: #{basic_block_forward.3} parent=23 // pred_fallthru
        _
      // Predicated region
      $region29: #{basic_block_forward.3} parent=23 // pred_check
        %p179 = pneg %p112
      $region30: #{basic_block_forward.3} parent=23 // pred_check_branch
        %181 = sbr.rel (%p179) target = $region32
      $region31: #{basic_block_forward.3} parent=23 // pred_region
        %s182 = smul.u32 8, %s18
        %p183 = scmp.lt.s32.totalorder %s17, 1
        %s184 = scalar_select %p183, %s17, 1
        %p185 = scmp.lt.s32.totalorder %s182, 7
        %s186 = scalar_select %p185, %s182, 7
        %s187 = smul.addr %s184, 8
        %s188 = sadd.s32 %s186, %s187
        %s189 = smul.addr %s188, 4
        %s190 = scalar_lea.vmem %s3, %s189
        %s191 = smul.u32 8, %s18
      $region32: #{basic_block_forward.3} parent=23 // pred_fallthru
        _
    $region24: #{basic_block_forward.3} parent=5 // pred_fallthru
      _
    %p192 = scmp.le.s32.totalorder 1, %s10
    %p193 = scmp.lt.s32.totalorder %s10, 3
    %p194 = pnand %p192, %p193
    %p195 = pneg %p194
    // Predicated region
    $region33: #{basic_block_forward.3} parent=5 // pred_check
      _
    $region34: #{basic_block_forward.3} parent=5 // pred_check_branch
      %197 = sbr.rel (%p194) target = $region36
    $region35: #{basic_block_forward.3} parent=5 // pred_region
      %s198 = ssub.s32 %s10, 1
      %p199 = scmp.lt.s32.totalorder %s19, 1
      %s200 = scalar_select %p199, %s19, 1
      %s201 = smul.addr %s200, 20
      %s202 = smul.addr %s201, 4
      %s203 = scalar_lea.vmem %s0, %s202
      %p204 = pneg %p48
      %p205 = pneg %p45
      %p206 = pneg %p69
      %p207 = pneg %p66
      %p208 = pneg %p90
      %p209 = pneg %p87
      %s210 = smul.u32 8, %s20
      %p211 = scmp.lt.s32.totalorder %s19, 1
      %s212 = scalar_select %p211, %s19, 1
      %p213 = scmp.lt.s32.totalorder %s210, 7
      %s214 = scalar_select %p213, %s210, 7
      %s215 = smul.addr %s212, 8
      %s216 = sadd.s32 %s214, %s215
      %s217 = smul.addr %s216, 4
      %s218 = scalar_lea.vmem %s3, %s217
      %p219 = pneg %p118
      %p220 = pneg %p115
      %p221 = pneg %p146
      %p222 = pneg %p143
      %s223 = smul.u32 8, %s20
      %p224 = scmp.lt.s32.totalorder %s19, 1
      %s225 = scalar_select %p224, %s19, 1
      %p226 = scmp.lt.s32.totalorder %s223, 7
      %s227 = scalar_select %p226, %s223, 7
      %s228 = smul.addr %s225, 8
      %s229 = sadd.s32 %s227, %s228
      %s230 = smul.addr %s229, 4
      %s231 = scalar_lea.vmem %s4, %s230
      %p232 = scmp.lt.s32.totalorder %s19, 1
      %s233 = scalar_select %p232, %s19, 1
      %s234 = smul.addr %s233, 20
      %s235 = smul.addr %s234, 4
      %s236 = scalar_lea.vmem %s0, %s235
      %s237 = smul.u32 8, %s20
      %p238 = scmp.lt.s32.totalorder %s19, 1
      %s239 = scalar_select %p238, %s19, 1
      %p240 = scmp.lt.s32.totalorder %s237, 7
      %s241 = scalar_select %p240, %s237, 7
      %s242 = smul.addr %s239, 8
      %s243 = sadd.s32 %s241, %s242
      %s244 = smul.addr %s243, 4
      %s245 = scalar_lea.vmem %s3, %s244
      %s246 = smul.u32 8, %s20
      %s247 = smul.u32 8, %s20
      %p248 = scmp.lt.s32.totalorder %s19, 1
      %s249 = scalar_select %p248, %s19, 1
      %p250 = scmp.lt.s32.totalorder %s247, 7
      %s251 = scalar_select %p250, %s247, 7
      %s252 = smul.addr %s249, 8
      %s253 = sadd.s32 %s251, %s252
      %s254 = smul.addr %s253, 4
      %s255 = scalar_lea.vmem %s4, %s254
      %s256 = smul.u32 8, %s20
      %v257 = vld [vmem:[%s236] sm:$0xf]
      %v258 = vld [vmem:[%s236 + $0x8] sm:$0xf]
      %v259 = vld [vmem:[%s236 + $0x10] sm:$0xf]
      %v260 = vld [vmem:[%s236 + $0x18] sm:$0xf]
      %v261 = vld [vmem:[%s236 + $0x20] sm:$0xf]
      %v262 = vld [vmem:[%s236 + $0x28] sm:$0xf]
      %v263 = vld [vmem:[%s236 + $0x30] sm:$0xf]
      %v264 = vld [vmem:[%s236 + $0x38] sm:$0xf]
      %v265 = vld [vmem:[%s236 + $0x4] sm:$0x1]
      %v266 = vld [vmem:[%s236 + $0xc] sm:$0x1]
      %v267 = vld [vmem:[%s236 + $0x14] sm:$0x1]
      %v268 = vld [vmem:[%s236 + $0x1c] sm:$0x1]
      %v269 = vld [vmem:[%s236 + $0x24] sm:$0x1]
      %v270 = vld [vmem:[%s236 + $0x2c] sm:$0x1]
      %v271 = vld [vmem:[%s236 + $0x34] sm:$0x1]
      %v272 = vld [vmem:[%s236 + $0x3c] sm:$0x1]
      %vm273 = vsmask.f32 3328
      %vm274 = vsmask.f32 7440
      %vm275 = vmor %vm273, %vm274
      %v277 = vshrl.u32 %v257, 16
      %v279 = vrot.slane %v277, 4
      %v280 = vshll.u32 %v257, 16
      %v282 = vrot.slane %v280, 5
      %v283 = vor.u32 %v279, %v282
      %v284 = vrot.slane %v283, 4
      %v286 = vshll.u32 %v265, 16
      %v288 = vrot.slane %v286, 5
      %v289 = vsel %vm275, %v284, %v288
      %v291 = vshrl.u32 %v258, 16
      %v293 = vrot.slane %v291, 4
      %v294 = vshll.u32 %v258, 16
      %v296 = vrot.slane %v294, 5
      %v297 = vor.u32 %v293, %v296
      %v298 = vrot.slane %v297, 4
      %v300 = vshll.u32 %v266, 16
      %v302 = vrot.slane %v300, 5
      %v303 = vsel %vm275, %v298, %v302
      %v305 = vshrl.u32 %v259, 16
      %v307 = vrot.slane %v305, 4
      %v308 = vshll.u32 %v259, 16
      %v310 = vrot.slane %v308, 5
      %v311 = vor.u32 %v307, %v310
      %v312 = vrot.slane %v311, 4
      %v314 = vshll.u32 %v267, 16
      %v316 = vrot.slane %v314, 5
      %v317 = vsel %vm275, %v312, %v316
      %v319 = vshrl.u32 %v260, 16
      %v321 = vrot.slane %v319, 4
      %v322 = vshll.u32 %v260, 16
      %v324 = vrot.slane %v322, 5
      %v325 = vor.u32 %v321, %v324
      %v326 = vrot.slane %v325, 4
      %v328 = vshll.u32 %v268, 16
      %v330 = vrot.slane %v328, 5
      %v331 = vsel %vm275, %v326, %v330
      %v333 = vshrl.u32 %v261, 16
      %v335 = vrot.slane %v333, 4
      %v336 = vshll.u32 %v261, 16
      %v338 = vrot.slane %v336, 5
      %v339 = vor.u32 %v335, %v338
      %v340 = vrot.slane %v339, 4
      %v342 = vshll.u32 %v269, 16
      %v344 = vrot.slane %v342, 5
      %v345 = vsel %vm275, %v340, %v344
      %v347 = vshrl.u32 %v262, 16
      %v349 = vrot.slane %v347, 4
      %v350 = vshll.u32 %v262, 16
      %v352 = vrot.slane %v350, 5
      %v353 = vor.u32 %v349, %v352
      %v354 = vrot.slane %v353, 4
      %v356 = vshll.u32 %v270, 16
      %v358 = vrot.slane %v356, 5
      %v359 = vsel %vm275, %v354, %v358
      %v361 = vshrl.u32 %v263, 16
      %v363 = vrot.slane %v361, 4
      %v364 = vshll.u32 %v263, 16
      %v366 = vrot.slane %v364, 5
      %v367 = vor.u32 %v363, %v366
      %v368 = vrot.slane %v367, 4
      %v370 = vshll.u32 %v271, 16
      %v372 = vrot.slane %v370, 5
      %v373 = vsel %vm275, %v368, %v372
      %v375 = vshrl.u32 %v264, 16
      %v377 = vrot.slane %v375, 4
      %v378 = vshll.u32 %v264, 16
      %v380 = vrot.slane %v378, 5
      %v381 = vor.u32 %v377, %v380
      %v382 = vrot.slane %v381, 4
      %v384 = vshll.u32 %v272, 16
      %v386 = vrot.slane %v384, 5
      %v387 = vsel %vm275, %v382, %v386
      %v388 = vld [vmem:[%s236] sm:$0xe]
      %v389 = vld [vmem:[%s236 + $0x8] sm:$0xe]
      %v390 = vld [vmem:[%s236 + $0x10] sm:$0xe]
      %v391 = vld [vmem:[%s236 + $0x18] sm:$0xe]
      %v392 = vld [vmem:[%s236 + $0x20] sm:$0xe]
      %v393 = vld [vmem:[%s236 + $0x28] sm:$0xe]
      %v394 = vld [vmem:[%s236 + $0x30] sm:$0xe]
      %v395 = vld [vmem:[%s236 + $0x38] sm:$0xe]
      %vm412 = vcmask 1042432
      %vm413 = vcmask 1046532
      %vm414 = vmor %vm412, %vm413
      %v415 = vrot.slane %v388, 5
      %v416 = vrot.slane %v415, 4
      %v417 = vrot.slane %v265, 5
      %v418 = vsel %vm414, %v416, %v417
      %v419 = vrot.slane %v389, 5
      %v420 = vrot.slane %v419, 4
      %v421 = vrot.slane %v266, 5
      %v422 = vsel %vm414, %v420, %v421
      %v423 = vrot.slane %v390, 5
      %v424 = vrot.slane %v423, 4
      %v425 = vrot.slane %v267, 5
      %v426 = vsel %vm414, %v424, %v425
      %v427 = vrot.slane %v391, 5
      %v428 = vrot.slane %v427, 4
      %v429 = vrot.slane %v268, 5
      %v430 = vsel %vm414, %v428, %v429
      %v431 = vrot.slane %v392, 5
      %v432 = vrot.slane %v431, 4
      %v433 = vrot.slane %v269, 5
      %v434 = vsel %vm414, %v432, %v433
      %v435 = vrot.slane %v393, 5
      %v436 = vrot.slane %v435, 4
      %v437 = vrot.slane %v270, 5
      %v438 = vsel %vm414, %v436, %v437
      %v439 = vrot.slane %v394, 5
      %v440 = vrot.slane %v439, 4
      %v441 = vrot.slane %v271, 5
      %v442 = vsel %vm414, %v440, %v441
      %v443 = vrot.slane %v395, 5
      %v444 = vrot.slane %v443, 4
      %v445 = vrot.slane %v272, 5
      %v446 = vsel %vm414, %v444, %v445
      %v455 = vunpack.c.l.b16 %v257
      %v456 = vunpack.c.l.b16 %v258
      %v457 = vunpack.c.l.b16 %v259
      %v458 = vunpack.c.l.b16 %v260
      %v459 = vunpack.c.l.b16 %v261
      %v460 = vunpack.c.l.b16 %v262
      %v461 = vunpack.c.l.b16 %v263
      %v462 = vunpack.c.l.b16 %v264
      %v463 = vpack.c.b16 %v456, %v455
      %v464 = vpack.c.b16 %v458, %v457
      %v465 = vpack.c.b16 %v460, %v459
      %v466 = vpack.c.b16 %v462, %v461
      %v471 = vunpack.c.l.b16 %v289
      %v472 = vunpack.c.l.b16 %v303
      %v473 = vunpack.c.l.b16 %v317
      %v474 = vunpack.c.l.b16 %v331
      %v475 = vunpack.c.l.b16 %v345
      %v476 = vunpack.c.l.b16 %v359
      %v477 = vunpack.c.l.b16 %v373
      %v478 = vunpack.c.l.b16 %v387
      %v479 = vpack.c.b16 %v472, %v471
      %v480 = vpack.c.b16 %v474, %v473
      %v481 = vpack.c.b16 %v476, %v475
      %v482 = vpack.c.b16 %v478, %v477
      %v487 = vunpack.c.l.b16 %v418
      %v488 = vunpack.c.l.b16 %v422
      %v489 = vunpack.c.l.b16 %v426
      %v490 = vunpack.c.l.b16 %v430
      %v491 = vunpack.c.l.b16 %v434
      %v492 = vunpack.c.l.b16 %v438
      %v493 = vunpack.c.l.b16 %v442
      %v494 = vunpack.c.l.b16 %v446
      %v495 = vpack.c.b16 %v488, %v487
      %v496 = vpack.c.b16 %v490, %v489
      %v497 = vpack.c.b16 %v492, %v491
      %v498 = vpack.c.b16 %v494, %v493
      %v503 = vld [vmem:[%s1] sm:$0xf]
      %v504 = vld [vmem:[%s1 + $0x4] sm:$0xf]
      %v505 = vld [vmem:[%s1 + $0x8] sm:$0xf]
      %v506 = vld [vmem:[%s1 + $0xc] sm:$0xf]
      %v507 = vld [vmem:[%s1 + $0x10] sm:$0xf]
      %v508 = vld [vmem:[%s1 + $0x14] sm:$0xf]
      %v509 = vld [vmem:[%s1 + $0x18] sm:$0xf]
      %v510 = vld [vmem:[%s1 + $0x1c] sm:$0xf]
      %v511 = vld [vmem:[%s1 + $0x20] sm:$0xf]
      %v512 = vld [vmem:[%s1 + $0x24] sm:$0xf]
      %v513 = vld [vmem:[%s1 + $0x28] sm:$0xf]
      %v514 = vld [vmem:[%s1 + $0x2c] sm:$0xf]
      %v515 = vld [vmem:[%s1 + $0x30] sm:$0xf]
      %v516 = vld [vmem:[%s1 + $0x34] sm:$0xf]
      %v517 = vld [vmem:[%s1 + $0x38] sm:$0xf]
      %v518 = vld [vmem:[%s1 + $0x3c] sm:$0xf]
      %v519 = vld [vmem:[%s1 + $0x40] sm:$0xf]
      %v520 = vld [vmem:[%s1 + $0x44] sm:$0xf]
      %v521 = vld [vmem:[%s1 + $0x48] sm:$0xf]
      %v522 = vld [vmem:[%s1 + $0x4c] sm:$0xf]
      %v523 = vld [vmem:[%s1 + $0x50] sm:$0xf]
      %v524 = vld [vmem:[%s1 + $0x54] sm:$0xf]
      %v525 = vld [vmem:[%s1 + $0x58] sm:$0xf]
      %v526 = vld [vmem:[%s1 + $0x5c] sm:$0xf]
      %v527 = vld [vmem:[%s1 + $0x60] sm:$0xf]
      %v528 = vld [vmem:[%s1 + $0x64] sm:$0xf]
      %v529 = vld [vmem:[%s1 + $0x68] sm:$0xf]
      %v530 = vld [vmem:[%s1 + $0x6c] sm:$0xf]
      %v531 = vld [vmem:[%s1 + $0x70] sm:$0xf]
      %v532 = vld [vmem:[%s1 + $0x74] sm:$0xf]
      %v533 = vld [vmem:[%s1 + $0x78] sm:$0xf]
      %v534 = vld [vmem:[%s1 + $0x7c] sm:$0xf]
      %v535 = vld [vmem:[%s1 + $0x80] sm:$0xf]
      %v536 = vld [vmem:[%s1 + $0x84] sm:$0xf]
      %v537 = vld [vmem:[%s1 + $0x88] sm:$0xf]
      %v538 = vld [vmem:[%s1 + $0x8c] sm:$0xf]
      %v539 = vld [vmem:[%s1 + $0x90] sm:$0xf]
      %v540 = vld [vmem:[%s1 + $0x94] sm:$0xf]
      %v541 = vld [vmem:[%s1 + $0x98] sm:$0xf]
      %v542 = vld [vmem:[%s1 + $0x9c] sm:$0xf]
      %v543 = vld [vmem:[%s1 + $0xa0] sm:$0xf]
      %v544 = vld [vmem:[%s1 + $0xa4] sm:$0xf]
      %v545 = vld [vmem:[%s1 + $0xa8] sm:$0xf]
      %v546 = vld [vmem:[%s1 + $0xac] sm:$0xf]
      %v547 = vld [vmem:[%s1 + $0xb0] sm:$0xf]
      %v548 = vld [vmem:[%s1 + $0xb4] sm:$0xf]
      %v549 = vld [vmem:[%s1 + $0xb8] sm:$0xf]
      %v550 = vld [vmem:[%s1 + $0xbc] sm:$0xf]
      %s551 = scalar_lea.vmem %s236, 8
      %v552 = vld [vmem:[%s551] sm:$0xf]
      %v553 = vld [vmem:[%s551 + $0x8] sm:$0xf]
      %v554 = vld [vmem:[%s551 + $0x10] sm:$0xf]
      %v555 = vld [vmem:[%s551 + $0x18] sm:$0xf]
      %v556 = vld [vmem:[%s551 + $0x20] sm:$0xf]
      %v557 = vld [vmem:[%s551 + $0x28] sm:$0xf]
      %v558 = vld [vmem:[%s551 + $0x30] sm:$0xf]
      %v559 = vld [vmem:[%s551 + $0x38] sm:$0xf]
      %v560 = vld [vmem:[%s551 + $0x4] sm:$0x1]
      %v561 = vld [vmem:[%s551 + $0xc] sm:$0x1]
      %v562 = vld [vmem:[%s551 + $0x14] sm:$0x1]
      %v563 = vld [vmem:[%s551 + $0x1c] sm:$0x1]
      %v564 = vld [vmem:[%s551 + $0x24] sm:$0x1]
      %v565 = vld [vmem:[%s551 + $0x2c] sm:$0x1]
      %v566 = vld [vmem:[%s551 + $0x34] sm:$0x1]
      %v567 = vld [vmem:[%s551 + $0x3c] sm:$0x1]
      %v569 = vshrl.u32 %v552, 16
      %v571 = vrot.slane %v569, 4
      %v572 = vshll.u32 %v552, 16
      %v574 = vrot.slane %v572, 5
      %v575 = vor.u32 %v571, %v574
      %v576 = vrot.slane %v575, 4
      %v578 = vshll.u32 %v560, 16
      %v580 = vrot.slane %v578, 5
      %v581 = vsel %vm275, %v576, %v580
      %v583 = vshrl.u32 %v553, 16
      %v585 = vrot.slane %v583, 4
      %v586 = vshll.u32 %v553, 16
      %v588 = vrot.slane %v586, 5
      %v589 = vor.u32 %v585, %v588
      %v590 = vrot.slane %v589, 4
      %v592 = vshll.u32 %v561, 16
      %v594 = vrot.slane %v592, 5
      %v595 = vsel %vm275, %v590, %v594
      %v597 = vshrl.u32 %v554, 16
      %v599 = vrot.slane %v597, 4
      %v600 = vshll.u32 %v554, 16
      %v602 = vrot.slane %v600, 5
      %v603 = vor.u32 %v599, %v602
      %v604 = vrot.slane %v603, 4
      %v606 = vshll.u32 %v562, 16
      %v608 = vrot.slane %v606, 5
      %v609 = vsel %vm275, %v604, %v608
      %v611 = vshrl.u32 %v555, 16
      %v613 = vrot.slane %v611, 4
      %v614 = vshll.u32 %v555, 16
      %v616 = vrot.slane %v614, 5
      %v617 = vor.u32 %v613, %v616
      %v618 = vrot.slane %v617, 4
      %v620 = vshll.u32 %v563, 16
      %v622 = vrot.slane %v620, 5
      %v623 = vsel %vm275, %v618, %v622
      %v625 = vshrl.u32 %v556, 16
      %v627 = vrot.slane %v625, 4
      %v628 = vshll.u32 %v556, 16
      %v630 = vrot.slane %v628, 5
      %v631 = vor.u32 %v627, %v630
      %v632 = vrot.slane %v631, 4
      %v634 = vshll.u32 %v564, 16
      %v636 = vrot.slane %v634, 5
      %v637 = vsel %vm275, %v632, %v636
      %v639 = vshrl.u32 %v557, 16
      %v641 = vrot.slane %v639, 4
      %v642 = vshll.u32 %v557, 16
      %v644 = vrot.slane %v642, 5
      %v645 = vor.u32 %v641, %v644
      %v646 = vrot.slane %v645, 4
      %v648 = vshll.u32 %v565, 16
      %v650 = vrot.slane %v648, 5
      %v651 = vsel %vm275, %v646, %v650
      %v653 = vshrl.u32 %v558, 16
      %v655 = vrot.slane %v653, 4
      %v656 = vshll.u32 %v558, 16
      %v658 = vrot.slane %v656, 5
      %v659 = vor.u32 %v655, %v658
      %v660 = vrot.slane %v659, 4
      %v662 = vshll.u32 %v566, 16
      %v664 = vrot.slane %v662, 5
      %v665 = vsel %vm275, %v660, %v664
      %v667 = vshrl.u32 %v559, 16
      %v669 = vrot.slane %v667, 4
      %v670 = vshll.u32 %v559, 16
      %v672 = vrot.slane %v670, 5
      %v673 = vor.u32 %v669, %v672
      %v674 = vrot.slane %v673, 4
      %v676 = vshll.u32 %v567, 16
      %v678 = vrot.slane %v676, 5
      %v679 = vsel %vm275, %v674, %v678
      %v680 = vld [vmem:[%s551] sm:$0xe]
      %v681 = vld [vmem:[%s551 + $0x8] sm:$0xe]
      %v682 = vld [vmem:[%s551 + $0x10] sm:$0xe]
      %v683 = vld [vmem:[%s551 + $0x18] sm:$0xe]
      %v684 = vld [vmem:[%s551 + $0x20] sm:$0xe]
      %v685 = vld [vmem:[%s551 + $0x28] sm:$0xe]
      %v686 = vld [vmem:[%s551 + $0x30] sm:$0xe]
      %v687 = vld [vmem:[%s551 + $0x38] sm:$0xe]
      %v704 = vrot.slane %v680, 5
      %v705 = vrot.slane %v704, 4
      %v706 = vrot.slane %v560, 5
      %v707 = vsel %vm414, %v705, %v706
      %v708 = vrot.slane %v681, 5
      %v709 = vrot.slane %v708, 4
      %v710 = vrot.slane %v561, 5
      %v711 = vsel %vm414, %v709, %v710
      %v712 = vrot.slane %v682, 5
      %v713 = vrot.slane %v712, 4
      %v714 = vrot.slane %v562, 5
      %v715 = vsel %vm414, %v713, %v714
      %v716 = vrot.slane %v683, 5
      %v717 = vrot.slane %v716, 4
      %v718 = vrot.slane %v563, 5
      %v719 = vsel %vm414, %v717, %v718
      %v720 = vrot.slane %v684, 5
      %v721 = vrot.slane %v720, 4
      %v722 = vrot.slane %v564, 5
      %v723 = vsel %vm414, %v721, %v722
      %v724 = vrot.slane %v685, 5
      %v725 = vrot.slane %v724, 4
      %v726 = vrot.slane %v565, 5
      %v727 = vsel %vm414, %v725, %v726
      %v728 = vrot.slane %v686, 5
      %v729 = vrot.slane %v728, 4
      %v730 = vrot.slane %v566, 5
      %v731 = vsel %vm414, %v729, %v730
      %v732 = vrot.slane %v687, 5
      %v733 = vrot.slane %v732, 4
      %v734 = vrot.slane %v567, 5
      %v735 = vsel %vm414, %v733, %v734
      %v744 = vunpack.c.l.b16 %v552
      %v745 = vunpack.c.l.b16 %v553
      %v746 = vunpack.c.l.b16 %v554
      %v747 = vunpack.c.l.b16 %v555
      %v748 = vunpack.c.l.b16 %v556
      %v749 = vunpack.c.l.b16 %v557
      %v750 = vunpack.c.l.b16 %v558
      %v751 = vunpack.c.l.b16 %v559
      %v752 = vpack.c.b16 %v745, %v744
      %v753 = vpack.c.b16 %v747, %v746
      %v754 = vpack.c.b16 %v749, %v748
      %v755 = vpack.c.b16 %v751, %v750
      %v760 = vunpack.c.l.b16 %v581
      %v761 = vunpack.c.l.b16 %v595
      %v762 = vunpack.c.l.b16 %v609
      %v763 = vunpack.c.l.b16 %v623
      %v764 = vunpack.c.l.b16 %v637
      %v765 = vunpack.c.l.b16 %v651
      %v766 = vunpack.c.l.b16 %v665
      %v767 = vunpack.c.l.b16 %v679
      %v768 = vpack.c.b16 %v761, %v760
      %v769 = vpack.c.b16 %v763, %v762
      %v770 = vpack.c.b16 %v765, %v764
      %v771 = vpack.c.b16 %v767, %v766
      %v776 = vunpack.c.l.b16 %v707
      %v777 = vunpack.c.l.b16 %v711
      %v778 = vunpack.c.l.b16 %v715
      %v779 = vunpack.c.l.b16 %v719
      %v780 = vunpack.c.l.b16 %v723
      %v781 = vunpack.c.l.b16 %v727
      %v782 = vunpack.c.l.b16 %v731
      %v783 = vunpack.c.l.b16 %v735
      %v784 = vpack.c.b16 %v777, %v776
      %v785 = vpack.c.b16 %v779, %v778
      %v786 = vpack.c.b16 %v781, %v780
      %v787 = vpack.c.b16 %v783, %v782
      %s792 = scalar_lea.vmem %s1, 192
      %v793 = vld [vmem:[%s792] sm:$0xf]
      %v794 = vld [vmem:[%s792 + $0x4] sm:$0xf]
      %v795 = vld [vmem:[%s792 + $0x8] sm:$0xf]
      %v796 = vld [vmem:[%s792 + $0xc] sm:$0xf]
      %v797 = vld [vmem:[%s792 + $0x10] sm:$0xf]
      %v798 = vld [vmem:[%s792 + $0x14] sm:$0xf]
      %v799 = vld [vmem:[%s792 + $0x18] sm:$0xf]
      %v800 = vld [vmem:[%s792 + $0x1c] sm:$0xf]
      %v801 = vld [vmem:[%s792 + $0x20] sm:$0xf]
      %v802 = vld [vmem:[%s792 + $0x24] sm:$0xf]
      %v803 = vld [vmem:[%s792 + $0x28] sm:$0xf]
      %v804 = vld [vmem:[%s792 + $0x2c] sm:$0xf]
      %v805 = vld [vmem:[%s792 + $0x30] sm:$0xf]
      %v806 = vld [vmem:[%s792 + $0x34] sm:$0xf]
      %v807 = vld [vmem:[%s792 + $0x38] sm:$0xf]
      %v808 = vld [vmem:[%s792 + $0x3c] sm:$0xf]
      %v809 = vld [vmem:[%s792 + $0x40] sm:$0xf]
      %v810 = vld [vmem:[%s792 + $0x44] sm:$0xf]
      %v811 = vld [vmem:[%s792 + $0x48] sm:$0xf]
      %v812 = vld [vmem:[%s792 + $0x4c] sm:$0xf]
      %v813 = vld [vmem:[%s792 + $0x50] sm:$0xf]
      %v814 = vld [vmem:[%s792 + $0x54] sm:$0xf]
      %v815 = vld [vmem:[%s792 + $0x58] sm:$0xf]
      %v816 = vld [vmem:[%s792 + $0x5c] sm:$0xf]
      %v817 = vld [vmem:[%s792 + $0x60] sm:$0xf]
      %v818 = vld [vmem:[%s792 + $0x64] sm:$0xf]
      %v819 = vld [vmem:[%s792 + $0x68] sm:$0xf]
      %v820 = vld [vmem:[%s792 + $0x6c] sm:$0xf]
      %v821 = vld [vmem:[%s792 + $0x70] sm:$0xf]
      %v822 = vld [vmem:[%s792 + $0x74] sm:$0xf]
      %v823 = vld [vmem:[%s792 + $0x78] sm:$0xf]
      %v824 = vld [vmem:[%s792 + $0x7c] sm:$0xf]
      %v825 = vld [vmem:[%s792 + $0x80] sm:$0xf]
      %v826 = vld [vmem:[%s792 + $0x84] sm:$0xf]
      %v827 = vld [vmem:[%s792 + $0x88] sm:$0xf]
      %v828 = vld [vmem:[%s792 + $0x8c] sm:$0xf]
      %v829 = vld [vmem:[%s792 + $0x90] sm:$0xf]
      %v830 = vld [vmem:[%s792 + $0x94] sm:$0xf]
      %v831 = vld [vmem:[%s792 + $0x98] sm:$0xf]
      %v832 = vld [vmem:[%s792 + $0x9c] sm:$0xf]
      %v833 = vld [vmem:[%s792 + $0xa0] sm:$0xf]
      %v834 = vld [vmem:[%s792 + $0xa4] sm:$0xf]
      %v835 = vld [vmem:[%s792 + $0xa8] sm:$0xf]
      %v836 = vld [vmem:[%s792 + $0xac] sm:$0xf]
      %v837 = vld [vmem:[%s792 + $0xb0] sm:$0xf]
      %v838 = vld [vmem:[%s792 + $0xb4] sm:$0xf]
      %v839 = vld [vmem:[%s792 + $0xb8] sm:$0xf]
      %v840 = vld [vmem:[%s792 + $0xbc] sm:$0xf]
      %v889 = vunpack.c.l.b16 %v793
      %v890 = vunpack.c.l.b16 %v794
      %v891 = vunpack.c.l.b16 %v795
      %v892 = vunpack.c.l.b16 %v796
      %v893 = vunpack.c.l.b16 %v797
      %v894 = vunpack.c.l.b16 %v798
      %v895 = vunpack.c.l.b16 %v799
      %v896 = vunpack.c.l.b16 %v800
      %v897 = vunpack.c.l.b16 %v801
      %v898 = vunpack.c.l.b16 %v802
      %v899 = vunpack.c.l.b16 %v803
      %v900 = vunpack.c.l.b16 %v804
      %v901 = vunpack.c.l.b16 %v805
      %v902 = vunpack.c.l.b16 %v806
      %v903 = vunpack.c.l.b16 %v807
      %v904 = vunpack.c.l.b16 %v808
      %v905 = vunpack.c.l.b16 %v809
      %v906 = vunpack.c.l.b16 %v810
      %v907 = vunpack.c.l.b16 %v811
      %v908 = vunpack.c.l.b16 %v812
      %v909 = vunpack.c.l.b16 %v813
      %v910 = vunpack.c.l.b16 %v814
      %v911 = vunpack.c.l.b16 %v815
      %v912 = vunpack.c.l.b16 %v816
      %v913 = vunpack.c.l.b16 %v817
      %v914 = vunpack.c.l.b16 %v818
      %v915 = vunpack.c.l.b16 %v819
      %v916 = vunpack.c.l.b16 %v820
      %v917 = vunpack.c.l.b16 %v821
      %v918 = vunpack.c.l.b16 %v822
      %v919 = vunpack.c.l.b16 %v823
      %v920 = vunpack.c.l.b16 %v824
      %v921 = vunpack.c.l.b16 %v825
      %v922 = vunpack.c.l.b16 %v826
      %v923 = vunpack.c.l.b16 %v827
      %v924 = vunpack.c.l.b16 %v828
      %v925 = vunpack.c.l.b16 %v829
      %v926 = vunpack.c.l.b16 %v830
      %v927 = vunpack.c.l.b16 %v831
      %v928 = vunpack.c.l.b16 %v832
      %v929 = vunpack.c.l.b16 %v833
      %v930 = vunpack.c.l.b16 %v834
      %v931 = vunpack.c.l.b16 %v835
      %v932 = vunpack.c.l.b16 %v836
      %v933 = vunpack.c.l.b16 %v837
      %v934 = vunpack.c.l.b16 %v838
      %v935 = vunpack.c.l.b16 %v839
      %v936 = vunpack.c.l.b16 %v840
      %v937 = vpack.c.b16 %v890, %v889
      %v938 = vpack.c.b16 %v892, %v891
      %v939 = vpack.c.b16 %v894, %v893
      %v940 = vpack.c.b16 %v896, %v895
      %v941 = vpack.c.b16 %v898, %v897
      %v942 = vpack.c.b16 %v900, %v899
      %v943 = vpack.c.b16 %v902, %v901
      %v944 = vpack.c.b16 %v904, %v903
      %v945 = vpack.c.b16 %v906, %v905
      %v946 = vpack.c.b16 %v908, %v907
      %v947 = vpack.c.b16 %v910, %v909
      %v948 = vpack.c.b16 %v912, %v911
      %v949 = vpack.c.b16 %v914, %v913
      %v950 = vpack.c.b16 %v916, %v915
      %v951 = vpack.c.b16 %v918, %v917
      %v952 = vpack.c.b16 %v920, %v919
      %v953 = vpack.c.b16 %v922, %v921
      %v954 = vpack.c.b16 %v924, %v923
      %v955 = vpack.c.b16 %v926, %v925
      %v956 = vpack.c.b16 %v928, %v927
      %v957 = vpack.c.b16 %v930, %v929
      %v958 = vpack.c.b16 %v932, %v931
      %v959 = vpack.c.b16 %v934, %v933
      %v960 = vpack.c.b16 %v936, %v935
      %985 = vmatpush.bf16.msra.mxu0 %v944
      %986 = vmatpush.bf16.msra.mxu0 %v943
      %987 = vmatpush.bf16.msra.mxu0 %v942
      %988 = vmatpush.bf16.msra.mxu0 %v941
      %989 = vmatpush.bf16.msra.mxu0 %v940
      %990 = vmatpush.bf16.msra.mxu0 %v939
      %991 = vmatpush.bf16.msra.mxu0 %v938
      %992 = vmatpush.bf16.msra.mxu0 %v937
      %993 = vmatmul.bf16.gmra.mxu0 %v752
      %v994 = vpop.f32.mrf.mxu0
      %v995 = vadd.f32 0.0, %v994
      %v996 = vpop.f32.mrf.mxu0
      %v997 = vadd.f32 0.0, %v996
      %998 = vmatmul.bf16.gmra.mxu0 %v753
      %v999 = vpop.f32.mrf.mxu0
      %v1000 = vadd.f32 0.0, %v999
      %v1001 = vpop.f32.mrf.mxu0
      %v1002 = vadd.f32 0.0, %v1001
      %1003 = vmatmul.bf16.gmra.mxu0 %v754
      %v1004 = vpop.f32.mrf.mxu0
      %v1005 = vadd.f32 0.0, %v1004
      %v1006 = vpop.f32.mrf.mxu0
      %v1007 = vadd.f32 0.0, %v1006
      %1008 = vmatmul.bf16.gmra.mxu0 %v755
      %v1009 = vpop.f32.mrf.mxu0
      %v1010 = vadd.f32 0.0, %v1009
      %v1011 = vpop.f32.mrf.mxu0
      %v1012 = vadd.f32 0.0, %v1011
      %1013 = vdwg.mxu0
      %1014 = vmatpush.bf16.msra.mxu0 %v952
      %1015 = vmatpush.bf16.msra.mxu0 %v951
      %1016 = vmatpush.bf16.msra.mxu0 %v950
      %1017 = vmatpush.bf16.msra.mxu0 %v949
      %1018 = vmatpush.bf16.msra.mxu0 %v948
      %1019 = vmatpush.bf16.msra.mxu0 %v947
      %1020 = vmatpush.bf16.msra.mxu0 %v946
      %1021 = vmatpush.bf16.msra.mxu0 %v945
      %1022 = vmatmul.bf16.gmra.mxu0 %v768
      %v1023 = vpop.f32.mrf.mxu0
      %v1024 = vadd.f32 %v995, %v1023
      %v1025 = vpop.f32.mrf.mxu0
      %v1026 = vadd.f32 %v997, %v1025
      %1027 = vmatmul.bf16.gmra.mxu0 %v769
      %v1028 = vpop.f32.mrf.mxu0
      %v1029 = vadd.f32 %v1000, %v1028
      %v1030 = vpop.f32.mrf.mxu0
      %v1031 = vadd.f32 %v1002, %v1030
      %1032 = vmatmul.bf16.gmra.mxu0 %v770
      %v1033 = vpop.f32.mrf.mxu0
      %v1034 = vadd.f32 %v1005, %v1033
      %v1035 = vpop.f32.mrf.mxu0
      %v1036 = vadd.f32 %v1007, %v1035
      %1037 = vmatmul.bf16.gmra.mxu0 %v771
      %v1038 = vpop.f32.mrf.mxu0
      %v1039 = vadd.f32 %v1010, %v1038
      %v1040 = vpop.f32.mrf.mxu0
      %v1041 = vadd.f32 %v1012, %v1040
      %1042 = vdwg.mxu0
      %1043 = vmatpush.bf16.msra.mxu0 %v960
      %1044 = vmatpush.bf16.msra.mxu0 %v959
      %1045 = vmatpush.bf16.msra.mxu0 %v958
      %1046 = vmatpush.bf16.msra.mxu0 %v957
      %1047 = vmatpush.bf16.msra.mxu0 %v956
      %1048 = vmatpush.bf16.msra.mxu0 %v955
      %1049 = vmatpush.bf16.msra.mxu0 %v954
      %1050 = vmatpush.bf16.msra.mxu0 %v953
      %1051 = vmatmul.bf16.gmra.mxu0 %v784
      %v1052 = vpop.f32.mrf.mxu0
      %v1053 = vadd.f32 %v1024, %v1052
      %v1054 = vpop.f32.mrf.mxu0
      %v1055 = vadd.f32 %v1026, %v1054
      %1056 = vmatmul.bf16.gmra.mxu0 %v785
      %v1057 = vpop.f32.mrf.mxu0
      %v1058 = vadd.f32 %v1029, %v1057
      %v1059 = vpop.f32.mrf.mxu0
      %v1060 = vadd.f32 %v1031, %v1059
      %1061 = vmatmul.bf16.gmra.mxu0 %v786
      %v1062 = vpop.f32.mrf.mxu0
      %v1063 = vadd.f32 %v1034, %v1062
      %v1064 = vpop.f32.mrf.mxu0
      %v1065 = vadd.f32 %v1036, %v1064
      %1066 = vmatmul.bf16.gmra.mxu0 %v787
      %v1067 = vpop.f32.mrf.mxu0
      %v1068 = vadd.f32 %v1039, %v1067
      %v1069 = vpop.f32.mrf.mxu0
      %v1070 = vadd.f32 %v1041, %v1069
      %1071 = vdwg.mxu0
      %v1120 = vunpack.c.l.b16 %v503
      %v1121 = vunpack.c.l.b16 %v504
      %v1122 = vunpack.c.l.b16 %v505
      %v1123 = vunpack.c.l.b16 %v506
      %v1124 = vunpack.c.l.b16 %v507
      %v1125 = vunpack.c.l.b16 %v508
      %v1126 = vunpack.c.l.b16 %v509
      %v1127 = vunpack.c.l.b16 %v510
      %v1128 = vunpack.c.l.b16 %v511
      %v1129 = vunpack.c.l.b16 %v512
      %v1130 = vunpack.c.l.b16 %v513
      %v1131 = vunpack.c.l.b16 %v514
      %v1132 = vunpack.c.l.b16 %v515
      %v1133 = vunpack.c.l.b16 %v516
      %v1134 = vunpack.c.l.b16 %v517
      %v1135 = vunpack.c.l.b16 %v518
      %v1136 = vunpack.c.l.b16 %v519
      %v1137 = vunpack.c.l.b16 %v520
      %v1138 = vunpack.c.l.b16 %v521
      %v1139 = vunpack.c.l.b16 %v522
      %v1140 = vunpack.c.l.b16 %v523
      %v1141 = vunpack.c.l.b16 %v524
      %v1142 = vunpack.c.l.b16 %v525
      %v1143 = vunpack.c.l.b16 %v526
      %v1144 = vunpack.c.l.b16 %v527
      %v1145 = vunpack.c.l.b16 %v528
      %v1146 = vunpack.c.l.b16 %v529
      %v1147 = vunpack.c.l.b16 %v530
      %v1148 = vunpack.c.l.b16 %v531
      %v1149 = vunpack.c.l.b16 %v532
      %v1150 = vunpack.c.l.b16 %v533
      %v1151 = vunpack.c.l.b16 %v534
      %v1152 = vunpack.c.l.b16 %v535
      %v1153 = vunpack.c.l.b16 %v536
      %v1154 = vunpack.c.l.b16 %v537
      %v1155 = vunpack.c.l.b16 %v538
      %v1156 = vunpack.c.l.b16 %v539
      %v1157 = vunpack.c.l.b16 %v540
      %v1158 = vunpack.c.l.b16 %v541
      %v1159 = vunpack.c.l.b16 %v542
      %v1160 = vunpack.c.l.b16 %v543
      %v1161 = vunpack.c.l.b16 %v544
      %v1162 = vunpack.c.l.b16 %v545
      %v1163 = vunpack.c.l.b16 %v546
      %v1164 = vunpack.c.l.b16 %v547
      %v1165 = vunpack.c.l.b16 %v548
      %v1166 = vunpack.c.l.b16 %v549
      %v1167 = vunpack.c.l.b16 %v550
      %v1168 = vpack.c.b16 %v1121, %v1120
      %v1169 = vpack.c.b16 %v1123, %v1122
      %v1170 = vpack.c.b16 %v1125, %v1124
      %v1171 = vpack.c.b16 %v1127, %v1126
      %v1172 = vpack.c.b16 %v1129, %v1128
      %v1173 = vpack.c.b16 %v1131, %v1130
      %v1174 = vpack.c.b16 %v1133, %v1132
      %v1175 = vpack.c.b16 %v1135, %v1134
      %v1176 = vpack.c.b16 %v1137, %v1136
      %v1177 = vpack.c.b16 %v1139, %v1138
      %v1178 = vpack.c.b16 %v1141, %v1140
      %v1179 = vpack.c.b16 %v1143, %v1142
      %v1180 = vpack.c.b16 %v1145, %v1144
      %v1181 = vpack.c.b16 %v1147, %v1146
      %v1182 = vpack.c.b16 %v1149, %v1148
      %v1183 = vpack.c.b16 %v1151, %v1150
      %v1184 = vpack.c.b16 %v1153, %v1152
      %v1185 = vpack.c.b16 %v1155, %v1154
      %v1186 = vpack.c.b16 %v1157, %v1156
      %v1187 = vpack.c.b16 %v1159, %v1158
      %v1188 = vpack.c.b16 %v1161, %v1160
      %v1189 = vpack.c.b16 %v1163, %v1162
      %v1190 = vpack.c.b16 %v1165, %v1164
      %v1191 = vpack.c.b16 %v1167, %v1166
      %1216 = vmatpush.bf16.msra.mxu0 %v1175
      %1217 = vmatpush.bf16.msra.mxu0 %v1174
      %1218 = vmatpush.bf16.msra.mxu0 %v1173
      %1219 = vmatpush.bf16.msra.mxu0 %v1172
      %1220 = vmatpush.bf16.msra.mxu0 %v1171
      %1221 = vmatpush.bf16.msra.mxu0 %v1170
      %1222 = vmatpush.bf16.msra.mxu0 %v1169
      %1223 = vmatpush.bf16.msra.mxu0 %v1168
      %1224 = vmatmul.bf16.gmra.mxu0 %v463
      %v1225 = vpop.f32.mrf.mxu0
      %v1226 = vadd.f32 %v1053, %v1225
      %v1227 = vpop.f32.mrf.mxu0
      %v1228 = vadd.f32 %v1055, %v1227
      %1229 = vmatmul.bf16.gmra.mxu0 %v464
      %v1230 = vpop.f32.mrf.mxu0
      %v1231 = vadd.f32 %v1058, %v1230
      %v1232 = vpop.f32.mrf.mxu0
      %v1233 = vadd.f32 %v1060, %v1232
      %1234 = vmatmul.bf16.gmra.mxu0 %v465
      %v1235 = vpop.f32.mrf.mxu0
      %v1236 = vadd.f32 %v1063, %v1235
      %v1237 = vpop.f32.mrf.mxu0
      %v1238 = vadd.f32 %v1065, %v1237
      %1239 = vmatmul.bf16.gmra.mxu0 %v466
      %v1240 = vpop.f32.mrf.mxu0
      %v1241 = vadd.f32 %v1068, %v1240
      %v1242 = vpop.f32.mrf.mxu0
      %v1243 = vadd.f32 %v1070, %v1242
      %1244 = vdwg.mxu0
      %1245 = vmatpush.bf16.msra.mxu0 %v1183
      %1246 = vmatpush.bf16.msra.mxu0 %v1182
      %1247 = vmatpush.bf16.msra.mxu0 %v1181
      %1248 = vmatpush.bf16.msra.mxu0 %v1180
      %1249 = vmatpush.bf16.msra.mxu0 %v1179
      %1250 = vmatpush.bf16.msra.mxu0 %v1178
      %1251 = vmatpush.bf16.msra.mxu0 %v1177
      %1252 = vmatpush.bf16.msra.mxu0 %v1176
      %1253 = vmatmul.bf16.gmra.mxu0 %v479
      %v1254 = vpop.f32.mrf.mxu0
      %v1255 = vadd.f32 %v1226, %v1254
      %v1256 = vpop.f32.mrf.mxu0
      %v1257 = vadd.f32 %v1228, %v1256
      %1258 = vmatmul.bf16.gmra.mxu0 %v480
      %v1259 = vpop.f32.mrf.mxu0
      %v1260 = vadd.f32 %v1231, %v1259
      %v1261 = vpop.f32.mrf.mxu0
      %v1262 = vadd.f32 %v1233, %v1261
      %1263 = vmatmul.bf16.gmra.mxu0 %v481
      %v1264 = vpop.f32.mrf.mxu0
      %v1265 = vadd.f32 %v1236, %v1264
      %v1266 = vpop.f32.mrf.mxu0
      %v1267 = vadd.f32 %v1238, %v1266
      %1268 = vmatmul.bf16.gmra.mxu0 %v482
      %v1269 = vpop.f32.mrf.mxu0
      %v1270 = vadd.f32 %v1241, %v1269
      %v1271 = vpop.f32.mrf.mxu0
      %v1272 = vadd.f32 %v1243, %v1271
      %1273 = vdwg.mxu0
      %1274 = vmatpush.bf16.msra.mxu0 %v1191
      %1275 = vmatpush.bf16.msra.mxu0 %v1190
      %1276 = vmatpush.bf16.msra.mxu0 %v1189
      %1277 = vmatpush.bf16.msra.mxu0 %v1188
      %1278 = vmatpush.bf16.msra.mxu0 %v1187
      %1279 = vmatpush.bf16.msra.mxu0 %v1186
      %1280 = vmatpush.bf16.msra.mxu0 %v1185
      %1281 = vmatpush.bf16.msra.mxu0 %v1184
      %1282 = vmatmul.bf16.gmra.mxu0 %v495
      %v1283 = vpop.f32.mrf.mxu0
      %v1284 = vadd.f32 %v1255, %v1283
      %v1285 = vpop.f32.mrf.mxu0
      %v1286 = vadd.f32 %v1257, %v1285
      %1287 = vmatmul.bf16.gmra.mxu0 %v496
      %v1288 = vpop.f32.mrf.mxu0
      %v1289 = vadd.f32 %v1260, %v1288
      %v1290 = vpop.f32.mrf.mxu0
      %v1291 = vadd.f32 %v1262, %v1290
      %1292 = vmatmul.bf16.gmra.mxu0 %v497
      %v1293 = vpop.f32.mrf.mxu0
      %v1294 = vadd.f32 %v1265, %v1293
      %v1295 = vpop.f32.mrf.mxu0
      %v1296 = vadd.f32 %v1267, %v1295
      %1297 = vmatmul.bf16.gmra.mxu0 %v498
      %v1298 = vpop.f32.mrf.mxu0
      %v1299 = vadd.f32 %v1270, %v1298
      %v1300 = vpop.f32.mrf.mxu0
      %v1301 = vadd.f32 %v1272, %v1300
      %1302 = vdwg.mxu0
      %s1303 = scalar_lea.vmem %s236, 16
      %v1304 = vld [vmem:[%s1303] sm:$0xf]
      %v1305 = vld [vmem:[%s1303 + $0x8] sm:$0xf]
      %v1306 = vld [vmem:[%s1303 + $0x10] sm:$0xf]
      %v1307 = vld [vmem:[%s1303 + $0x18] sm:$0xf]
      %v1308 = vld [vmem:[%s1303 + $0x20] sm:$0xf]
      %v1309 = vld [vmem:[%s1303 + $0x28] sm:$0xf]
      %v1310 = vld [vmem:[%s1303 + $0x30] sm:$0xf]
      %v1311 = vld [vmem:[%s1303 + $0x38] sm:$0xf]
      %v1312 = vld [vmem:[%s1303 + $0x4] sm:$0x1]
      %v1313 = vld [vmem:[%s1303 + $0xc] sm:$0x1]
      %v1314 = vld [vmem:[%s1303 + $0x14] sm:$0x1]
      %v1315 = vld [vmem:[%s1303 + $0x1c] sm:$0x1]
      %v1316 = vld [vmem:[%s1303 + $0x24] sm:$0x1]
      %v1317 = vld [vmem:[%s1303 + $0x2c] sm:$0x1]
      %v1318 = vld [vmem:[%s1303 + $0x34] sm:$0x1]
      %v1319 = vld [vmem:[%s1303 + $0x3c] sm:$0x1]
      %v1321 = vshrl.u32 %v1304, 16
      %v1323 = vrot.slane %v1321, 4
      %v1324 = vshll.u32 %v1304, 16
      %v1326 = vrot.slane %v1324, 5
      %v1327 = vor.u32 %v1323, %v1326
      %v1328 = vrot.slane %v1327, 4
      %v1330 = vshll.u32 %v1312, 16
      %v1332 = vrot.slane %v1330, 5
      %v1333 = vsel %vm275, %v1328, %v1332
      %v1335 = vshrl.u32 %v1305, 16
      %v1337 = vrot.slane %v1335, 4
      %v1338 = vshll.u32 %v1305, 16
      %v1340 = vrot.slane %v1338, 5
      %v1341 = vor.u32 %v1337, %v1340
      %v1342 = vrot.slane %v1341, 4
      %v1344 = vshll.u32 %v1313, 16
      %v1346 = vrot.slane %v1344, 5
      %v1347 = vsel %vm275, %v1342, %v1346
      %v1349 = vshrl.u32 %v1306, 16
      %v1351 = vrot.slane %v1349, 4
      %v1352 = vshll.u32 %v1306, 16
      %v1354 = vrot.slane %v1352, 5
      %v1355 = vor.u32 %v1351, %v1354
      %v1356 = vrot.slane %v1355, 4
      %v1358 = vshll.u32 %v1314, 16
      %v1360 = vrot.slane %v1358, 5
      %v1361 = vsel %vm275, %v1356, %v1360
      %v1363 = vshrl.u32 %v1307, 16
      %v1365 = vrot.slane %v1363, 4
      %v1366 = vshll.u32 %v1307, 16
      %v1368 = vrot.slane %v1366, 5
      %v1369 = vor.u32 %v1365, %v1368
      %v1370 = vrot.slane %v1369, 4
      %v1372 = vshll.u32 %v1315, 16
      %v1374 = vrot.slane %v1372, 5
      %v1375 = vsel %vm275, %v1370, %v1374
      %v1377 = vshrl.u32 %v1308, 16
      %v1379 = vrot.slane %v1377, 4
      %v1380 = vshll.u32 %v1308, 16
      %v1382 = vrot.slane %v1380, 5
      %v1383 = vor.u32 %v1379, %v1382
      %v1384 = vrot.slane %v1383, 4
      %v1386 = vshll.u32 %v1316, 16
      %v1388 = vrot.slane %v1386, 5
      %v1389 = vsel %vm275, %v1384, %v1388
      %v1391 = vshrl.u32 %v1309, 16
      %v1393 = vrot.slane %v1391, 4
      %v1394 = vshll.u32 %v1309, 16
      %v1396 = vrot.slane %v1394, 5
      %v1397 = vor.u32 %v1393, %v1396
      %v1398 = vrot.slane %v1397, 4
      %v1400 = vshll.u32 %v1317, 16
      %v1402 = vrot.slane %v1400, 5
      %v1403 = vsel %vm275, %v1398, %v1402
      %v1405 = vshrl.u32 %v1310, 16
      %v1407 = vrot.slane %v1405, 4
      %v1408 = vshll.u32 %v1310, 16
      %v1410 = vrot.slane %v1408, 5
      %v1411 = vor.u32 %v1407, %v1410
      %v1412 = vrot.slane %v1411, 4
      %v1414 = vshll.u32 %v1318, 16
      %v1416 = vrot.slane %v1414, 5
      %v1417 = vsel %vm275, %v1412, %v1416
      %v1419 = vshrl.u32 %v1311, 16
      %v1421 = vrot.slane %v1419, 4
      %v1422 = vshll.u32 %v1311, 16
      %v1424 = vrot.slane %v1422, 5
      %v1425 = vor.u32 %v1421, %v1424
      %v1426 = vrot.slane %v1425, 4
      %v1428 = vshll.u32 %v1319, 16
      %v1430 = vrot.slane %v1428, 5
      %v1431 = vsel %vm275, %v1426, %v1430
      %v1432 = vld [vmem:[%s1303] sm:$0xe]
      %v1433 = vld [vmem:[%s1303 + $0x8] sm:$0xe]
      %v1434 = vld [vmem:[%s1303 + $0x10] sm:$0xe]
      %v1435 = vld [vmem:[%s1303 + $0x18] sm:$0xe]
      %v1436 = vld [vmem:[%s1303 + $0x20] sm:$0xe]
      %v1437 = vld [vmem:[%s1303 + $0x28] sm:$0xe]
      %v1438 = vld [vmem:[%s1303 + $0x30] sm:$0xe]
      %v1439 = vld [vmem:[%s1303 + $0x38] sm:$0xe]
      %v1456 = vrot.slane %v1432, 5
      %v1457 = vrot.slane %v1456, 4
      %v1458 = vrot.slane %v1312, 5
      %v1459 = vsel %vm414, %v1457, %v1458
      %v1460 = vrot.slane %v1433, 5
      %v1461 = vrot.slane %v1460, 4
      %v1462 = vrot.slane %v1313, 5
      %v1463 = vsel %vm414, %v1461, %v1462
      %v1464 = vrot.slane %v1434, 5
      %v1465 = vrot.slane %v1464, 4
      %v1466 = vrot.slane %v1314, 5
      %v1467 = vsel %vm414, %v1465, %v1466
      %v1468 = vrot.slane %v1435, 5
      %v1469 = vrot.slane %v1468, 4
      %v1470 = vrot.slane %v1315, 5
      %v1471 = vsel %vm414, %v1469, %v1470
      %v1472 = vrot.slane %v1436, 5
      %v1473 = vrot.slane %v1472, 4
      %v1474 = vrot.slane %v1316, 5
      %v1475 = vsel %vm414, %v1473, %v1474
      %v1476 = vrot.slane %v1437, 5
      %v1477 = vrot.slane %v1476, 4
      %v1478 = vrot.slane %v1317, 5
      %v1479 = vsel %vm414, %v1477, %v1478
      %v1480 = vrot.slane %v1438, 5
      %v1481 = vrot.slane %v1480, 4
      %v1482 = vrot.slane %v1318, 5
      %v1483 = vsel %vm414, %v1481, %v1482
      %v1484 = vrot.slane %v1439, 5
      %v1485 = vrot.slane %v1484, 4
      %v1486 = vrot.slane %v1319, 5
      %v1487 = vsel %vm414, %v1485, %v1486
      %v1496 = vunpack.c.l.b16 %v1304
      %v1497 = vunpack.c.l.b16 %v1305
      %v1498 = vunpack.c.l.b16 %v1306
      %v1499 = vunpack.c.l.b16 %v1307
      %v1500 = vunpack.c.l.b16 %v1308
      %v1501 = vunpack.c.l.b16 %v1309
      %v1502 = vunpack.c.l.b16 %v1310
      %v1503 = vunpack.c.l.b16 %v1311
      %v1504 = vpack.c.b16 %v1497, %v1496
      %v1505 = vpack.c.b16 %v1499, %v1498
      %v1506 = vpack.c.b16 %v1501, %v1500
      %v1507 = vpack.c.b16 %v1503, %v1502
      %v1512 = vunpack.c.l.b16 %v1333
      %v1513 = vunpack.c.l.b16 %v1347
      %v1514 = vunpack.c.l.b16 %v1361
      %v1515 = vunpack.c.l.b16 %v1375
      %v1516 = vunpack.c.l.b16 %v1389
      %v1517 = vunpack.c.l.b16 %v1403
      %v1518 = vunpack.c.l.b16 %v1417
      %v1519 = vunpack.c.l.b16 %v1431
      %v1520 = vpack.c.b16 %v1513, %v1512
      %v1521 = vpack.c.b16 %v1515, %v1514
      %v1522 = vpack.c.b16 %v1517, %v1516
      %v1523 = vpack.c.b16 %v1519, %v1518
      %v1528 = vunpack.c.l.b16 %v1459
      %v1529 = vunpack.c.l.b16 %v1463
      %v1530 = vunpack.c.l.b16 %v1467
      %v1531 = vunpack.c.l.b16 %v1471
      %v1532 = vunpack.c.l.b16 %v1475
      %v1533 = vunpack.c.l.b16 %v1479
      %v1534 = vunpack.c.l.b16 %v1483
      %v1535 = vunpack.c.l.b16 %v1487
      %v1536 = vpack.c.b16 %v1529, %v1528
      %v1537 = vpack.c.b16 %v1531, %v1530
      %v1538 = vpack.c.b16 %v1533, %v1532
      %v1539 = vpack.c.b16 %v1535, %v1534
      %s1544 = scalar_lea.vmem %s1, 384
      %v1545 = vld [vmem:[%s1544] sm:$0xf]
      %v1546 = vld [vmem:[%s1544 + $0x4] sm:$0xf]
      %v1547 = vld [vmem:[%s1544 + $0x8] sm:$0xf]
      %v1548 = vld [vmem:[%s1544 + $0xc] sm:$0xf]
      %v1549 = vld [vmem:[%s1544 + $0x10] sm:$0xf]
      %v1550 = vld [vmem:[%s1544 + $0x14] sm:$0xf]
      %v1551 = vld [vmem:[%s1544 + $0x18] sm:$0xf]
      %v1552 = vld [vmem:[%s1544 + $0x1c] sm:$0xf]
      %v1553 = vld [vmem:[%s1544 + $0x20] sm:$0xf]
      %v1554 = vld [vmem:[%s1544 + $0x24] sm:$0xf]
      %v1555 = vld [vmem:[%s1544 + $0x28] sm:$0xf]
      %v1556 = vld [vmem:[%s1544 + $0x2c] sm:$0xf]
      %v1557 = vld [vmem:[%s1544 + $0x30] sm:$0xf]
      %v1558 = vld [vmem:[%s1544 + $0x34] sm:$0xf]
      %v1559 = vld [vmem:[%s1544 + $0x38] sm:$0xf]
      %v1560 = vld [vmem:[%s1544 + $0x3c] sm:$0xf]
      %v1561 = vld [vmem:[%s1544 + $0x40] sm:$0xf]
      %v1562 = vld [vmem:[%s1544 + $0x44] sm:$0xf]
      %v1563 = vld [vmem:[%s1544 + $0x48] sm:$0xf]
      %v1564 = vld [vmem:[%s1544 + $0x4c] sm:$0xf]
      %v1565 = vld [vmem:[%s1544 + $0x50] sm:$0xf]
      %v1566 = vld [vmem:[%s1544 + $0x54] sm:$0xf]
      %v1567 = vld [vmem:[%s1544 + $0x58] sm:$0xf]
      %v1568 = vld [vmem:[%s1544 + $0x5c] sm:$0xf]
      %v1569 = vld [vmem:[%s1544 + $0x60] sm:$0xf]
      %v1570 = vld [vmem:[%s1544 + $0x64] sm:$0xf]
      %v1571 = vld [vmem:[%s1544 + $0x68] sm:$0xf]
      %v1572 = vld [vmem:[%s1544 + $0x6c] sm:$0xf]
      %v1573 = vld [vmem:[%s1544 + $0x70] sm:$0xf]
      %v1574 = vld [vmem:[%s1544 + $0x74] sm:$0xf]
      %v1575 = vld [vmem:[%s1544 + $0x78] sm:$0xf]
      %v1576 = vld [vmem:[%s1544 + $0x7c] sm:$0xf]
      %v1577 = vld [vmem:[%s1544 + $0x80] sm:$0xf]
      %v1578 = vld [vmem:[%s1544 + $0x84] sm:$0xf]
      %v1579 = vld [vmem:[%s1544 + $0x88] sm:$0xf]
      %v1580 = vld [vmem:[%s1544 + $0x8c] sm:$0xf]
      %v1581 = vld [vmem:[%s1544 + $0x90] sm:$0xf]
      %v1582 = vld [vmem:[%s1544 + $0x94] sm:$0xf]
      %v1583 = vld [vmem:[%s1544 + $0x98] sm:$0xf]
      %v1584 = vld [vmem:[%s1544 + $0x9c] sm:$0xf]
      %v1585 = vld [vmem:[%s1544 + $0xa0] sm:$0xf]
      %v1586 = vld [vmem:[%s1544 + $0xa4] sm:$0xf]
      %v1587 = vld [vmem:[%s1544 + $0xa8] sm:$0xf]
      %v1588 = vld [vmem:[%s1544 + $0xac] sm:$0xf]
      %v1589 = vld [vmem:[%s1544 + $0xb0] sm:$0xf]
      %v1590 = vld [vmem:[%s1544 + $0xb4] sm:$0xf]
      %v1591 = vld [vmem:[%s1544 + $0xb8] sm:$0xf]
      %v1592 = vld [vmem:[%s1544 + $0xbc] sm:$0xf]
      %v1641 = vunpack.c.l.b16 %v1545
      %v1642 = vunpack.c.l.b16 %v1546
      %v1643 = vunpack.c.l.b16 %v1547
      %v1644 = vunpack.c.l.b16 %v1548
      %v1645 = vunpack.c.l.b16 %v1549
      %v1646 = vunpack.c.l.b16 %v1550
      %v1647 = vunpack.c.l.b16 %v1551
      %v1648 = vunpack.c.l.b16 %v1552
      %v1649 = vunpack.c.l.b16 %v1553
      %v1650 = vunpack.c.l.b16 %v1554
      %v1651 = vunpack.c.l.b16 %v1555
      %v1652 = vunpack.c.l.b16 %v1556
      %v1653 = vunpack.c.l.b16 %v1557
      %v1654 = vunpack.c.l.b16 %v1558
      %v1655 = vunpack.c.l.b16 %v1559
      %v1656 = vunpack.c.l.b16 %v1560
      %v1657 = vunpack.c.l.b16 %v1561
      %v1658 = vunpack.c.l.b16 %v1562
      %v1659 = vunpack.c.l.b16 %v1563
      %v1660 = vunpack.c.l.b16 %v1564
      %v1661 = vunpack.c.l.b16 %v1565
      %v1662 = vunpack.c.l.b16 %v1566
      %v1663 = vunpack.c.l.b16 %v1567
      %v1664 = vunpack.c.l.b16 %v1568
      %v1665 = vunpack.c.l.b16 %v1569
      %v1666 = vunpack.c.l.b16 %v1570
      %v1667 = vunpack.c.l.b16 %v1571
      %v1668 = vunpack.c.l.b16 %v1572
      %v1669 = vunpack.c.l.b16 %v1573
      %v1670 = vunpack.c.l.b16 %v1574
      %v1671 = vunpack.c.l.b16 %v1575
      %v1672 = vunpack.c.l.b16 %v1576
      %v1673 = vunpack.c.l.b16 %v1577
      %v1674 = vunpack.c.l.b16 %v1578
      %v1675 = vunpack.c.l.b16 %v1579
      %v1676 = vunpack.c.l.b16 %v1580
      %v1677 = vunpack.c.l.b16 %v1581
      %v1678 = vunpack.c.l.b16 %v1582
      %v1679 = vunpack.c.l.b16 %v1583
      %v1680 = vunpack.c.l.b16 %v1584
      %v1681 = vunpack.c.l.b16 %v1585
      %v1682 = vunpack.c.l.b16 %v1586
      %v1683 = vunpack.c.l.b16 %v1587
      %v1684 = vunpack.c.l.b16 %v1588
      %v1685 = vunpack.c.l.b16 %v1589
      %v1686 = vunpack.c.l.b16 %v1590
      %v1687 = vunpack.c.l.b16 %v1591
      %v1688 = vunpack.c.l.b16 %v1592
      %v1689 = vpack.c.b16 %v1642, %v1641
      %v1690 = vpack.c.b16 %v1644, %v1643
      %v1691 = vpack.c.b16 %v1646, %v1645
      %v1692 = vpack.c.b16 %v1648, %v1647
      %v1693 = vpack.c.b16 %v1650, %v1649
      %v1694 = vpack.c.b16 %v1652, %v1651
      %v1695 = vpack.c.b16 %v1654, %v1653
      %v1696 = vpack.c.b16 %v1656, %v1655
      %v1697 = vpack.c.b16 %v1658, %v1657
      %v1698 = vpack.c.b16 %v1660, %v1659
      %v1699 = vpack.c.b16 %v1662, %v1661
      %v1700 = vpack.c.b16 %v1664, %v1663
      %v1701 = vpack.c.b16 %v1666, %v1665
      %v1702 = vpack.c.b16 %v1668, %v1667
      %v1703 = vpack.c.b16 %v1670, %v1669
      %v1704 = vpack.c.b16 %v1672, %v1671
      %v1705 = vpack.c.b16 %v1674, %v1673
      %v1706 = vpack.c.b16 %v1676, %v1675
      %v1707 = vpack.c.b16 %v1678, %v1677
      %v1708 = vpack.c.b16 %v1680, %v1679
      %v1709 = vpack.c.b16 %v1682, %v1681
      %v1710 = vpack.c.b16 %v1684, %v1683
      %v1711 = vpack.c.b16 %v1686, %v1685
      %v1712 = vpack.c.b16 %v1688, %v1687
      %1737 = vmatpush.bf16.msra.mxu0 %v1696
      %1738 = vmatpush.bf16.msra.mxu0 %v1695
      %1739 = vmatpush.bf16.msra.mxu0 %v1694
      %1740 = vmatpush.bf16.msra.mxu0 %v1693
      %1741 = vmatpush.bf16.msra.mxu0 %v1692
      %1742 = vmatpush.bf16.msra.mxu0 %v1691
      %1743 = vmatpush.bf16.msra.mxu0 %v1690
      %1744 = vmatpush.bf16.msra.mxu0 %v1689
      %1745 = vmatmul.bf16.gmra.mxu0 %v1504
      %v1746 = vpop.f32.mrf.mxu0
      %v1747 = vadd.f32 0.0, %v1746
      %v1748 = vpop.f32.mrf.mxu0
      %v1749 = vadd.f32 0.0, %v1748
      %1750 = vmatmul.bf16.gmra.mxu0 %v1505
      %v1751 = vpop.f32.mrf.mxu0
      %v1752 = vadd.f32 0.0, %v1751
      %v1753 = vpop.f32.mrf.mxu0
      %v1754 = vadd.f32 0.0, %v1753
      %1755 = vmatmul.bf16.gmra.mxu0 %v1506
      %v1756 = vpop.f32.mrf.mxu0
      %v1757 = vadd.f32 0.0, %v1756
      %v1758 = vpop.f32.mrf.mxu0
      %v1759 = vadd.f32 0.0, %v1758
      %1760 = vmatmul.bf16.gmra.mxu0 %v1507
      %v1761 = vpop.f32.mrf.mxu0
      %v1762 = vadd.f32 0.0, %v1761
      %v1763 = vpop.f32.mrf.mxu0
      %v1764 = vadd.f32 0.0, %v1763
      %1765 = vdwg.mxu0
      %1766 = vmatpush.bf16.msra.mxu0 %v1704
      %1767 = vmatpush.bf16.msra.mxu0 %v1703
      %1768 = vmatpush.bf16.msra.mxu0 %v1702
      %1769 = vmatpush.bf16.msra.mxu0 %v1701
      %1770 = vmatpush.bf16.msra.mxu0 %v1700
      %1771 = vmatpush.bf16.msra.mxu0 %v1699
      %1772 = vmatpush.bf16.msra.mxu0 %v1698
      %1773 = vmatpush.bf16.msra.mxu0 %v1697
      %1774 = vmatmul.bf16.gmra.mxu0 %v1520
      %v1775 = vpop.f32.mrf.mxu0
      %v1776 = vadd.f32 %v1747, %v1775
      %v1777 = vpop.f32.mrf.mxu0
      %v1778 = vadd.f32 %v1749, %v1777
      %1779 = vmatmul.bf16.gmra.mxu0 %v1521
      %v1780 = vpop.f32.mrf.mxu0
      %v1781 = vadd.f32 %v1752, %v1780
      %v1782 = vpop.f32.mrf.mxu0
      %v1783 = vadd.f32 %v1754, %v1782
      %1784 = vmatmul.bf16.gmra.mxu0 %v1522
      %v1785 = vpop.f32.mrf.mxu0
      %v1786 = vadd.f32 %v1757, %v1785
      %v1787 = vpop.f32.mrf.mxu0
      %v1788 = vadd.f32 %v1759, %v1787
      %1789 = vmatmul.bf16.gmra.mxu0 %v1523
      %v1790 = vpop.f32.mrf.mxu0
      %v1791 = vadd.f32 %v1762, %v1790
      %v1792 = vpop.f32.mrf.mxu0
      %v1793 = vadd.f32 %v1764, %v1792
      %1794 = vdwg.mxu0
      %1795 = vmatpush.bf16.msra.mxu0 %v1712
      %1796 = vmatpush.bf16.msra.mxu0 %v1711
      %1797 = vmatpush.bf16.msra.mxu0 %v1710
      %1798 = vmatpush.bf16.msra.mxu0 %v1709
      %1799 = vmatpush.bf16.msra.mxu0 %v1708
      %1800 = vmatpush.bf16.msra.mxu0 %v1707
      %1801 = vmatpush.bf16.msra.mxu0 %v1706
      %1802 = vmatpush.bf16.msra.mxu0 %v1705
      %1803 = vmatmul.bf16.gmra.mxu0 %v1536
      %v1804 = vpop.f32.mrf.mxu0
      %v1805 = vadd.f32 %v1776, %v1804
      %v1806 = vpop.f32.mrf.mxu0
      %v1807 = vadd.f32 %v1778, %v1806
      %1808 = vmatmul.bf16.gmra.mxu0 %v1537
      %v1809 = vpop.f32.mrf.mxu0
      %v1810 = vadd.f32 %v1781, %v1809
      %v1811 = vpop.f32.mrf.mxu0
      %v1812 = vadd.f32 %v1783, %v1811
      %1813 = vmatmul.bf16.gmra.mxu0 %v1538
      %v1814 = vpop.f32.mrf.mxu0
      %v1815 = vadd.f32 %v1786, %v1814
      %v1816 = vpop.f32.mrf.mxu0
      %v1817 = vadd.f32 %v1788, %v1816
      %1818 = vmatmul.bf16.gmra.mxu0 %v1539
      %v1819 = vpop.f32.mrf.mxu0
      %v1820 = vadd.f32 %v1791, %v1819
      %v1821 = vpop.f32.mrf.mxu0
      %v1822 = vadd.f32 %v1793, %v1821
      %1823 = vdwg.mxu0
      %v1824 = vadd.f32 %v1284, %v1805
      %v1825 = vadd.f32 %v1286, %v1807
      %v1826 = vadd.f32 %v1289, %v1810
      %v1827 = vadd.f32 %v1291, %v1812
      %v1828 = vadd.f32 %v1294, %v1815
      %v1829 = vadd.f32 %v1296, %v1817
      %v1830 = vadd.f32 %v1299, %v1820
      %v1831 = vadd.f32 %v1301, %v1822
      %v1832 = vld [vmem:[%s2] sm:$0x1]
      %v1834 = vperm.slane %v1832, 0
      %v1836 = vadd.f32 %v1824, %v1834
      %v1837 = vadd.f32 %v1825, %v1834
      %v1838 = vadd.f32 %v1826, %v1834
      %v1839 = vadd.f32 %v1827, %v1834
      %v1840 = vadd.f32 %v1828, %v1834
      %v1841 = vadd.f32 %v1829, %v1834
      %v1842 = vadd.f32 %v1830, %v1834
      %v1843 = vadd.f32 %v1831, %v1834
      %v1844 = vld [vmem:[%s245] sm:$0xf]
      %v1845 = vld [vmem:[%s245 + $0x4] sm:$0xf]
      %v1846 = vld [vmem:[%s245 + $0x8] sm:$0xf]
      %v1847 = vld [vmem:[%s245 + $0xc] sm:$0xf]
      %v1848 = vld [vmem:[%s245 + $0x10] sm:$0xf]
      %v1849 = vld [vmem:[%s245 + $0x14] sm:$0xf]
      %v1850 = vld [vmem:[%s245 + $0x18] sm:$0xf]
      %v1851 = vld [vmem:[%s245 + $0x1c] sm:$0xf]
      %v1852 = vunpack.c.l.bf16 %v1844
      %v1853 = vunpack.c.l.bf16 %v1845
      %v1854 = vunpack.c.l.bf16 %v1846
      %v1855 = vunpack.c.l.bf16 %v1847
      %v1856 = vunpack.c.l.bf16 %v1848
      %v1857 = vunpack.c.l.bf16 %v1849
      %v1858 = vunpack.c.l.bf16 %v1850
      %v1859 = vunpack.c.l.bf16 %v1851
      %v1860 = vadd.f32 %v1836, %v1852
      %v1861 = vadd.f32 %v1837, %v1853
      %v1862 = vadd.f32 %v1838, %v1854
      %v1863 = vadd.f32 %v1839, %v1855
      %v1864 = vadd.f32 %v1840, %v1856
      %v1865 = vadd.f32 %v1841, %v1857
      %v1866 = vadd.f32 %v1842, %v1858
      %v1867 = vadd.f32 %v1843, %v1859
      %v1868 = vmax.f32 %v1860, 0.0
      %v1869 = vmax.f32 %v1861, 0.0
      %v1870 = vmax.f32 %v1862, 0.0
      %v1871 = vmax.f32 %v1863, 0.0
      %v1872 = vmax.f32 %v1864, 0.0
      %v1873 = vmax.f32 %v1865, 0.0
      %v1874 = vmax.f32 %v1866, 0.0
      %v1875 = vmax.f32 %v1867, 0.0
      %v1876 = vpack.c.bf16 %v1868, %v1868
      %v1877 = vpack.c.bf16 %v1869, %v1869
      %v1878 = vpack.c.bf16 %v1870, %v1870
      %v1879 = vpack.c.bf16 %v1871, %v1871
      %v1880 = vpack.c.bf16 %v1872, %v1872
      %v1881 = vpack.c.bf16 %v1873, %v1873
      %v1882 = vpack.c.bf16 %v1874, %v1874
      %v1883 = vpack.c.bf16 %v1875, %v1875
      %1884 = vst [vmem:[%s255] sm:$0xf] %v1876
      %1885 = vst [vmem:[%s255 + $0x4] sm:$0xf] %v1877
      %1886 = vst [vmem:[%s255 + $0x8] sm:$0xf] %v1878
      %1887 = vst [vmem:[%s255 + $0xc] sm:$0xf] %v1879
      %1888 = vst [vmem:[%s255 + $0x10] sm:$0xf] %v1880
      %1889 = vst [vmem:[%s255 + $0x14] sm:$0xf] %v1881
      %1890 = vst [vmem:[%s255 + $0x18] sm:$0xf] %v1882
      %1891 = vst [vmem:[%s255 + $0x1c] sm:$0xf] %v1883
      %s1892 = smul.u32 8, %s20
      %p1893 = scmp.lt.s32.totalorder %s19, 1
      %s1894 = scalar_select %p1893, %s19, 1
      %p1895 = scmp.lt.s32.totalorder %s1892, 7
      %s1896 = scalar_select %p1895, %s1892, 7
      %s1897 = smul.addr %s1894, 8
      %s1898 = sadd.s32 %s1896, %s1897
      %s1899 = smul.addr %s1898, 4
      %s1900 = scalar_lea.vmem %s4, %s1899
      // Predicated region
      $region37: #{basic_block_forward.3} parent=35 // pred_check
        %p1901 = pneg %p143
      $region38: #{basic_block_forward.3} parent=35 // pred_check_branch
        %1903 = sbr.rel (%p1901) target = $region40
      $region39: #{basic_block_forward.3} parent=35 // pred_region
        %s1904 = smul.u32 8, %s20
      $region40: #{basic_block_forward.3} parent=35 // pred_fallthru
        _
    $region36: #{basic_block_forward.3} parent=5 // pred_fallthru
      _
    %p1905 = scmp.le.s32.totalorder 2, %s10
    // Predicated region
    $region41: #{basic_block_forward.3} parent=5 // pred_check
      %p1906 = pneg %p1905
    $region42: #{basic_block_forward.3} parent=5 // pred_check_branch
      %1908 = sbr.rel (%p1906) target = $region44
    $region43: #{basic_block_forward.3} parent=5 // pred_region
      %s1909 = ssub.s32 %s10, 2
      // Predicated region
      $region45: #{basic_block_forward.3} parent=43 // pred_check
        %p1910 = pneg %p149
      $region46: #{basic_block_forward.3} parent=43 // pred_check_branch
        %1912 = sbr.rel (%p1910) target = $region48
      $region47: #{basic_block_forward.3} parent=43 // pred_region
        %s1913 = smul.u32 8, %s22
        %p1914 = scmp.lt.s32.totalorder %s21, 1
        %s1915 = scalar_select %p1914, %s21, 1
        %p1916 = scmp.lt.s32.totalorder %s1913, 7
        %s1917 = scalar_select %p1916, %s1913, 7
        %s1918 = smul.addr %s1915, 8
        %s1919 = sadd.s32 %s1917, %s1918
        %s1920 = smul.addr %s1919, 4
        %s1921 = scalar_lea.vmem %s4, %s1920
      $region48: #{basic_block_forward.3} parent=43 // pred_fallthru
        _
    $region44: #{basic_block_forward.3} parent=5 // pred_fallthru
      _
  $region6: #{basic_block_forward.3} parent=0 // loop_footer
    %s14 = sadd.s32 1, %s10
  $region7: #{basic_block_forward.3} parent=0 // loop_footer_branch
    %9 = sbr.rel target = $region3
  $region8: #{basic_block_forward.3} parent=0 // loop_exit
    _

// kernel: basic_block_forward.2
$region0: #{basic_block_forward.2}
  #allocation0 [shape = 'u32[]', space=smem, size = 0x4, offset = 0x4, fixed_abs, tag = 'smem constant byte address 0x4 - core index']
  #allocation1 [shape = 'u32[72,128]{1,0:T(1,128)}', space=vmem, size = 0x9000, scoped, tag = 'internal scratch']
  %s0 = inlined_call_operand.vmem [shape: bf16[2,2,2,9,9,128], index: 0, kind: input, shape index: {}]
  %s1 = inlined_call_operand.vmem [shape: bf16[2,384,128], index: 1, kind: input, shape index: {}]
  %s2 = inlined_call_operand.vmem [shape: bf16[384,256], index: 2, kind: input, shape index: {}]
  %s3 = inlined_call_operand.vmem [shape: f32[1,128], index: 3, kind: input, shape index: {}]
  %s4 = inlined_call_operand.vmem [shape: f32[1,128], index: 4, kind: input, shape index: {}]
  %s5 = inlined_call_operand.vmem [shape: bf16[2,8,8,128], index: 5, kind: output, shape index: {0}]
  %s6 = inlined_call_operand.vmem [shape: bf16[2,8,8,128], index: 6, kind: output, shape index: {1}]
  %7 = xla_tuple %s5, %s6
  %s8 = sld [smem:[#allocation0]]
  $region61: #{basic_block_forward.2} parent=0
    _
  %s10 = ssub.s32 1, %s8
  %s11 = scalar_select 0, %s10, %s8
  loop: start=0, step=1, limit=4
  $region2: #{basic_block_forward.2} parent=0 // loop_pre_header
    _
  $region3: #{basic_block_forward.2} parent=0 // loop_header
    %s13 = sphi 0, %s17
    %p14 = scmp.ge.s32.totalorder %s13, 4
    %s20 = sphi 0, %s32
    %s21 = sphi 0, %s28
    %s22 = sphi 0, %s20
    %s23 = sphi 0, %s21
    %s24 = sphi 0, %s22
    %s25 = sphi 0, %s23
    %s35 = sphi 0, %s37
    %s38 = sphi 0, %s35
    %s39 = sphi 0, %s38
    %s55 = sphi 0, %s39
    %s59 = sphi 0, %s59
    %s61 = sphi 0, %s59
    %s62 = sphi 0, %s61
    %s76 = sphi 0, %s62
    %s80 = sphi 0, %s80
    %s82 = sphi 0, %s80
    %s83 = sphi 0, %s82
    %s97 = sphi 0, %s83
    %s101 = sphi 0, %s101
    %s103 = sphi 0, %s101
    %s104 = sphi 0, %s103
    %s118 = sphi 0, %s104
    %s122 = sphi 0, %s122
    %s124 = sphi 0, %s122
    %s125 = sphi 0, %s124
    %s139 = sphi 0, %s125
    %s147 = sphi 0, %s149
    %s150 = sphi 0, %s147
    %s151 = sphi 0, %s150
    %s167 = sphi 0, %s151
    %s175 = sphi 0, %s177
    %s178 = sphi 0, %s175
    %s179 = sphi 0, %s178
    %s195 = sphi 0, %s179
  $region4: #{basic_block_forward.2} parent=0 // loop_header_branch
    %16 = sbr.rel (%p14) target = $region8
  $region5: #{basic_block_forward.2} parent=0 // loop_body
    %s18 = ssub.s32 %s13, 1
    %s19 = ssub.s32 %s13, 2
    %s26 = sadd.s32 1, %s21
    %p27 = scmp.ge.s32.totalorder %s26, 1
    %s28 = scalar_select %p27, 0, %s26
    %s29 = sadd.s32 1, %s20
    %s30 = scalar_select %p27, %s29, %s20
    %p31 = scmp.ge.s32.totalorder %s30, 2
    %s32 = scalar_select %p31, 0, %s30
    %s33 = ssub.s32 %s20, %s32
    %p34 = scmp.eq.s32.totalorder %s33, 0
    %s36 = sadd.s32 %s35, 1
    %s37 = scalar_select %p34, %s35, %s36
    %p40 = pneg %p34
    %p41 = scmp.eq.s32.totalorder %s13, 1
    %p42 = por %p40, %p41
    %p43 = scmp.ne.s32.totalorder %s35, %s38
    %p44 = scmp.eq.s32.totalorder %s13, 0
    %p45 = por %p43, %p44
    %p46 = scmp.ne.s32.totalorder %s35, %s38
    %p47 = scmp.eq.s32.totalorder %s18, 1
    %p48 = por %p46, %p47
    %p49 = scmp.ne.s32.totalorder %s38, %s39
    %p50 = scmp.eq.s32.totalorder %s18, 0
    %p51 = por %p49, %p50
    %p52 = scmp.ne.s32.totalorder %s38, %s39
    %p53 = scmp.eq.s32.totalorder %s19, 1
    %p54 = por %p52, %p53
    %p56 = scmp.ne.s32.totalorder %s39, %s55
    %p57 = scmp.eq.s32.totalorder %s19, 0
    %p58 = por %p56, %p57
    %s60 = sadd.s32 %s59, 1
    %p63 = scmp.eq.s32.totalorder %s13, 1
    %p64 = scmp.ne.s32.totalorder %s59, %s61
    %p65 = scmp.eq.s32.totalorder %s13, 0
    %p66 = por %p64, %p65
    %p67 = scmp.ne.s32.totalorder %s59, %s61
    %p68 = scmp.eq.s32.totalorder %s18, 1
    %p69 = por %p67, %p68
    %p70 = scmp.ne.s32.totalorder %s61, %s62
    %p71 = scmp.eq.s32.totalorder %s18, 0
    %p72 = por %p70, %p71
    %p73 = scmp.ne.s32.totalorder %s61, %s62
    %p74 = scmp.eq.s32.totalorder %s19, 1
    %p75 = por %p73, %p74
    %p77 = scmp.ne.s32.totalorder %s62, %s76
    %p78 = scmp.eq.s32.totalorder %s19, 0
    %p79 = por %p77, %p78
    %s81 = sadd.s32 %s80, 1
    %p84 = scmp.eq.s32.totalorder %s13, 1
    %p85 = scmp.ne.s32.totalorder %s80, %s82
    %p86 = scmp.eq.s32.totalorder %s13, 0
    %p87 = por %p85, %p86
    %p88 = scmp.ne.s32.totalorder %s80, %s82
    %p89 = scmp.eq.s32.totalorder %s18, 1
    %p90 = por %p88, %p89
    %p91 = scmp.ne.s32.totalorder %s82, %s83
    %p92 = scmp.eq.s32.totalorder %s18, 0
    %p93 = por %p91, %p92
    %p94 = scmp.ne.s32.totalorder %s82, %s83
    %p95 = scmp.eq.s32.totalorder %s19, 1
    %p96 = por %p94, %p95
    %p98 = scmp.ne.s32.totalorder %s83, %s97
    %p99 = scmp.eq.s32.totalorder %s19, 0
    %p100 = por %p98, %p99
    %s102 = sadd.s32 %s101, 1
    %p105 = scmp.eq.s32.totalorder %s13, 1
    %p106 = scmp.ne.s32.totalorder %s101, %s103
    %p107 = scmp.eq.s32.totalorder %s13, 0
    %p108 = por %p106, %p107
    %p109 = scmp.ne.s32.totalorder %s101, %s103
    %p110 = scmp.eq.s32.totalorder %s18, 1
    %p111 = por %p109, %p110
    %p112 = scmp.ne.s32.totalorder %s103, %s104
    %p113 = scmp.eq.s32.totalorder %s18, 0
    %p114 = por %p112, %p113
    %p115 = scmp.ne.s32.totalorder %s103, %s104
    %p116 = scmp.eq.s32.totalorder %s19, 1
    %p117 = por %p115, %p116
    %p119 = scmp.ne.s32.totalorder %s104, %s118
    %p120 = scmp.eq.s32.totalorder %s19, 0
    %p121 = por %p119, %p120
    %s123 = sadd.s32 %s122, 1
    %p126 = scmp.eq.s32.totalorder %s13, 1
    %p127 = scmp.ne.s32.totalorder %s122, %s124
    %p128 = scmp.eq.s32.totalorder %s13, 0
    %p129 = por %p127, %p128
    %p130 = scmp.ne.s32.totalorder %s122, %s124
    %p131 = scmp.eq.s32.totalorder %s18, 1
    %p132 = por %p130, %p131
    %p133 = scmp.ne.s32.totalorder %s124, %s125
    %p134 = scmp.eq.s32.totalorder %s18, 0
    %p135 = por %p133, %p134
    %p136 = scmp.ne.s32.totalorder %s124, %s125
    %p137 = scmp.eq.s32.totalorder %s19, 1
    %p138 = por %p136, %p137
    %p140 = scmp.ne.s32.totalorder %s125, %s139
    %p141 = scmp.eq.s32.totalorder %s19, 0
    %p142 = por %p140, %p141
    %s143 = ssub.s32 %s20, %s32
    %s144 = ssub.s32 %s21, %s28
    %s145 = sor.u32 %s143, %s144
    %p146 = scmp.eq.s32.totalorder %s145, 0
    %s148 = sadd.s32 %s147, 1
    %s149 = scalar_select %p146, %s147, %s148
    %p152 = pneg %p146
    %p153 = scmp.eq.s32.totalorder %s13, 1
    %p154 = por %p152, %p153
    %p155 = scmp.ne.s32.totalorder %s147, %s150
    %p156 = scmp.eq.s32.totalorder %s13, 0
    %p157 = por %p155, %p156
    %p158 = scmp.ne.s32.totalorder %s147, %s150
    %p159 = scmp.eq.s32.totalorder %s18, 1
    %p160 = por %p158, %p159
    %p161 = scmp.ne.s32.totalorder %s150, %s151
    %p162 = scmp.eq.s32.totalorder %s18, 0
    %p163 = por %p161, %p162
    %p164 = scmp.ne.s32.totalorder %s150, %s151
    %p165 = scmp.eq.s32.totalorder %s19, 1
    %p166 = por %p164, %p165
    %p168 = scmp.ne.s32.totalorder %s151, %s167
    %p169 = scmp.eq.s32.totalorder %s19, 0
    %p170 = por %p168, %p169
    %s171 = ssub.s32 %s20, %s32
    %s172 = ssub.s32 %s21, %s28
    %s173 = sor.u32 %s171, %s172
    %p174 = scmp.eq.s32.totalorder %s173, 0
    %s176 = sadd.s32 %s175, 1
    %s177 = scalar_select %p174, %s175, %s176
    %p180 = pneg %p174
    %p181 = scmp.eq.s32.totalorder %s13, 1
    %p182 = por %p180, %p181
    %p183 = scmp.ne.s32.totalorder %s175, %s178
    %p184 = scmp.eq.s32.totalorder %s13, 0
    %p185 = por %p183, %p184
    %p186 = scmp.ne.s32.totalorder %s175, %s178
    %p187 = scmp.eq.s32.totalorder %s18, 1
    %p188 = por %p186, %p187
    %p189 = scmp.ne.s32.totalorder %s178, %s179
    %p190 = scmp.eq.s32.totalorder %s18, 0
    %p191 = por %p189, %p190
    %p192 = scmp.ne.s32.totalorder %s178, %s179
    %p193 = scmp.eq.s32.totalorder %s19, 1
    %p194 = por %p192, %p193
    %p196 = scmp.ne.s32.totalorder %s179, %s195
    %p197 = scmp.eq.s32.totalorder %s19, 0
    %p198 = por %p196, %p197
    %p199 = scmp.le.s32.totalorder 1, %s13
    %p200 = scmp.lt.s32.totalorder %s13, 3
    %p201 = pnand %p199, %p200
    %p202 = pneg %p201
    // Predicated region
    $region9: #{basic_block_forward.2} parent=5 // pred_check
      _
    $region10: #{basic_block_forward.2} parent=5 // pred_check_branch
      %204 = sbr.rel (%p201) target = $region12
    $region11: #{basic_block_forward.2} parent=5 // pred_region
      %s205 = ssub.s32 %s13, 1
      // Predicated region
      $region13: #{basic_block_forward.2} parent=11 // pred_check
        %p206 = pneg %p72
      $region14: #{basic_block_forward.2} parent=11 // pred_check_branch
        %208 = sbr.rel (%p206) target = $region16
      $region15: #{basic_block_forward.2} parent=11 // pred_region
        _
      $region16: #{basic_block_forward.2} parent=11 // pred_fallthru
        _
      // Predicated region
      $region17: #{basic_block_forward.2} parent=11 // pred_check
        %p209 = pneg %p93
      $region18: #{basic_block_forward.2} parent=11 // pred_check_branch
        %211 = sbr.rel (%p209) target = $region20
      $region19: #{basic_block_forward.2} parent=11 // pred_region
        _
      $region20: #{basic_block_forward.2} parent=11 // pred_fallthru
        _
      // Predicated region
      $region21: #{basic_block_forward.2} parent=11 // pred_check
        %p212 = pneg %p114
      $region22: #{basic_block_forward.2} parent=11 // pred_check_branch
        %214 = sbr.rel (%p212) target = $region24
      $region23: #{basic_block_forward.2} parent=11 // pred_region
        _
      $region24: #{basic_block_forward.2} parent=11 // pred_fallthru
        _
      // Predicated region
      $region25: #{basic_block_forward.2} parent=11 // pred_check
        %p215 = pneg %p135
      $region26: #{basic_block_forward.2} parent=11 // pred_check_branch
        %217 = sbr.rel (%p215) target = $region28
      $region27: #{basic_block_forward.2} parent=11 // pred_region
        _
      $region28: #{basic_block_forward.2} parent=11 // pred_fallthru
        _
    $region12: #{basic_block_forward.2} parent=5 // pred_fallthru
      _
    %p218 = scmp.lt.s32.totalorder %s13, 2
    // Predicated region
    $region29: #{basic_block_forward.2} parent=5 // pred_check
      %p219 = pneg %p218
    $region30: #{basic_block_forward.2} parent=5 // pred_check_branch
      %221 = sbr.rel (%p219) target = $region32
    $region31: #{basic_block_forward.2} parent=5 // pred_region
      // Predicated region
      $region33: #{basic_block_forward.2} parent=31 // pred_check
        %p222 = pneg %p45
      $region34: #{basic_block_forward.2} parent=31 // pred_check_branch
        %224 = sbr.rel (%p222) target = $region36
      $region35: #{basic_block_forward.2} parent=31 // pred_region
        %p225 = scmp.lt.s32.totalorder %s20, 1
        %s226 = scalar_select %p225, %s20, 1
        %s227 = smul.addr %s226, 72
        %s228 = smul.addr %s227, 4
        %s229 = scalar_lea.vmem %s0, %s228
      $region36: #{basic_block_forward.2} parent=31 // pred_fallthru
        _
    $region32: #{basic_block_forward.2} parent=5 // pred_fallthru
      _
    %p230 = scmp.le.s32.totalorder 1, %s13
    %p231 = scmp.lt.s32.totalorder %s13, 3
    %p232 = pnand %p230, %p231
    %p233 = pneg %p232
    // Predicated region
    $region37: #{basic_block_forward.2} parent=5 // pred_check
      _
    $region38: #{basic_block_forward.2} parent=5 // pred_check_branch
      %235 = sbr.rel (%p232) target = $region40
    $region39: #{basic_block_forward.2} parent=5 // pred_region
      %s236 = ssub.s32 %s13, 1
      %p237 = scmp.lt.s32.totalorder %s22, 1
      %s238 = scalar_select %p237, %s22, 1
      %s239 = smul.addr %s238, 72
      %s240 = smul.addr %s239, 4
      %s241 = scalar_lea.vmem %s0, %s240
      %p242 = pneg %p51
      %p243 = pneg %p48
      %p244 = pneg %p72
      %p245 = pneg %p69
      %p246 = pneg %p93
      %p247 = pneg %p90
      %p248 = pneg %p114
      %p249 = pneg %p111
      %p250 = pneg %p135
      %p251 = pneg %p132
      %p252 = pneg %p163
      %p253 = pneg %p160
      %s254 = smul.u32 8, %s23
      %p255 = scmp.lt.s32.totalorder %s22, 1
      %s256 = scalar_select %p255, %s22, 1
      %p257 = scmp.lt.s32.totalorder %s254, 7
      %s258 = scalar_select %p257, %s254, 7
      %s259 = smul.addr %s256, 8
      %s260 = sadd.s32 %s258, %s259
      %s261 = smul.addr %s260, 4
      %s262 = scalar_lea.vmem %s5, %s261
      %p263 = pneg %p191
      %p264 = pneg %p188
      %s265 = smul.u32 8, %s23
      %p266 = scmp.lt.s32.totalorder %s22, 1
      %s267 = scalar_select %p266, %s22, 1
      %p268 = scmp.lt.s32.totalorder %s265, 7
      %s269 = scalar_select %p268, %s265, 7
      %s270 = smul.addr %s267, 8
      %s271 = sadd.s32 %s269, %s270
      %s272 = smul.addr %s271, 4
      %s273 = scalar_lea.vmem %s6, %s272
      %p274 = scmp.lt.s32.totalorder %s22, 1
      %s275 = scalar_select %p274, %s22, 1
      %s276 = smul.addr %s275, 72
      %s277 = smul.addr %s276, 4
      %s278 = scalar_lea.vmem %s0, %s277
      %s279 = smul.u32 8, %s23
      %p280 = scmp.lt.s32.totalorder %s22, 1
      %s281 = scalar_select %p280, %s22, 1
      %p282 = scmp.lt.s32.totalorder %s279, 7
      %s283 = scalar_select %p282, %s279, 7
      %s284 = smul.addr %s281, 8
      %s285 = sadd.s32 %s283, %s284
      %s286 = smul.addr %s285, 4
      %s287 = scalar_lea.vmem %s5, %s286
      %s288 = smul.u32 8, %s23
      %s289 = smul.u32 8, %s23
      %p290 = scmp.lt.s32.totalorder %s22, 1
      %s291 = scalar_select %p290, %s22, 1
      %p292 = scmp.lt.s32.totalorder %s289, 7
      %s293 = scalar_select %p292, %s289, 7
      %s294 = smul.addr %s291, 8
      %s295 = sadd.s32 %s293, %s294
      %s296 = smul.addr %s295, 4
      %s297 = scalar_lea.vmem %s6, %s296
      %s298 = smul.u32 8, %s23
      %v299 = vld [vmem:[%s278] sm:$0xf]
      %v300 = vld [vmem:[%s278 + $0x8] sm:$0xf]
      %v301 = vld [vmem:[%s278 + $0x10] sm:$0xf]
      %v302 = vld [vmem:[%s278 + $0x18] sm:$0xf]
      %v303 = vld [vmem:[%s278 + $0x20] sm:$0xf]
      %v304 = vld [vmem:[%s278 + $0x28] sm:$0xf]
      %v305 = vld [vmem:[%s278 + $0x30] sm:$0xf]
      %v306 = vld [vmem:[%s278 + $0x38] sm:$0xf]
      %s307 = scalar_lea.vmem %s278, 72
      %v308 = vld [vmem:[%s307] sm:$0xf]
      %v309 = vld [vmem:[%s307 + $0x8] sm:$0xf]
      %v310 = vld [vmem:[%s307 + $0x10] sm:$0xf]
      %v311 = vld [vmem:[%s307 + $0x18] sm:$0xf]
      %v312 = vld [vmem:[%s307 + $0x20] sm:$0xf]
      %v313 = vld [vmem:[%s307 + $0x28] sm:$0xf]
      %v314 = vld [vmem:[%s307 + $0x30] sm:$0xf]
      %v315 = vld [vmem:[%s307 + $0x38] sm:$0xf]
      %v316 = vld [vmem:[%s278 + $0x4] sm:$0x1]
      %v317 = vld [vmem:[%s278 + $0xc] sm:$0x1]
      %v318 = vld [vmem:[%s278 + $0x14] sm:$0x1]
      %v319 = vld [vmem:[%s278 + $0x1c] sm:$0x1]
      %v320 = vld [vmem:[%s278 + $0x24] sm:$0x1]
      %v321 = vld [vmem:[%s278 + $0x2c] sm:$0x1]
      %v322 = vld [vmem:[%s278 + $0x34] sm:$0x1]
      %v323 = vld [vmem:[%s278 + $0x3c] sm:$0x1]
      %vm324 = vsmask.f32 3328
      %vm325 = vsmask.f32 7440
      %vm326 = vmor %vm324, %vm325
      %v328 = vshrl.u32 %v299, 16
      %v330 = vrot.slane %v328, 4
      %v331 = vshll.u32 %v299, 16
      %v333 = vrot.slane %v331, 5
      %v334 = vor.u32 %v330, %v333
      %v335 = vrot.slane %v334, 4
      %v337 = vshll.u32 %v316, 16
      %v339 = vrot.slane %v337, 5
      %v340 = vsel %vm326, %v335, %v339
      %v342 = vshrl.u32 %v300, 16
      %v344 = vrot.slane %v342, 4
      %v345 = vshll.u32 %v300, 16
      %v347 = vrot.slane %v345, 5
      %v348 = vor.u32 %v344, %v347
      %v349 = vrot.slane %v348, 4
      %v351 = vshll.u32 %v317, 16
      %v353 = vrot.slane %v351, 5
      %v354 = vsel %vm326, %v349, %v353
      %v356 = vshrl.u32 %v301, 16
      %v358 = vrot.slane %v356, 4
      %v359 = vshll.u32 %v301, 16
      %v361 = vrot.slane %v359, 5
      %v362 = vor.u32 %v358, %v361
      %v363 = vrot.slane %v362, 4
      %v365 = vshll.u32 %v318, 16
      %v367 = vrot.slane %v365, 5
      %v368 = vsel %vm326, %v363, %v367
      %v370 = vshrl.u32 %v302, 16
      %v372 = vrot.slane %v370, 4
      %v373 = vshll.u32 %v302, 16
      %v375 = vrot.slane %v373, 5
      %v376 = vor.u32 %v372, %v375
      %v377 = vrot.slane %v376, 4
      %v379 = vshll.u32 %v319, 16
      %v381 = vrot.slane %v379, 5
      %v382 = vsel %vm326, %v377, %v381
      %v384 = vshrl.u32 %v303, 16
      %v386 = vrot.slane %v384, 4
      %v387 = vshll.u32 %v303, 16
      %v389 = vrot.slane %v387, 5
      %v390 = vor.u32 %v386, %v389
      %v391 = vrot.slane %v390, 4
      %v393 = vshll.u32 %v320, 16
      %v395 = vrot.slane %v393, 5
      %v396 = vsel %vm326, %v391, %v395
      %v398 = vshrl.u32 %v304, 16
      %v400 = vrot.slane %v398, 4
      %v401 = vshll.u32 %v304, 16
      %v403 = vrot.slane %v401, 5
      %v404 = vor.u32 %v400, %v403
      %v405 = vrot.slane %v404, 4
      %v407 = vshll.u32 %v321, 16
      %v409 = vrot.slane %v407, 5
      %v410 = vsel %vm326, %v405, %v409
      %v412 = vshrl.u32 %v305, 16
      %v414 = vrot.slane %v412, 4
      %v415 = vshll.u32 %v305, 16
      %v417 = vrot.slane %v415, 5
      %v418 = vor.u32 %v414, %v417
      %v419 = vrot.slane %v418, 4
      %v421 = vshll.u32 %v322, 16
      %v423 = vrot.slane %v421, 5
      %v424 = vsel %vm326, %v419, %v423
      %v426 = vshrl.u32 %v306, 16
      %v428 = vrot.slane %v426, 4
      %v429 = vshll.u32 %v306, 16
      %v431 = vrot.slane %v429, 5
      %v432 = vor.u32 %v428, %v431
      %v433 = vrot.slane %v432, 4
      %v435 = vshll.u32 %v323, 16
      %v437 = vrot.slane %v435, 5
      %v438 = vsel %vm326, %v433, %v437
      %v447 = vunpack.c.l.b16 %v299
      %v448 = vunpack.c.l.b16 %v300
      %v449 = vunpack.c.l.b16 %v301
      %v450 = vunpack.c.l.b16 %v302
      %v451 = vunpack.c.l.b16 %v303
      %v452 = vunpack.c.l.b16 %v304
      %v453 = vunpack.c.l.b16 %v305
      %v454 = vunpack.c.l.b16 %v306
      %v455 = vpack.c.b16 %v448, %v447
      %v456 = vpack.c.b16 %v450, %v449
      %v457 = vpack.c.b16 %v452, %v451
      %v458 = vpack.c.b16 %v454, %v453
      %v471 = vunpack.c.l.b16 %v308
      %v472 = vunpack.c.l.b16 %v309
      %v473 = vunpack.c.l.b16 %v310
      %v474 = vunpack.c.l.b16 %v311
      %v475 = vunpack.c.l.b16 %v312
      %v476 = vunpack.c.l.b16 %v313
      %v477 = vunpack.c.l.b16 %v314
      %v478 = vunpack.c.l.b16 %v315
      %v479 = vpack.c.b16 %v472, %v471
      %v480 = vpack.c.b16 %v474, %v473
      %v481 = vpack.c.b16 %v476, %v475
      %v482 = vpack.c.b16 %v478, %v477
      %v487 = vunpack.c.l.b16 %v340
      %v488 = vunpack.c.l.b16 %v354
      %v489 = vunpack.c.l.b16 %v368
      %v490 = vunpack.c.l.b16 %v382
      %v491 = vunpack.c.l.b16 %v396
      %v492 = vunpack.c.l.b16 %v410
      %v493 = vunpack.c.l.b16 %v424
      %v494 = vunpack.c.l.b16 %v438
      %v495 = vpack.c.b16 %v488, %v487
      %v496 = vpack.c.b16 %v490, %v489
      %v497 = vpack.c.b16 %v492, %v491
      %v498 = vpack.c.b16 %v494, %v493
      %v503 = vld [vmem:[%s1] sm:$0xf]
      %v504 = vld [vmem:[%s1 + $0x4] sm:$0xf]
      %v505 = vld [vmem:[%s1 + $0x8] sm:$0xf]
      %v506 = vld [vmem:[%s1 + $0xc] sm:$0xf]
      %v507 = vld [vmem:[%s1 + $0x10] sm:$0xf]
      %v508 = vld [vmem:[%s1 + $0x14] sm:$0xf]
      %v509 = vld [vmem:[%s1 + $0x18] sm:$0xf]
      %v510 = vld [vmem:[%s1 + $0x1c] sm:$0xf]
      %v511 = vld [vmem:[%s1 + $0x20] sm:$0xf]
      %v512 = vld [vmem:[%s1 + $0x24] sm:$0xf]
      %v513 = vld [vmem:[%s1 + $0x28] sm:$0xf]
      %v514 = vld [vmem:[%s1 + $0x2c] sm:$0xf]
      %v515 = vld [vmem:[%s1 + $0x30] sm:$0xf]
      %v516 = vld [vmem:[%s1 + $0x34] sm:$0xf]
      %v517 = vld [vmem:[%s1 + $0x38] sm:$0xf]
      %v518 = vld [vmem:[%s1 + $0x3c] sm:$0xf]
      %v519 = vld [vmem:[%s1 + $0x40] sm:$0xf]
      %v520 = vld [vmem:[%s1 + $0x44] sm:$0xf]
      %v521 = vld [vmem:[%s1 + $0x48] sm:$0xf]
      %v522 = vld [vmem:[%s1 + $0x4c] sm:$0xf]
      %v523 = vld [vmem:[%s1 + $0x50] sm:$0xf]
      %v524 = vld [vmem:[%s1 + $0x54] sm:$0xf]
      %v525 = vld [vmem:[%s1 + $0x58] sm:$0xf]
      %v526 = vld [vmem:[%s1 + $0x5c] sm:$0xf]
      %v527 = vld [vmem:[%s1 + $0x60] sm:$0xf]
      %v528 = vld [vmem:[%s1 + $0x64] sm:$0xf]
      %v529 = vld [vmem:[%s1 + $0x68] sm:$0xf]
      %v530 = vld [vmem:[%s1 + $0x6c] sm:$0xf]
      %v531 = vld [vmem:[%s1 + $0x70] sm:$0xf]
      %v532 = vld [vmem:[%s1 + $0x74] sm:$0xf]
      %v533 = vld [vmem:[%s1 + $0x78] sm:$0xf]
      %v534 = vld [vmem:[%s1 + $0x7c] sm:$0xf]
      %v535 = vld [vmem:[%s1 + $0x80] sm:$0xf]
      %v536 = vld [vmem:[%s1 + $0x84] sm:$0xf]
      %v537 = vld [vmem:[%s1 + $0x88] sm:$0xf]
      %v538 = vld [vmem:[%s1 + $0x8c] sm:$0xf]
      %v539 = vld [vmem:[%s1 + $0x90] sm:$0xf]
      %v540 = vld [vmem:[%s1 + $0x94] sm:$0xf]
      %v541 = vld [vmem:[%s1 + $0x98] sm:$0xf]
      %v542 = vld [vmem:[%s1 + $0x9c] sm:$0xf]
      %v543 = vld [vmem:[%s1 + $0xa0] sm:$0xf]
      %v544 = vld [vmem:[%s1 + $0xa4] sm:$0xf]
      %v545 = vld [vmem:[%s1 + $0xa8] sm:$0xf]
      %v546 = vld [vmem:[%s1 + $0xac] sm:$0xf]
      %v547 = vld [vmem:[%s1 + $0xb0] sm:$0xf]
      %v548 = vld [vmem:[%s1 + $0xb4] sm:$0xf]
      %v549 = vld [vmem:[%s1 + $0xb8] sm:$0xf]
      %v550 = vld [vmem:[%s1 + $0xbc] sm:$0xf]
      %s551 = scalar_lea.vmem %s278, 144
      %v552 = vld [vmem:[%s551] sm:$0xf]
      %v553 = vld [vmem:[%s551 + $0x8] sm:$0xf]
      %v554 = vld [vmem:[%s551 + $0x10] sm:$0xf]
      %v555 = vld [vmem:[%s551 + $0x18] sm:$0xf]
      %v556 = vld [vmem:[%s551 + $0x20] sm:$0xf]
      %v557 = vld [vmem:[%s551 + $0x28] sm:$0xf]
      %v558 = vld [vmem:[%s551 + $0x30] sm:$0xf]
      %v559 = vld [vmem:[%s551 + $0x38] sm:$0xf]
      %s560 = scalar_lea.vmem %s278, 216
      %v561 = vld [vmem:[%s560] sm:$0xf]
      %v562 = vld [vmem:[%s560 + $0x8] sm:$0xf]
      %v563 = vld [vmem:[%s560 + $0x10] sm:$0xf]
      %v564 = vld [vmem:[%s560 + $0x18] sm:$0xf]
      %v565 = vld [vmem:[%s560 + $0x20] sm:$0xf]
      %v566 = vld [vmem:[%s560 + $0x28] sm:$0xf]
      %v567 = vld [vmem:[%s560 + $0x30] sm:$0xf]
      %v568 = vld [vmem:[%s560 + $0x38] sm:$0xf]
      %v569 = vld [vmem:[%s551 + $0x4] sm:$0x1]
      %v570 = vld [vmem:[%s551 + $0xc] sm:$0x1]
      %v571 = vld [vmem:[%s551 + $0x14] sm:$0x1]
      %v572 = vld [vmem:[%s551 + $0x1c] sm:$0x1]
      %v573 = vld [vmem:[%s551 + $0x24] sm:$0x1]
      %v574 = vld [vmem:[%s551 + $0x2c] sm:$0x1]
      %v575 = vld [vmem:[%s551 + $0x34] sm:$0x1]
      %v576 = vld [vmem:[%s551 + $0x3c] sm:$0x1]
      %v578 = vshrl.u32 %v552, 16
      %v580 = vrot.slane %v578, 4
      %v581 = vshll.u32 %v552, 16
      %v583 = vrot.slane %v581, 5
      %v584 = vor.u32 %v580, %v583
      %v585 = vrot.slane %v584, 4
      %v587 = vshll.u32 %v569, 16
      %v589 = vrot.slane %v587, 5
      %v590 = vsel %vm326, %v585, %v589
      %v592 = vshrl.u32 %v553, 16
      %v594 = vrot.slane %v592, 4
      %v595 = vshll.u32 %v553, 16
      %v597 = vrot.slane %v595, 5
      %v598 = vor.u32 %v594, %v597
      %v599 = vrot.slane %v598, 4
      %v601 = vshll.u32 %v570, 16
      %v603 = vrot.slane %v601, 5
      %v604 = vsel %vm326, %v599, %v603
      %v606 = vshrl.u32 %v554, 16
      %v608 = vrot.slane %v606, 4
      %v609 = vshll.u32 %v554, 16
      %v611 = vrot.slane %v609, 5
      %v612 = vor.u32 %v608, %v611
      %v613 = vrot.slane %v612, 4
      %v615 = vshll.u32 %v571, 16
      %v617 = vrot.slane %v615, 5
      %v618 = vsel %vm326, %v613, %v617
      %v620 = vshrl.u32 %v555, 16
      %v622 = vrot.slane %v620, 4
      %v623 = vshll.u32 %v555, 16
      %v625 = vrot.slane %v623, 5
      %v626 = vor.u32 %v622, %v625
      %v627 = vrot.slane %v626, 4
      %v629 = vshll.u32 %v572, 16
      %v631 = vrot.slane %v629, 5
      %v632 = vsel %vm326, %v627, %v631
      %v634 = vshrl.u32 %v556, 16
      %v636 = vrot.slane %v634, 4
      %v637 = vshll.u32 %v556, 16
      %v639 = vrot.slane %v637, 5
      %v640 = vor.u32 %v636, %v639
      %v641 = vrot.slane %v640, 4
      %v643 = vshll.u32 %v573, 16
      %v645 = vrot.slane %v643, 5
      %v646 = vsel %vm326, %v641, %v645
      %v648 = vshrl.u32 %v557, 16
      %v650 = vrot.slane %v648, 4
      %v651 = vshll.u32 %v557, 16
      %v653 = vrot.slane %v651, 5
      %v654 = vor.u32 %v650, %v653
      %v655 = vrot.slane %v654, 4
      %v657 = vshll.u32 %v574, 16
      %v659 = vrot.slane %v657, 5
      %v660 = vsel %vm326, %v655, %v659
      %v662 = vshrl.u32 %v558, 16
      %v664 = vrot.slane %v662, 4
      %v665 = vshll.u32 %v558, 16
      %v667 = vrot.slane %v665, 5
      %v668 = vor.u32 %v664, %v667
      %v669 = vrot.slane %v668, 4
      %v671 = vshll.u32 %v575, 16
      %v673 = vrot.slane %v671, 5
      %v674 = vsel %vm326, %v669, %v673
      %v676 = vshrl.u32 %v559, 16
      %v678 = vrot.slane %v676, 4
      %v679 = vshll.u32 %v559, 16
      %v681 = vrot.slane %v679, 5
      %v682 = vor.u32 %v678, %v681
      %v683 = vrot.slane %v682, 4
      %v685 = vshll.u32 %v576, 16
      %v687 = vrot.slane %v685, 5
      %v688 = vsel %vm326, %v683, %v687
      %v697 = vunpack.c.l.b16 %v552
      %v698 = vunpack.c.l.b16 %v553
      %v699 = vunpack.c.l.b16 %v554
      %v700 = vunpack.c.l.b16 %v555
      %v701 = vunpack.c.l.b16 %v556
      %v702 = vunpack.c.l.b16 %v557
      %v703 = vunpack.c.l.b16 %v558
      %v704 = vunpack.c.l.b16 %v559
      %v705 = vpack.c.b16 %v698, %v697
      %v706 = vpack.c.b16 %v700, %v699
      %v707 = vpack.c.b16 %v702, %v701
      %v708 = vpack.c.b16 %v704, %v703
      %v721 = vunpack.c.l.b16 %v561
      %v722 = vunpack.c.l.b16 %v562
      %v723 = vunpack.c.l.b16 %v563
      %v724 = vunpack.c.l.b16 %v564
      %v725 = vunpack.c.l.b16 %v565
      %v726 = vunpack.c.l.b16 %v566
      %v727 = vunpack.c.l.b16 %v567
      %v728 = vunpack.c.l.b16 %v568
      %v729 = vpack.c.b16 %v722, %v721
      %v730 = vpack.c.b16 %v724, %v723
      %v731 = vpack.c.b16 %v726, %v725
      %v732 = vpack.c.b16 %v728, %v727
      %v737 = vunpack.c.l.b16 %v590
      %v738 = vunpack.c.l.b16 %v604
      %v739 = vunpack.c.l.b16 %v618
      %v740 = vunpack.c.l.b16 %v632
      %v741 = vunpack.c.l.b16 %v646
      %v742 = vunpack.c.l.b16 %v660
      %v743 = vunpack.c.l.b16 %v674
      %v744 = vunpack.c.l.b16 %v688
      %v745 = vpack.c.b16 %v738, %v737
      %v746 = vpack.c.b16 %v740, %v739
      %v747 = vpack.c.b16 %v742, %v741
      %v748 = vpack.c.b16 %v744, %v743
      %v753 = vld [vmem:[%s2] sm:$0xff]
      %v754 = vld [vmem:[%s2 + $0x8] sm:$0xff]
      %v755 = vld [vmem:[%s2 + $0x10] sm:$0xff]
      %v756 = vld [vmem:[%s2 + $0x18] sm:$0xff]
      %v757 = vld [vmem:[%s2 + $0x20] sm:$0xff]
      %v758 = vld [vmem:[%s2 + $0x28] sm:$0xff]
      %v759 = vld [vmem:[%s2 + $0x30] sm:$0xff]
      %v760 = vld [vmem:[%s2 + $0x38] sm:$0xff]
      %v761 = vld [vmem:[%s2 + $0x40] sm:$0xff]
      %v762 = vld [vmem:[%s2 + $0x48] sm:$0xff]
      %v763 = vld [vmem:[%s2 + $0x50] sm:$0xff]
      %v764 = vld [vmem:[%s2 + $0x58] sm:$0xff]
      %v765 = vld [vmem:[%s2 + $0x60] sm:$0xff]
      %v766 = vld [vmem:[%s2 + $0x68] sm:$0xff]
      %v767 = vld [vmem:[%s2 + $0x70] sm:$0xff]
      %v768 = vld [vmem:[%s2 + $0x78] sm:$0xff]
      %v769 = vld [vmem:[%s2 + $0x80] sm:$0xff]
      %v770 = vld [vmem:[%s2 + $0x88] sm:$0xff]
      %v771 = vld [vmem:[%s2 + $0x90] sm:$0xff]
      %v772 = vld [vmem:[%s2 + $0x98] sm:$0xff]
      %v773 = vld [vmem:[%s2 + $0xa0] sm:$0xff]
      %v774 = vld [vmem:[%s2 + $0xa8] sm:$0xff]
      %v775 = vld [vmem:[%s2 + $0xb0] sm:$0xff]
      %v776 = vld [vmem:[%s2 + $0xb8] sm:$0xff]
      %v777 = vld [vmem:[%s2 + $0xc0] sm:$0xff]
      %v778 = vld [vmem:[%s2 + $0xc8] sm:$0xff]
      %v779 = vld [vmem:[%s2 + $0xd0] sm:$0xff]
      %v780 = vld [vmem:[%s2 + $0xd8] sm:$0xff]
      %v781 = vld [vmem:[%s2 + $0xe0] sm:$0xff]
      %v782 = vld [vmem:[%s2 + $0xe8] sm:$0xff]
      %v783 = vld [vmem:[%s2 + $0xf0] sm:$0xff]
      %v784 = vld [vmem:[%s2 + $0xf8] sm:$0xff]
      %v785 = vld [vmem:[%s2 + $0x100] sm:$0xff]
      %v786 = vld [vmem:[%s2 + $0x108] sm:$0xff]
      %v787 = vld [vmem:[%s2 + $0x110] sm:$0xff]
      %v788 = vld [vmem:[%s2 + $0x118] sm:$0xff]
      %v789 = vld [vmem:[%s2 + $0x120] sm:$0xff]
      %v790 = vld [vmem:[%s2 + $0x128] sm:$0xff]
      %v791 = vld [vmem:[%s2 + $0x130] sm:$0xff]
      %v792 = vld [vmem:[%s2 + $0x138] sm:$0xff]
      %v793 = vld [vmem:[%s2 + $0x140] sm:$0xff]
      %v794 = vld [vmem:[%s2 + $0x148] sm:$0xff]
      %v795 = vld [vmem:[%s2 + $0x150] sm:$0xff]
      %v796 = vld [vmem:[%s2 + $0x158] sm:$0xff]
      %v797 = vld [vmem:[%s2 + $0x160] sm:$0xff]
      %v798 = vld [vmem:[%s2 + $0x168] sm:$0xff]
      %v799 = vld [vmem:[%s2 + $0x170] sm:$0xff]
      %v800 = vld [vmem:[%s2 + $0x178] sm:$0xff]
      %v849 = vunpack.c.l.b16 %v753
      %v850 = vunpack.c.h.b16 %v753
      %v851 = vunpack.c.l.b16 %v754
      %v852 = vunpack.c.h.b16 %v754
      %v853 = vunpack.c.l.b16 %v755
      %v854 = vunpack.c.h.b16 %v755
      %v855 = vunpack.c.l.b16 %v756
      %v856 = vunpack.c.h.b16 %v756
      %v857 = vunpack.c.l.b16 %v757
      %v858 = vunpack.c.h.b16 %v757
      %v859 = vunpack.c.l.b16 %v758
      %v860 = vunpack.c.h.b16 %v758
      %v861 = vunpack.c.l.b16 %v759
      %v862 = vunpack.c.h.b16 %v759
      %v863 = vunpack.c.l.b16 %v760
      %v864 = vunpack.c.h.b16 %v760
      %v865 = vunpack.c.l.b16 %v761
      %v866 = vunpack.c.h.b16 %v761
      %v867 = vunpack.c.l.b16 %v762
      %v868 = vunpack.c.h.b16 %v762
      %v869 = vunpack.c.l.b16 %v763
      %v870 = vunpack.c.h.b16 %v763
      %v871 = vunpack.c.l.b16 %v764
      %v872 = vunpack.c.h.b16 %v764
      %v873 = vunpack.c.l.b16 %v765
      %v874 = vunpack.c.h.b16 %v765
      %v875 = vunpack.c.l.b16 %v766
      %v876 = vunpack.c.h.b16 %v766
      %v877 = vunpack.c.l.b16 %v767
      %v878 = vunpack.c.h.b16 %v767
      %v879 = vunpack.c.l.b16 %v768
      %v880 = vunpack.c.h.b16 %v768
      %v881 = vunpack.c.l.b16 %v769
      %v882 = vunpack.c.h.b16 %v769
      %v883 = vunpack.c.l.b16 %v770
      %v884 = vunpack.c.h.b16 %v770
      %v885 = vunpack.c.l.b16 %v771
      %v886 = vunpack.c.h.b16 %v771
      %v887 = vunpack.c.l.b16 %v772
      %v888 = vunpack.c.h.b16 %v772
      %v889 = vunpack.c.l.b16 %v773
      %v890 = vunpack.c.h.b16 %v773
      %v891 = vunpack.c.l.b16 %v774
      %v892 = vunpack.c.h.b16 %v774
      %v893 = vunpack.c.l.b16 %v775
      %v894 = vunpack.c.h.b16 %v775
      %v895 = vunpack.c.l.b16 %v776
      %v896 = vunpack.c.h.b16 %v776
      %v897 = vunpack.c.l.b16 %v777
      %v898 = vunpack.c.h.b16 %v777
      %v899 = vunpack.c.l.b16 %v778
      %v900 = vunpack.c.h.b16 %v778
      %v901 = vunpack.c.l.b16 %v779
      %v902 = vunpack.c.h.b16 %v779
      %v903 = vunpack.c.l.b16 %v780
      %v904 = vunpack.c.h.b16 %v780
      %v905 = vunpack.c.l.b16 %v781
      %v906 = vunpack.c.h.b16 %v781
      %v907 = vunpack.c.l.b16 %v782
      %v908 = vunpack.c.h.b16 %v782
      %v909 = vunpack.c.l.b16 %v783
      %v910 = vunpack.c.h.b16 %v783
      %v911 = vunpack.c.l.b16 %v784
      %v912 = vunpack.c.h.b16 %v784
      %v913 = vunpack.c.l.b16 %v785
      %v914 = vunpack.c.h.b16 %v785
      %v915 = vunpack.c.l.b16 %v786
      %v916 = vunpack.c.h.b16 %v786
      %v917 = vunpack.c.l.b16 %v787
      %v918 = vunpack.c.h.b16 %v787
      %v919 = vunpack.c.l.b16 %v788
      %v920 = vunpack.c.h.b16 %v788
      %v921 = vunpack.c.l.b16 %v789
      %v922 = vunpack.c.h.b16 %v789
      %v923 = vunpack.c.l.b16 %v790
      %v924 = vunpack.c.h.b16 %v790
      %v925 = vunpack.c.l.b16 %v791
      %v926 = vunpack.c.h.b16 %v791
      %v927 = vunpack.c.l.b16 %v792
      %v928 = vunpack.c.h.b16 %v792
      %v929 = vunpack.c.l.b16 %v793
      %v930 = vunpack.c.h.b16 %v793
      %v931 = vunpack.c.l.b16 %v794
      %v932 = vunpack.c.h.b16 %v794
      %v933 = vunpack.c.l.b16 %v795
      %v934 = vunpack.c.h.b16 %v795
      %v935 = vunpack.c.l.b16 %v796
      %v936 = vunpack.c.h.b16 %v796
      %v937 = vunpack.c.l.b16 %v797
      %v938 = vunpack.c.h.b16 %v797
      %v939 = vunpack.c.l.b16 %v798
      %v940 = vunpack.c.h.b16 %v798
      %v941 = vunpack.c.l.b16 %v799
      %v942 = vunpack.c.h.b16 %v799
      %v943 = vunpack.c.l.b16 %v800
      %v944 = vunpack.c.h.b16 %v800
      %v945 = vpack.c.b16 %v851, %v849
      %v946 = vpack.c.b16 %v852, %v850
      %v947 = vpack.c.b16 %v855, %v853
      %v948 = vpack.c.b16 %v856, %v854
      %v949 = vpack.c.b16 %v859, %v857
      %v950 = vpack.c.b16 %v860, %v858
      %v951 = vpack.c.b16 %v863, %v861
      %v952 = vpack.c.b16 %v864, %v862
      %v953 = vpack.c.b16 %v867, %v865
      %v954 = vpack.c.b16 %v868, %v866
      %v955 = vpack.c.b16 %v871, %v869
      %v956 = vpack.c.b16 %v872, %v870
      %v957 = vpack.c.b16 %v875, %v873
      %v958 = vpack.c.b16 %v876, %v874
      %v959 = vpack.c.b16 %v879, %v877
      %v960 = vpack.c.b16 %v880, %v878
      %v961 = vpack.c.b16 %v883, %v881
      %v962 = vpack.c.b16 %v884, %v882
      %v963 = vpack.c.b16 %v887, %v885
      %v964 = vpack.c.b16 %v888, %v886
      %v965 = vpack.c.b16 %v891, %v889
      %v966 = vpack.c.b16 %v892, %v890
      %v967 = vpack.c.b16 %v895, %v893
      %v968 = vpack.c.b16 %v896, %v894
      %v969 = vpack.c.b16 %v899, %v897
      %v970 = vpack.c.b16 %v900, %v898
      %v971 = vpack.c.b16 %v903, %v901
      %v972 = vpack.c.b16 %v904, %v902
      %v973 = vpack.c.b16 %v907, %v905
      %v974 = vpack.c.b16 %v908, %v906
      %v975 = vpack.c.b16 %v911, %v909
      %v976 = vpack.c.b16 %v912, %v910
      %v977 = vpack.c.b16 %v915, %v913
      %v978 = vpack.c.b16 %v916, %v914
      %v979 = vpack.c.b16 %v919, %v917
      %v980 = vpack.c.b16 %v920, %v918
      %v981 = vpack.c.b16 %v923, %v921
      %v982 = vpack.c.b16 %v924, %v922
      %v983 = vpack.c.b16 %v927, %v925
      %v984 = vpack.c.b16 %v928, %v926
      %v985 = vpack.c.b16 %v931, %v929
      %v986 = vpack.c.b16 %v932, %v930
      %v987 = vpack.c.b16 %v935, %v933
      %v988 = vpack.c.b16 %v936, %v934
      %v989 = vpack.c.b16 %v939, %v937
      %v990 = vpack.c.b16 %v940, %v938
      %v991 = vpack.c.b16 %v943, %v941
      %v992 = vpack.c.b16 %v944, %v942
      %1041 = vmatpush.bf16.msra.mxu0 %v959
      %1042 = vmatpush.bf16.msra.mxu0 %v957
      %1043 = vmatpush.bf16.msra.mxu0 %v955
      %1044 = vmatpush.bf16.msra.mxu0 %v953
      %1045 = vmatpush.bf16.msra.mxu0 %v951
      %1046 = vmatpush.bf16.msra.mxu0 %v949
      %1047 = vmatpush.bf16.msra.mxu0 %v947
      %1048 = vmatpush.bf16.msra.mxu0 %v945
      %1049 = vmatmul.bf16.gmra.mxu0 %v705
      %v1050 = vpop.f32.mrf.mxu0
      %v1051 = vadd.f32 0.0, %v1050
      %v1052 = vpop.f32.mrf.mxu0
      %v1053 = vadd.f32 0.0, %v1052
      %1054 = vmatmul.bf16.gmra.mxu0 %v706
      %v1055 = vpop.f32.mrf.mxu0
      %v1056 = vadd.f32 0.0, %v1055
      %v1057 = vpop.f32.mrf.mxu0
      %v1058 = vadd.f32 0.0, %v1057
      %1059 = vmatmul.bf16.gmra.mxu0 %v707
      %v1060 = vpop.f32.mrf.mxu0
      %v1061 = vadd.f32 0.0, %v1060
      %v1062 = vpop.f32.mrf.mxu0
      %v1063 = vadd.f32 0.0, %v1062
      %1064 = vmatmul.bf16.gmra.mxu0 %v708
      %v1065 = vpop.f32.mrf.mxu0
      %v1066 = vadd.f32 0.0, %v1065
      %v1067 = vpop.f32.mrf.mxu0
      %v1068 = vadd.f32 0.0, %v1067
      %1069 = vdwg.mxu0
      %1070 = vmatpush.bf16.msra.mxu0 %v975
      %1071 = vmatpush.bf16.msra.mxu0 %v973
      %1072 = vmatpush.bf16.msra.mxu0 %v971
      %1073 = vmatpush.bf16.msra.mxu0 %v969
      %1074 = vmatpush.bf16.msra.mxu0 %v967
      %1075 = vmatpush.bf16.msra.mxu0 %v965
      %1076 = vmatpush.bf16.msra.mxu0 %v963
      %1077 = vmatpush.bf16.msra.mxu0 %v961
      %1078 = vmatmul.bf16.gmra.mxu0 %v729
      %v1079 = vpop.f32.mrf.mxu0
      %v1080 = vadd.f32 %v1051, %v1079
      %v1081 = vpop.f32.mrf.mxu0
      %v1082 = vadd.f32 %v1053, %v1081
      %1083 = vmatmul.bf16.gmra.mxu0 %v730
      %v1084 = vpop.f32.mrf.mxu0
      %v1085 = vadd.f32 %v1056, %v1084
      %v1086 = vpop.f32.mrf.mxu0
      %v1087 = vadd.f32 %v1058, %v1086
      %1088 = vmatmul.bf16.gmra.mxu0 %v731
      %v1089 = vpop.f32.mrf.mxu0
      %v1090 = vadd.f32 %v1061, %v1089
      %v1091 = vpop.f32.mrf.mxu0
      %v1092 = vadd.f32 %v1063, %v1091
      %1093 = vmatmul.bf16.gmra.mxu0 %v732
      %v1094 = vpop.f32.mrf.mxu0
      %v1095 = vadd.f32 %v1066, %v1094
      %v1096 = vpop.f32.mrf.mxu0
      %v1097 = vadd.f32 %v1068, %v1096
      %1098 = vdwg.mxu0
      %1099 = vmatpush.bf16.msra.mxu0 %v991
      %1100 = vmatpush.bf16.msra.mxu0 %v989
      %1101 = vmatpush.bf16.msra.mxu0 %v987
      %1102 = vmatpush.bf16.msra.mxu0 %v985
      %1103 = vmatpush.bf16.msra.mxu0 %v983
      %1104 = vmatpush.bf16.msra.mxu0 %v981
      %1105 = vmatpush.bf16.msra.mxu0 %v979
      %1106 = vmatpush.bf16.msra.mxu0 %v977
      %1107 = vmatmul.bf16.gmra.mxu0 %v745
      %v1108 = vpop.f32.mrf.mxu0
      %v1109 = vadd.f32 %v1080, %v1108
      %v1110 = vpop.f32.mrf.mxu0
      %v1111 = vadd.f32 %v1082, %v1110
      %1112 = vmatmul.bf16.gmra.mxu0 %v746
      %v1113 = vpop.f32.mrf.mxu0
      %v1114 = vadd.f32 %v1085, %v1113
      %v1115 = vpop.f32.mrf.mxu0
      %v1116 = vadd.f32 %v1087, %v1115
      %1117 = vmatmul.bf16.gmra.mxu0 %v747
      %v1118 = vpop.f32.mrf.mxu0
      %v1119 = vadd.f32 %v1090, %v1118
      %v1120 = vpop.f32.mrf.mxu0
      %v1121 = vadd.f32 %v1092, %v1120
      %1122 = vmatmul.bf16.gmra.mxu0 %v748
      %v1123 = vpop.f32.mrf.mxu0
      %v1124 = vadd.f32 %v1095, %v1123
      %v1125 = vpop.f32.mrf.mxu0
      %v1126 = vadd.f32 %v1097, %v1125
      %1127 = vdwg.mxu0
      %1128 = vmatpush.bf16.msra.mxu0 %v960
      %1129 = vmatpush.bf16.msra.mxu0 %v958
      %1130 = vmatpush.bf16.msra.mxu0 %v956
      %1131 = vmatpush.bf16.msra.mxu0 %v954
      %1132 = vmatpush.bf16.msra.mxu0 %v952
      %1133 = vmatpush.bf16.msra.mxu0 %v950
      %1134 = vmatpush.bf16.msra.mxu0 %v948
      %1135 = vmatpush.bf16.msra.mxu0 %v946
      %1136 = vmatmul.bf16.gmra.mxu0 %v705
      %v1137 = vpop.f32.mrf.mxu0
      %v1138 = vadd.f32 0.0, %v1137
      %v1139 = vpop.f32.mrf.mxu0
      %v1140 = vadd.f32 0.0, %v1139
      %1141 = vmatmul.bf16.gmra.mxu0 %v706
      %v1142 = vpop.f32.mrf.mxu0
      %v1143 = vadd.f32 0.0, %v1142
      %v1144 = vpop.f32.mrf.mxu0
      %v1145 = vadd.f32 0.0, %v1144
      %1146 = vmatmul.bf16.gmra.mxu0 %v707
      %v1147 = vpop.f32.mrf.mxu0
      %v1148 = vadd.f32 0.0, %v1147
      %v1149 = vpop.f32.mrf.mxu0
      %v1150 = vadd.f32 0.0, %v1149
      %1151 = vmatmul.bf16.gmra.mxu0 %v708
      %v1152 = vpop.f32.mrf.mxu0
      %v1153 = vadd.f32 0.0, %v1152
      %v1154 = vpop.f32.mrf.mxu0
      %v1155 = vadd.f32 0.0, %v1154
      %1156 = vdwg.mxu0
      %1157 = vmatpush.bf16.msra.mxu0 %v976
      %1158 = vmatpush.bf16.msra.mxu0 %v974
      %1159 = vmatpush.bf16.msra.mxu0 %v972
      %1160 = vmatpush.bf16.msra.mxu0 %v970
      %1161 = vmatpush.bf16.msra.mxu0 %v968
      %1162 = vmatpush.bf16.msra.mxu0 %v966
      %1163 = vmatpush.bf16.msra.mxu0 %v964
      %1164 = vmatpush.bf16.msra.mxu0 %v962
      %1165 = vmatmul.bf16.gmra.mxu0 %v729
      %v1166 = vpop.f32.mrf.mxu0
      %v1167 = vadd.f32 %v1138, %v1166
      %v1168 = vpop.f32.mrf.mxu0
      %v1169 = vadd.f32 %v1140, %v1168
      %1170 = vmatmul.bf16.gmra.mxu0 %v730
      %v1171 = vpop.f32.mrf.mxu0
      %v1172 = vadd.f32 %v1143, %v1171
      %v1173 = vpop.f32.mrf.mxu0
      %v1174 = vadd.f32 %v1145, %v1173
      %1175 = vmatmul.bf16.gmra.mxu0 %v731
      %v1176 = vpop.f32.mrf.mxu0
      %v1177 = vadd.f32 %v1148, %v1176
      %v1178 = vpop.f32.mrf.mxu0
      %v1179 = vadd.f32 %v1150, %v1178
      %1180 = vmatmul.bf16.gmra.mxu0 %v732
      %v1181 = vpop.f32.mrf.mxu0
      %v1182 = vadd.f32 %v1153, %v1181
      %v1183 = vpop.f32.mrf.mxu0
      %v1184 = vadd.f32 %v1155, %v1183
      %1185 = vdwg.mxu0
      %1186 = vmatpush.bf16.msra.mxu0 %v992
      %1187 = vmatpush.bf16.msra.mxu0 %v990
      %1188 = vmatpush.bf16.msra.mxu0 %v988
      %1189 = vmatpush.bf16.msra.mxu0 %v986
      %1190 = vmatpush.bf16.msra.mxu0 %v984
      %1191 = vmatpush.bf16.msra.mxu0 %v982
      %1192 = vmatpush.bf16.msra.mxu0 %v980
      %1193 = vmatpush.bf16.msra.mxu0 %v978
      %1194 = vmatmul.bf16.gmra.mxu0 %v745
      %v1195 = vpop.f32.mrf.mxu0
      %v1196 = vadd.f32 %v1167, %v1195
      %v1197 = vpop.f32.mrf.mxu0
      %v1198 = vadd.f32 %v1169, %v1197
      %1199 = vmatmul.bf16.gmra.mxu0 %v746
      %v1200 = vpop.f32.mrf.mxu0
      %v1201 = vadd.f32 %v1172, %v1200
      %v1202 = vpop.f32.mrf.mxu0
      %v1203 = vadd.f32 %v1174, %v1202
      %1204 = vmatmul.bf16.gmra.mxu0 %v747
      %v1205 = vpop.f32.mrf.mxu0
      %v1206 = vadd.f32 %v1177, %v1205
      %v1207 = vpop.f32.mrf.mxu0
      %v1208 = vadd.f32 %v1179, %v1207
      %1209 = vmatmul.bf16.gmra.mxu0 %v748
      %v1210 = vpop.f32.mrf.mxu0
      %v1211 = vadd.f32 %v1182, %v1210
      %v1212 = vpop.f32.mrf.mxu0
      %v1213 = vadd.f32 %v1184, %v1212
      %1214 = vdwg.mxu0
      %v1263 = vunpack.c.l.b16 %v503
      %v1264 = vunpack.c.l.b16 %v504
      %v1265 = vunpack.c.l.b16 %v505
      %v1266 = vunpack.c.l.b16 %v506
      %v1267 = vunpack.c.l.b16 %v507
      %v1268 = vunpack.c.l.b16 %v508
      %v1269 = vunpack.c.l.b16 %v509
      %v1270 = vunpack.c.l.b16 %v510
      %v1271 = vunpack.c.l.b16 %v511
      %v1272 = vunpack.c.l.b16 %v512
      %v1273 = vunpack.c.l.b16 %v513
      %v1274 = vunpack.c.l.b16 %v514
      %v1275 = vunpack.c.l.b16 %v515
      %v1276 = vunpack.c.l.b16 %v516
      %v1277 = vunpack.c.l.b16 %v517
      %v1278 = vunpack.c.l.b16 %v518
      %v1279 = vunpack.c.l.b16 %v519
      %v1280 = vunpack.c.l.b16 %v520
      %v1281 = vunpack.c.l.b16 %v521
      %v1282 = vunpack.c.l.b16 %v522
      %v1283 = vunpack.c.l.b16 %v523
      %v1284 = vunpack.c.l.b16 %v524
      %v1285 = vunpack.c.l.b16 %v525
      %v1286 = vunpack.c.l.b16 %v526
      %v1287 = vunpack.c.l.b16 %v527
      %v1288 = vunpack.c.l.b16 %v528
      %v1289 = vunpack.c.l.b16 %v529
      %v1290 = vunpack.c.l.b16 %v530
      %v1291 = vunpack.c.l.b16 %v531
      %v1292 = vunpack.c.l.b16 %v532
      %v1293 = vunpack.c.l.b16 %v533
      %v1294 = vunpack.c.l.b16 %v534
      %v1295 = vunpack.c.l.b16 %v535
      %v1296 = vunpack.c.l.b16 %v536
      %v1297 = vunpack.c.l.b16 %v537
      %v1298 = vunpack.c.l.b16 %v538
      %v1299 = vunpack.c.l.b16 %v539
      %v1300 = vunpack.c.l.b16 %v540
      %v1301 = vunpack.c.l.b16 %v541
      %v1302 = vunpack.c.l.b16 %v542
      %v1303 = vunpack.c.l.b16 %v543
      %v1304 = vunpack.c.l.b16 %v544
      %v1305 = vunpack.c.l.b16 %v545
      %v1306 = vunpack.c.l.b16 %v546
      %v1307 = vunpack.c.l.b16 %v547
      %v1308 = vunpack.c.l.b16 %v548
      %v1309 = vunpack.c.l.b16 %v549
      %v1310 = vunpack.c.l.b16 %v550
      %v1311 = vpack.c.b16 %v1264, %v1263
      %v1312 = vpack.c.b16 %v1266, %v1265
      %v1313 = vpack.c.b16 %v1268, %v1267
      %v1314 = vpack.c.b16 %v1270, %v1269
      %v1315 = vpack.c.b16 %v1272, %v1271
      %v1316 = vpack.c.b16 %v1274, %v1273
      %v1317 = vpack.c.b16 %v1276, %v1275
      %v1318 = vpack.c.b16 %v1278, %v1277
      %v1319 = vpack.c.b16 %v1280, %v1279
      %v1320 = vpack.c.b16 %v1282, %v1281
      %v1321 = vpack.c.b16 %v1284, %v1283
      %v1322 = vpack.c.b16 %v1286, %v1285
      %v1323 = vpack.c.b16 %v1288, %v1287
      %v1324 = vpack.c.b16 %v1290, %v1289
      %v1325 = vpack.c.b16 %v1292, %v1291
      %v1326 = vpack.c.b16 %v1294, %v1293
      %v1327 = vpack.c.b16 %v1296, %v1295
      %v1328 = vpack.c.b16 %v1298, %v1297
      %v1329 = vpack.c.b16 %v1300, %v1299
      %v1330 = vpack.c.b16 %v1302, %v1301
      %v1331 = vpack.c.b16 %v1304, %v1303
      %v1332 = vpack.c.b16 %v1306, %v1305
      %v1333 = vpack.c.b16 %v1308, %v1307
      %v1334 = vpack.c.b16 %v1310, %v1309
      %1359 = vmatpush.bf16.msra.mxu0 %v1318
      %1360 = vmatpush.bf16.msra.mxu0 %v1317
      %1361 = vmatpush.bf16.msra.mxu0 %v1316
      %1362 = vmatpush.bf16.msra.mxu0 %v1315
      %1363 = vmatpush.bf16.msra.mxu0 %v1314
      %1364 = vmatpush.bf16.msra.mxu0 %v1313
      %1365 = vmatpush.bf16.msra.mxu0 %v1312
      %1366 = vmatpush.bf16.msra.mxu0 %v1311
      %1367 = vmatmul.bf16.gmra.mxu0 %v455
      %v1368 = vpop.f32.mrf.mxu0
      %v1369 = vadd.f32 %v1109, %v1368
      %v1370 = vpop.f32.mrf.mxu0
      %v1371 = vadd.f32 %v1111, %v1370
      %1372 = vmatmul.bf16.gmra.mxu0 %v456
      %v1373 = vpop.f32.mrf.mxu0
      %v1374 = vadd.f32 %v1114, %v1373
      %v1375 = vpop.f32.mrf.mxu0
      %v1376 = vadd.f32 %v1116, %v1375
      %1377 = vmatmul.bf16.gmra.mxu0 %v457
      %v1378 = vpop.f32.mrf.mxu0
      %v1379 = vadd.f32 %v1119, %v1378
      %v1380 = vpop.f32.mrf.mxu0
      %v1381 = vadd.f32 %v1121, %v1380
      %1382 = vmatmul.bf16.gmra.mxu0 %v458
      %v1383 = vpop.f32.mrf.mxu0
      %v1384 = vadd.f32 %v1124, %v1383
      %v1385 = vpop.f32.mrf.mxu0
      %v1386 = vadd.f32 %v1126, %v1385
      %1387 = vdwg.mxu0
      %1388 = vmatpush.bf16.msra.mxu0 %v1326
      %1389 = vmatpush.bf16.msra.mxu0 %v1325
      %1390 = vmatpush.bf16.msra.mxu0 %v1324
      %1391 = vmatpush.bf16.msra.mxu0 %v1323
      %1392 = vmatpush.bf16.msra.mxu0 %v1322
      %1393 = vmatpush.bf16.msra.mxu0 %v1321
      %1394 = vmatpush.bf16.msra.mxu0 %v1320
      %1395 = vmatpush.bf16.msra.mxu0 %v1319
      %1396 = vmatmul.bf16.gmra.mxu0 %v479
      %v1397 = vpop.f32.mrf.mxu0
      %v1398 = vadd.f32 %v1369, %v1397
      %v1399 = vpop.f32.mrf.mxu0
      %v1400 = vadd.f32 %v1371, %v1399
      %1401 = vmatmul.bf16.gmra.mxu0 %v480
      %v1402 = vpop.f32.mrf.mxu0
      %v1403 = vadd.f32 %v1374, %v1402
      %v1404 = vpop.f32.mrf.mxu0
      %v1405 = vadd.f32 %v1376, %v1404
      %1406 = vmatmul.bf16.gmra.mxu0 %v481
      %v1407 = vpop.f32.mrf.mxu0
      %v1408 = vadd.f32 %v1379, %v1407
      %v1409 = vpop.f32.mrf.mxu0
      %v1410 = vadd.f32 %v1381, %v1409
      %1411 = vmatmul.bf16.gmra.mxu0 %v482
      %v1412 = vpop.f32.mrf.mxu0
      %v1413 = vadd.f32 %v1384, %v1412
      %v1414 = vpop.f32.mrf.mxu0
      %v1415 = vadd.f32 %v1386, %v1414
      %1416 = vdwg.mxu0
      %1417 = vmatpush.bf16.msra.mxu0 %v1334
      %1418 = vmatpush.bf16.msra.mxu0 %v1333
      %1419 = vmatpush.bf16.msra.mxu0 %v1332
      %1420 = vmatpush.bf16.msra.mxu0 %v1331
      %1421 = vmatpush.bf16.msra.mxu0 %v1330
      %1422 = vmatpush.bf16.msra.mxu0 %v1329
      %1423 = vmatpush.bf16.msra.mxu0 %v1328
      %1424 = vmatpush.bf16.msra.mxu0 %v1327
      %1425 = vmatmul.bf16.gmra.mxu0 %v495
      %v1426 = vpop.f32.mrf.mxu0
      %v1427 = vadd.f32 %v1398, %v1426
      %v1428 = vpop.f32.mrf.mxu0
      %v1429 = vadd.f32 %v1400, %v1428
      %1430 = vmatmul.bf16.gmra.mxu0 %v496
      %v1431 = vpop.f32.mrf.mxu0
      %v1432 = vadd.f32 %v1403, %v1431
      %v1433 = vpop.f32.mrf.mxu0
      %v1434 = vadd.f32 %v1405, %v1433
      %1435 = vmatmul.bf16.gmra.mxu0 %v497
      %v1436 = vpop.f32.mrf.mxu0
      %v1437 = vadd.f32 %v1408, %v1436
      %v1438 = vpop.f32.mrf.mxu0
      %v1439 = vadd.f32 %v1410, %v1438
      %1440 = vmatmul.bf16.gmra.mxu0 %v498
      %v1441 = vpop.f32.mrf.mxu0
      %v1442 = vadd.f32 %v1413, %v1441
      %v1443 = vpop.f32.mrf.mxu0
      %v1444 = vadd.f32 %v1415, %v1443
      %1445 = vdwg.mxu0
      %v1446 = vld [vmem:[%s4] sm:$0x1]
      %v1448 = vperm.slane %v1446, 0
      %v1450 = vadd.f32 %v1196, %v1448
      %v1451 = vadd.f32 %v1198, %v1448
      %v1452 = vadd.f32 %v1201, %v1448
      %v1453 = vadd.f32 %v1203, %v1448
      %v1454 = vadd.f32 %v1206, %v1448
      %v1455 = vadd.f32 %v1208, %v1448
      %v1456 = vadd.f32 %v1211, %v1448
      %v1457 = vadd.f32 %v1213, %v1448
      %s1458 = scalar_lea.vmem %s278, 8
      %v1459 = vld [vmem:[%s1458] sm:$0xf]
      %v1460 = vld [vmem:[%s1458 + $0x8] sm:$0xf]
      %v1461 = vld [vmem:[%s1458 + $0x10] sm:$0xf]
      %v1462 = vld [vmem:[%s1458 + $0x18] sm:$0xf]
      %v1463 = vld [vmem:[%s1458 + $0x20] sm:$0xf]
      %v1464 = vld [vmem:[%s1458 + $0x28] sm:$0xf]
      %v1465 = vld [vmem:[%s1458 + $0x30] sm:$0xf]
      %v1466 = vld [vmem:[%s1458 + $0x38] sm:$0xf]
      %s1467 = scalar_lea.vmem %s278, 80
      %v1468 = vld [vmem:[%s1467] sm:$0xf]
      %v1469 = vld [vmem:[%s1467 + $0x8] sm:$0xf]
      %v1470 = vld [vmem:[%s1467 + $0x10] sm:$0xf]
      %v1471 = vld [vmem:[%s1467 + $0x18] sm:$0xf]
      %v1472 = vld [vmem:[%s1467 + $0x20] sm:$0xf]
      %v1473 = vld [vmem:[%s1467 + $0x28] sm:$0xf]
      %v1474 = vld [vmem:[%s1467 + $0x30] sm:$0xf]
      %v1475 = vld [vmem:[%s1467 + $0x38] sm:$0xf]
      %v1476 = vld [vmem:[%s1458 + $0x4] sm:$0x1]
      %v1477 = vld [vmem:[%s1458 + $0xc] sm:$0x1]
      %v1478 = vld [vmem:[%s1458 + $0x14] sm:$0x1]
      %v1479 = vld [vmem:[%s1458 + $0x1c] sm:$0x1]
      %v1480 = vld [vmem:[%s1458 + $0x24] sm:$0x1]
      %v1481 = vld [vmem:[%s1458 + $0x2c] sm:$0x1]
      %v1482 = vld [vmem:[%s1458 + $0x34] sm:$0x1]
      %v1483 = vld [vmem:[%s1458 + $0x3c] sm:$0x1]
      %v1485 = vshrl.u32 %v1459, 16
      %v1487 = vrot.slane %v1485, 4
      %v1488 = vshll.u32 %v1459, 16
      %v1490 = vrot.slane %v1488, 5
      %v1491 = vor.u32 %v1487, %v1490
      %v1492 = vrot.slane %v1491, 4
      %v1494 = vshll.u32 %v1476, 16
      %v1496 = vrot.slane %v1494, 5
      %v1497 = vsel %vm326, %v1492, %v1496
      %v1499 = vshrl.u32 %v1460, 16
      %v1501 = vrot.slane %v1499, 4
      %v1502 = vshll.u32 %v1460, 16
      %v1504 = vrot.slane %v1502, 5
      %v1505 = vor.u32 %v1501, %v1504
      %v1506 = vrot.slane %v1505, 4
      %v1508 = vshll.u32 %v1477, 16
      %v1510 = vrot.slane %v1508, 5
      %v1511 = vsel %vm326, %v1506, %v1510
      %v1513 = vshrl.u32 %v1461, 16
      %v1515 = vrot.slane %v1513, 4
      %v1516 = vshll.u32 %v1461, 16
      %v1518 = vrot.slane %v1516, 5
      %v1519 = vor.u32 %v1515, %v1518
      %v1520 = vrot.slane %v1519, 4
      %v1522 = vshll.u32 %v1478, 16
      %v1524 = vrot.slane %v1522, 5
      %v1525 = vsel %vm326, %v1520, %v1524
      %v1527 = vshrl.u32 %v1462, 16
      %v1529 = vrot.slane %v1527, 4
      %v1530 = vshll.u32 %v1462, 16
      %v1532 = vrot.slane %v1530, 5
      %v1533 = vor.u32 %v1529, %v1532
      %v1534 = vrot.slane %v1533, 4
      %v1536 = vshll.u32 %v1479, 16
      %v1538 = vrot.slane %v1536, 5
      %v1539 = vsel %vm326, %v1534, %v1538
      %v1541 = vshrl.u32 %v1463, 16
      %v1543 = vrot.slane %v1541, 4
      %v1544 = vshll.u32 %v1463, 16
      %v1546 = vrot.slane %v1544, 5
      %v1547 = vor.u32 %v1543, %v1546
      %v1548 = vrot.slane %v1547, 4
      %v1550 = vshll.u32 %v1480, 16
      %v1552 = vrot.slane %v1550, 5
      %v1553 = vsel %vm326, %v1548, %v1552
      %v1555 = vshrl.u32 %v1464, 16
      %v1557 = vrot.slane %v1555, 4
      %v1558 = vshll.u32 %v1464, 16
      %v1560 = vrot.slane %v1558, 5
      %v1561 = vor.u32 %v1557, %v1560
      %v1562 = vrot.slane %v1561, 4
      %v1564 = vshll.u32 %v1481, 16
      %v1566 = vrot.slane %v1564, 5
      %v1567 = vsel %vm326, %v1562, %v1566
      %v1569 = vshrl.u32 %v1465, 16
      %v1571 = vrot.slane %v1569, 4
      %v1572 = vshll.u32 %v1465, 16
      %v1574 = vrot.slane %v1572, 5
      %v1575 = vor.u32 %v1571, %v1574
      %v1576 = vrot.slane %v1575, 4
      %v1578 = vshll.u32 %v1482, 16
      %v1580 = vrot.slane %v1578, 5
      %v1581 = vsel %vm326, %v1576, %v1580
      %v1583 = vshrl.u32 %v1466, 16
      %v1585 = vrot.slane %v1583, 4
      %v1586 = vshll.u32 %v1466, 16
      %v1588 = vrot.slane %v1586, 5
      %v1589 = vor.u32 %v1585, %v1588
      %v1590 = vrot.slane %v1589, 4
      %v1592 = vshll.u32 %v1483, 16
      %v1594 = vrot.slane %v1592, 5
      %v1595 = vsel %vm326, %v1590, %v1594
      %v1604 = vunpack.c.l.b16 %v1459
      %v1605 = vunpack.c.l.b16 %v1460
      %v1606 = vunpack.c.l.b16 %v1461
      %v1607 = vunpack.c.l.b16 %v1462
      %v1608 = vunpack.c.l.b16 %v1463
      %v1609 = vunpack.c.l.b16 %v1464
      %v1610 = vunpack.c.l.b16 %v1465
      %v1611 = vunpack.c.l.b16 %v1466
      %v1612 = vpack.c.b16 %v1605, %v1604
      %v1613 = vpack.c.b16 %v1607, %v1606
      %v1614 = vpack.c.b16 %v1609, %v1608
      %v1615 = vpack.c.b16 %v1611, %v1610
      %v1628 = vunpack.c.l.b16 %v1468
      %v1629 = vunpack.c.l.b16 %v1469
      %v1630 = vunpack.c.l.b16 %v1470
      %v1631 = vunpack.c.l.b16 %v1471
      %v1632 = vunpack.c.l.b16 %v1472
      %v1633 = vunpack.c.l.b16 %v1473
      %v1634 = vunpack.c.l.b16 %v1474
      %v1635 = vunpack.c.l.b16 %v1475
      %v1636 = vpack.c.b16 %v1629, %v1628
      %v1637 = vpack.c.b16 %v1631, %v1630
      %v1638 = vpack.c.b16 %v1633, %v1632
      %v1639 = vpack.c.b16 %v1635, %v1634
      %v1644 = vunpack.c.l.b16 %v1497
      %v1645 = vunpack.c.l.b16 %v1511
      %v1646 = vunpack.c.l.b16 %v1525
      %v1647 = vunpack.c.l.b16 %v1539
      %v1648 = vunpack.c.l.b16 %v1553
      %v1649 = vunpack.c.l.b16 %v1567
      %v1650 = vunpack.c.l.b16 %v1581
      %v1651 = vunpack.c.l.b16 %v1595
      %v1652 = vpack.c.b16 %v1645, %v1644
      %v1653 = vpack.c.b16 %v1647, %v1646
      %v1654 = vpack.c.b16 %v1649, %v1648
      %v1655 = vpack.c.b16 %v1651, %v1650
      %s1660 = scalar_lea.vmem %s1, 192
      %v1661 = vld [vmem:[%s1660] sm:$0xf]
      %v1662 = vld [vmem:[%s1660 + $0x4] sm:$0xf]
      %v1663 = vld [vmem:[%s1660 + $0x8] sm:$0xf]
      %v1664 = vld [vmem:[%s1660 + $0xc] sm:$0xf]
      %v1665 = vld [vmem:[%s1660 + $0x10] sm:$0xf]
      %v1666 = vld [vmem:[%s1660 + $0x14] sm:$0xf]
      %v1667 = vld [vmem:[%s1660 + $0x18] sm:$0xf]
      %v1668 = vld [vmem:[%s1660 + $0x1c] sm:$0xf]
      %v1669 = vld [vmem:[%s1660 + $0x20] sm:$0xf]
      %v1670 = vld [vmem:[%s1660 + $0x24] sm:$0xf]
      %v1671 = vld [vmem:[%s1660 + $0x28] sm:$0xf]
      %v1672 = vld [vmem:[%s1660 + $0x2c] sm:$0xf]
      %v1673 = vld [vmem:[%s1660 + $0x30] sm:$0xf]
      %v1674 = vld [vmem:[%s1660 + $0x34] sm:$0xf]
      %v1675 = vld [vmem:[%s1660 + $0x38] sm:$0xf]
      %v1676 = vld [vmem:[%s1660 + $0x3c] sm:$0xf]
      %v1677 = vld [vmem:[%s1660 + $0x40] sm:$0xf]
      %v1678 = vld [vmem:[%s1660 + $0x44] sm:$0xf]
      %v1679 = vld [vmem:[%s1660 + $0x48] sm:$0xf]
      %v1680 = vld [vmem:[%s1660 + $0x4c] sm:$0xf]
      %v1681 = vld [vmem:[%s1660 + $0x50] sm:$0xf]
      %v1682 = vld [vmem:[%s1660 + $0x54] sm:$0xf]
      %v1683 = vld [vmem:[%s1660 + $0x58] sm:$0xf]
      %v1684 = vld [vmem:[%s1660 + $0x5c] sm:$0xf]
      %v1685 = vld [vmem:[%s1660 + $0x60] sm:$0xf]
      %v1686 = vld [vmem:[%s1660 + $0x64] sm:$0xf]
      %v1687 = vld [vmem:[%s1660 + $0x68] sm:$0xf]
      %v1688 = vld [vmem:[%s1660 + $0x6c] sm:$0xf]
      %v1689 = vld [vmem:[%s1660 + $0x70] sm:$0xf]
      %v1690 = vld [vmem:[%s1660 + $0x74] sm:$0xf]
      %v1691 = vld [vmem:[%s1660 + $0x78] sm:$0xf]
      %v1692 = vld [vmem:[%s1660 + $0x7c] sm:$0xf]
      %v1693 = vld [vmem:[%s1660 + $0x80] sm:$0xf]
      %v1694 = vld [vmem:[%s1660 + $0x84] sm:$0xf]
      %v1695 = vld [vmem:[%s1660 + $0x88] sm:$0xf]
      %v1696 = vld [vmem:[%s1660 + $0x8c] sm:$0xf]
      %v1697 = vld [vmem:[%s1660 + $0x90] sm:$0xf]
      %v1698 = vld [vmem:[%s1660 + $0x94] sm:$0xf]
      %v1699 = vld [vmem:[%s1660 + $0x98] sm:$0xf]
      %v1700 = vld [vmem:[%s1660 + $0x9c] sm:$0xf]
      %v1701 = vld [vmem:[%s1660 + $0xa0] sm:$0xf]
      %v1702 = vld [vmem:[%s1660 + $0xa4] sm:$0xf]
      %v1703 = vld [vmem:[%s1660 + $0xa8] sm:$0xf]
      %v1704 = vld [vmem:[%s1660 + $0xac] sm:$0xf]
      %v1705 = vld [vmem:[%s1660 + $0xb0] sm:$0xf]
      %v1706 = vld [vmem:[%s1660 + $0xb4] sm:$0xf]
      %v1707 = vld [vmem:[%s1660 + $0xb8] sm:$0xf]
      %v1708 = vld [vmem:[%s1660 + $0xbc] sm:$0xf]
      %v1757 = vunpack.c.l.b16 %v1661
      %v1758 = vunpack.c.l.b16 %v1662
      %v1759 = vunpack.c.l.b16 %v1663
      %v1760 = vunpack.c.l.b16 %v1664
      %v1761 = vunpack.c.l.b16 %v1665
      %v1762 = vunpack.c.l.b16 %v1666
      %v1763 = vunpack.c.l.b16 %v1667
      %v1764 = vunpack.c.l.b16 %v1668
      %v1765 = vunpack.c.l.b16 %v1669
      %v1766 = vunpack.c.l.b16 %v1670
      %v1767 = vunpack.c.l.b16 %v1671
      %v1768 = vunpack.c.l.b16 %v1672
      %v1769 = vunpack.c.l.b16 %v1673
      %v1770 = vunpack.c.l.b16 %v1674
      %v1771 = vunpack.c.l.b16 %v1675
      %v1772 = vunpack.c.l.b16 %v1676
      %v1773 = vunpack.c.l.b16 %v1677
      %v1774 = vunpack.c.l.b16 %v1678
      %v1775 = vunpack.c.l.b16 %v1679
      %v1776 = vunpack.c.l.b16 %v1680
      %v1777 = vunpack.c.l.b16 %v1681
      %v1778 = vunpack.c.l.b16 %v1682
      %v1779 = vunpack.c.l.b16 %v1683
      %v1780 = vunpack.c.l.b16 %v1684
      %v1781 = vunpack.c.l.b16 %v1685
      %v1782 = vunpack.c.l.b16 %v1686
      %v1783 = vunpack.c.l.b16 %v1687
      %v1784 = vunpack.c.l.b16 %v1688
      %v1785 = vunpack.c.l.b16 %v1689
      %v1786 = vunpack.c.l.b16 %v1690
      %v1787 = vunpack.c.l.b16 %v1691
      %v1788 = vunpack.c.l.b16 %v1692
      %v1789 = vunpack.c.l.b16 %v1693
      %v1790 = vunpack.c.l.b16 %v1694
      %v1791 = vunpack.c.l.b16 %v1695
      %v1792 = vunpack.c.l.b16 %v1696
      %v1793 = vunpack.c.l.b16 %v1697
      %v1794 = vunpack.c.l.b16 %v1698
      %v1795 = vunpack.c.l.b16 %v1699
      %v1796 = vunpack.c.l.b16 %v1700
      %v1797 = vunpack.c.l.b16 %v1701
      %v1798 = vunpack.c.l.b16 %v1702
      %v1799 = vunpack.c.l.b16 %v1703
      %v1800 = vunpack.c.l.b16 %v1704
      %v1801 = vunpack.c.l.b16 %v1705
      %v1802 = vunpack.c.l.b16 %v1706
      %v1803 = vunpack.c.l.b16 %v1707
      %v1804 = vunpack.c.l.b16 %v1708
      %v1805 = vpack.c.b16 %v1758, %v1757
      %v1806 = vpack.c.b16 %v1760, %v1759
      %v1807 = vpack.c.b16 %v1762, %v1761
      %v1808 = vpack.c.b16 %v1764, %v1763
      %v1809 = vpack.c.b16 %v1766, %v1765
      %v1810 = vpack.c.b16 %v1768, %v1767
      %v1811 = vpack.c.b16 %v1770, %v1769
      %v1812 = vpack.c.b16 %v1772, %v1771
      %v1813 = vpack.c.b16 %v1774, %v1773
      %v1814 = vpack.c.b16 %v1776, %v1775
      %v1815 = vpack.c.b16 %v1778, %v1777
      %v1816 = vpack.c.b16 %v1780, %v1779
      %v1817 = vpack.c.b16 %v1782, %v1781
      %v1818 = vpack.c.b16 %v1784, %v1783
      %v1819 = vpack.c.b16 %v1786, %v1785
      %v1820 = vpack.c.b16 %v1788, %v1787
      %v1821 = vpack.c.b16 %v1790, %v1789
      %v1822 = vpack.c.b16 %v1792, %v1791
      %v1823 = vpack.c.b16 %v1794, %v1793
      %v1824 = vpack.c.b16 %v1796, %v1795
      %v1825 = vpack.c.b16 %v1798, %v1797
      %v1826 = vpack.c.b16 %v1800, %v1799
      %v1827 = vpack.c.b16 %v1802, %v1801
      %v1828 = vpack.c.b16 %v1804, %v1803
      %1853 = vmatpush.bf16.msra.mxu0 %v1812
      %1854 = vmatpush.bf16.msra.mxu0 %v1811
      %1855 = vmatpush.bf16.msra.mxu0 %v1810
      %1856 = vmatpush.bf16.msra.mxu0 %v1809
      %1857 = vmatpush.bf16.msra.mxu0 %v1808
      %1858 = vmatpush.bf16.msra.mxu0 %v1807
      %1859 = vmatpush.bf16.msra.mxu0 %v1806
      %1860 = vmatpush.bf16.msra.mxu0 %v1805
      %1861 = vmatmul.bf16.gmra.mxu0 %v1612
      %v1862 = vpop.f32.mrf.mxu0
      %v1863 = vadd.f32 0.0, %v1862
      %v1864 = vpop.f32.mrf.mxu0
      %v1865 = vadd.f32 0.0, %v1864
      %1866 = vmatmul.bf16.gmra.mxu0 %v1613
      %v1867 = vpop.f32.mrf.mxu0
      %v1868 = vadd.f32 0.0, %v1867
      %v1869 = vpop.f32.mrf.mxu0
      %v1870 = vadd.f32 0.0, %v1869
      %1871 = vmatmul.bf16.gmra.mxu0 %v1614
      %v1872 = vpop.f32.mrf.mxu0
      %v1873 = vadd.f32 0.0, %v1872
      %v1874 = vpop.f32.mrf.mxu0
      %v1875 = vadd.f32 0.0, %v1874
      %1876 = vmatmul.bf16.gmra.mxu0 %v1615
      %v1877 = vpop.f32.mrf.mxu0
      %v1878 = vadd.f32 0.0, %v1877
      %v1879 = vpop.f32.mrf.mxu0
      %v1880 = vadd.f32 0.0, %v1879
      %1881 = vdwg.mxu0
      %1882 = vmatpush.bf16.msra.mxu0 %v1820
      %1883 = vmatpush.bf16.msra.mxu0 %v1819
      %1884 = vmatpush.bf16.msra.mxu0 %v1818
      %1885 = vmatpush.bf16.msra.mxu0 %v1817
      %1886 = vmatpush.bf16.msra.mxu0 %v1816
      %1887 = vmatpush.bf16.msra.mxu0 %v1815
      %1888 = vmatpush.bf16.msra.mxu0 %v1814
      %1889 = vmatpush.bf16.msra.mxu0 %v1813
      %1890 = vmatmul.bf16.gmra.mxu0 %v1636
      %v1891 = vpop.f32.mrf.mxu0
      %v1892 = vadd.f32 %v1863, %v1891
      %v1893 = vpop.f32.mrf.mxu0
      %v1894 = vadd.f32 %v1865, %v1893
      %1895 = vmatmul.bf16.gmra.mxu0 %v1637
      %v1896 = vpop.f32.mrf.mxu0
      %v1897 = vadd.f32 %v1868, %v1896
      %v1898 = vpop.f32.mrf.mxu0
      %v1899 = vadd.f32 %v1870, %v1898
      %1900 = vmatmul.bf16.gmra.mxu0 %v1638
      %v1901 = vpop.f32.mrf.mxu0
      %v1902 = vadd.f32 %v1873, %v1901
      %v1903 = vpop.f32.mrf.mxu0
      %v1904 = vadd.f32 %v1875, %v1903
      %1905 = vmatmul.bf16.gmra.mxu0 %v1639
      %v1906 = vpop.f32.mrf.mxu0
      %v1907 = vadd.f32 %v1878, %v1906
      %v1908 = vpop.f32.mrf.mxu0
      %v1909 = vadd.f32 %v1880, %v1908
      %1910 = vdwg.mxu0
      %1911 = vmatpush.bf16.msra.mxu0 %v1828
      %1912 = vmatpush.bf16.msra.mxu0 %v1827
      %1913 = vmatpush.bf16.msra.mxu0 %v1826
      %1914 = vmatpush.bf16.msra.mxu0 %v1825
      %1915 = vmatpush.bf16.msra.mxu0 %v1824
      %1916 = vmatpush.bf16.msra.mxu0 %v1823
      %1917 = vmatpush.bf16.msra.mxu0 %v1822
      %1918 = vmatpush.bf16.msra.mxu0 %v1821
      %1919 = vmatmul.bf16.gmra.mxu0 %v1652
      %v1920 = vpop.f32.mrf.mxu0
      %v1921 = vadd.f32 %v1892, %v1920
      %v1922 = vpop.f32.mrf.mxu0
      %v1923 = vadd.f32 %v1894, %v1922
      %1924 = vmatmul.bf16.gmra.mxu0 %v1653
      %v1925 = vpop.f32.mrf.mxu0
      %v1926 = vadd.f32 %v1897, %v1925
      %v1927 = vpop.f32.mrf.mxu0
      %v1928 = vadd.f32 %v1899, %v1927
      %1929 = vmatmul.bf16.gmra.mxu0 %v1654
      %v1930 = vpop.f32.mrf.mxu0
      %v1931 = vadd.f32 %v1902, %v1930
      %v1932 = vpop.f32.mrf.mxu0
      %v1933 = vadd.f32 %v1904, %v1932
      %1934 = vmatmul.bf16.gmra.mxu0 %v1655
      %v1935 = vpop.f32.mrf.mxu0
      %v1936 = vadd.f32 %v1907, %v1935
      %v1937 = vpop.f32.mrf.mxu0
      %v1938 = vadd.f32 %v1909, %v1937
      %1939 = vdwg.mxu0
      %v1940 = vadd.f32 %v1427, %v1921
      %v1941 = vadd.f32 %v1429, %v1923
      %v1942 = vadd.f32 %v1432, %v1926
      %v1943 = vadd.f32 %v1434, %v1928
      %v1944 = vadd.f32 %v1437, %v1931
      %v1945 = vadd.f32 %v1439, %v1933
      %v1946 = vadd.f32 %v1442, %v1936
      %v1947 = vadd.f32 %v1444, %v1938
      %v1948 = vld [vmem:[%s3] sm:$0x1]
      %v1950 = vperm.slane %v1948, 0
      %v1952 = vadd.f32 %v1940, %v1950
      %v1953 = vadd.f32 %v1941, %v1950
      %v1954 = vadd.f32 %v1942, %v1950
      %v1955 = vadd.f32 %v1943, %v1950
      %v1956 = vadd.f32 %v1944, %v1950
      %v1957 = vadd.f32 %v1945, %v1950
      %v1958 = vadd.f32 %v1946, %v1950
      %v1959 = vadd.f32 %v1947, %v1950
      %v1960 = vmax.f32 %v1952, 0.0
      %v1961 = vmax.f32 %v1953, 0.0
      %v1962 = vmax.f32 %v1954, 0.0
      %v1963 = vmax.f32 %v1955, 0.0
      %v1964 = vmax.f32 %v1956, 0.0
      %v1965 = vmax.f32 %v1957, 0.0
      %v1966 = vmax.f32 %v1958, 0.0
      %v1967 = vmax.f32 %v1959, 0.0
      %v1968 = vpack.c.bf16 %v1960, %v1960
      %v1969 = vpack.c.bf16 %v1961, %v1961
      %v1970 = vpack.c.bf16 %v1962, %v1962
      %v1971 = vpack.c.bf16 %v1963, %v1963
      %v1972 = vpack.c.bf16 %v1964, %v1964
      %v1973 = vpack.c.bf16 %v1965, %v1965
      %v1974 = vpack.c.bf16 %v1966, %v1966
      %v1975 = vpack.c.bf16 %v1967, %v1967
      %1976 = vst [vmem:[%s287] sm:$0xf] %v1968
      %1977 = vst [vmem:[%s287 + $0x4] sm:$0xf] %v1969
      %1978 = vst [vmem:[%s287 + $0x8] sm:$0xf] %v1970
      %1979 = vst [vmem:[%s287 + $0xc] sm:$0xf] %v1971
      %1980 = vst [vmem:[%s287 + $0x10] sm:$0xf] %v1972
      %1981 = vst [vmem:[%s287 + $0x14] sm:$0xf] %v1973
      %1982 = vst [vmem:[%s287 + $0x18] sm:$0xf] %v1974
      %1983 = vst [vmem:[%s287 + $0x1c] sm:$0xf] %v1975
      %v1984 = vpack.c.bf16 %v1450, %v1450
      %v1985 = vpack.c.bf16 %v1451, %v1451
      %v1986 = vpack.c.bf16 %v1452, %v1452
      %v1987 = vpack.c.bf16 %v1453, %v1453
      %v1988 = vpack.c.bf16 %v1454, %v1454
      %v1989 = vpack.c.bf16 %v1455, %v1455
      %v1990 = vpack.c.bf16 %v1456, %v1456
      %v1991 = vpack.c.bf16 %v1457, %v1457
      %1992 = vst [vmem:[%s297] sm:$0xf] %v1984
      %1993 = vst [vmem:[%s297 + $0x4] sm:$0xf] %v1985
      %1994 = vst [vmem:[%s297 + $0x8] sm:$0xf] %v1986
      %1995 = vst [vmem:[%s297 + $0xc] sm:$0xf] %v1987
      %1996 = vst [vmem:[%s297 + $0x10] sm:$0xf] %v1988
      %1997 = vst [vmem:[%s297 + $0x14] sm:$0xf] %v1989
      %1998 = vst [vmem:[%s297 + $0x18] sm:$0xf] %v1990
      %1999 = vst [vmem:[%s297 + $0x1c] sm:$0xf] %v1991
      %s2000 = smul.u32 8, %s23
      %p2001 = scmp.lt.s32.totalorder %s22, 1
      %s2002 = scalar_select %p2001, %s22, 1
      %p2003 = scmp.lt.s32.totalorder %s2000, 7
      %s2004 = scalar_select %p2003, %s2000, 7
      %s2005 = smul.addr %s2002, 8
      %s2006 = sadd.s32 %s2004, %s2005
      %s2007 = smul.addr %s2006, 4
      %s2008 = scalar_lea.vmem %s5, %s2007
      %s2009 = smul.u32 8, %s23
      %p2010 = scmp.lt.s32.totalorder %s22, 1
      %s2011 = scalar_select %p2010, %s22, 1
      %p2012 = scmp.lt.s32.totalorder %s2009, 7
      %s2013 = scalar_select %p2012, %s2009, 7
      %s2014 = smul.addr %s2011, 8
      %s2015 = sadd.s32 %s2013, %s2014
      %s2016 = smul.addr %s2015, 4
      %s2017 = scalar_lea.vmem %s6, %s2016
      // Predicated region
      $region41: #{basic_block_forward.2} parent=39 // pred_check
        %p2018 = pneg %p160
      $region42: #{basic_block_forward.2} parent=39 // pred_check_branch
        %2020 = sbr.rel (%p2018) target = $region44
      $region43: #{basic_block_forward.2} parent=39 // pred_region
        %s2021 = smul.u32 8, %s23
      $region44: #{basic_block_forward.2} parent=39 // pred_fallthru
        _
      // Predicated region
      $region45: #{basic_block_forward.2} parent=39 // pred_check
        %p2022 = pneg %p188
      $region46: #{basic_block_forward.2} parent=39 // pred_check_branch
        %2024 = sbr.rel (%p2022) target = $region48
      $region47: #{basic_block_forward.2} parent=39 // pred_region
        %s2025 = smul.u32 8, %s23
      $region48: #{basic_block_forward.2} parent=39 // pred_fallthru
        _
    $region40: #{basic_block_forward.2} parent=5 // pred_fallthru
      _
    %p2026 = scmp.le.s32.totalorder 2, %s13
    // Predicated region
    $region49: #{basic_block_forward.2} parent=5 // pred_check
      %p2027 = pneg %p2026
    $region50: #{basic_block_forward.2} parent=5 // pred_check_branch
      %2029 = sbr.rel (%p2027) target = $region52
    $region51: #{basic_block_forward.2} parent=5 // pred_region
      %s2030 = ssub.s32 %s13, 2
      // Predicated region
      $region53: #{basic_block_forward.2} parent=51 // pred_check
        %p2031 = pneg %p166
      $region54: #{basic_block_forward.2} parent=51 // pred_check_branch
        %2033 = sbr.rel (%p2031) target = $region56
      $region55: #{basic_block_forward.2} parent=51 // pred_region
        %s2034 = smul.u32 8, %s25
        %p2035 = scmp.lt.s32.totalorder %s24, 1
        %s2036 = scalar_select %p2035, %s24, 1
        %p2037 = scmp.lt.s32.totalorder %s2034, 7
        %s2038 = scalar_select %p2037, %s2034, 7
        %s2039 = smul.addr %s2036, 8
        %s2040 = sadd.s32 %s2038, %s2039
        %s2041 = smul.addr %s2040, 4
        %s2042 = scalar_lea.vmem %s5, %s2041
      $region56: #{basic_block_forward.2} parent=51 // pred_fallthru
        _
      // Predicated region
      $region57: #{basic_block_forward.2} parent=51 // pred_check
        %p2043 = pneg %p194
      $region58: #{basic_block_forward.2} parent=51 // pred_check_branch
        %2045 = sbr.rel (%p2043) target = $region60
      $region59: #{basic_block_forward.2} parent=51 // pred_region
        %s2046 = smul.u32 8, %s25
        %p2047 = scmp.lt.s32.totalorder %s24, 1
        %s2048 = scalar_select %p2047, %s24, 1
        %p2049 = scmp.lt.s32.totalorder %s2046, 7
        %s2050 = scalar_select %p2049, %s2046, 7
        %s2051 = smul.addr %s2048, 8
        %s2052 = sadd.s32 %s2050, %s2051
        %s2053 = smul.addr %s2052, 4
        %s2054 = scalar_lea.vmem %s6, %s2053
      $region60: #{basic_block_forward.2} parent=51 // pred_fallthru
        _
    $region52: #{basic_block_forward.2} parent=5 // pred_fallthru
      _
  $region6: #{basic_block_forward.2} parent=0 // loop_footer
    %s17 = sadd.s32 1, %s13
  $region7: #{basic_block_forward.2} parent=0 // loop_footer_branch
    %12 = sbr.rel target = $region3
  $region8: #{basic_block_forward.2} parent=0 // loop_exit
    _

</llo_original>
